<compile_context>
chip_gen: v7x
topology: tpu7x:2x2x1
jax: 0.10.0
libtpu: 0.0.40
codegen_flags: <defaults>
</compile_context>

<pallas_src>
import functools

import jax
import jax.numpy as jnp
from jax.experimental import pallas as pl
from jax.experimental.pallas import tpu as pltpu

LN_EPS = 1e-5  # PyTorch nn.LayerNorm default


def _round_up(x, m):
    return (x + m - 1) // m * m


def _default_ln_bf16():
    """bf16 VALUs exist on v6e/v7x; keep LayerNorm math f32 on v5e and older."""
    try:
        kind = jax.devices()[0].device_kind.lower()
    except Exception:
        return False
    return ("v6" in kind) or ("v7" in kind) or ("7x" in kind)


def _layernorm_relu(h, gamma, beta, ln_bf16):
    # Reductions (mean, E[h^2]) and rsqrt stay f32; rsqrt rides the EUP slot.
    mu = jnp.mean(h, axis=-1, keepdims=True)
    var = jnp.mean(h * h, axis=-1, keepdims=True) - mu * mu
    var = jnp.maximum(var, 0.0)          # one-pass var can go slightly negative -> clamp (no NaN)
    inv = jax.lax.rsqrt(var + LN_EPS)
    if ln_bf16:
        # v6e/v7x: bf16 VALUs run the normalize/scale/ReLU chain at ~2x the f32 rate; the
        # output is consumed as bf16 by the next MXU matmul anyway.
        bf = jnp.bfloat16
        hn = (h.astype(bf) - mu.astype(bf)) * inv.astype(bf)
        return jnp.maximum(hn * gamma.astype(bf) + beta.astype(bf), 0.0)
    # v5e and older (no bf16 VPU): keep the chain f32, cast only for the next matmul.
    hn = (h - mu) * inv
    return jnp.maximum(hn * gamma + beta, 0.0).astype(jnp.bfloat16)


def mlp_kernel(
    x_ref,
    w1_ref, b1_ref, g1_ref, bt1_ref,
    w2_ref, b2_ref, g2_ref, bt2_ref,
    w3_ref, b3_ref, g3_ref, bt3_ref,
    w4t_ref, b4_ref,
    o_ref,
    *,
    ln_bf16,
):
    # x is streamed as narrow f32; the bf16 cast rides on VPU slack (saves 4x of x HBM
    # bytes vs. a pre-padded bf16 copy).  W1..W3 are bf16; accumulation is f32.
    xb = x_ref[...].astype(jnp.bfloat16)
    h = jnp.dot(xb, w1_ref[...], preferred_element_type=jnp.float32) + b1_ref[...]
    h = _layernorm_relu(h, g1_ref[...], bt1_ref[...], ln_bf16)

    h = jnp.dot(h, w2_ref[...], preferred_element_type=jnp.float32) + b2_ref[...]
    h = _layernorm_relu(h, g2_ref[...], bt2_ref[...], ln_bf16)

    h = jnp.dot(h, w3_ref[...], preferred_element_type=jnp.float32) + b3_ref[...]
    h = _layernorm_relu(h, g3_ref[...], bt3_ref[...], ln_bf16)

    # Final Linear(half, 1): an N=1 MXU matmul would be lane-sparse; do VPU broadcast-mul +
    # XLU lane-reduce and store the per-row scalars lane-dense as a (1, bt) row.
    out = jnp.sum(h * w4t_ref[...], axis=-1)                       # (bt,) f32
    o_ref[...] = (out[None, :] + b4_ref[...]).astype(o_ref.dtype)  # (1, bt)


def prepare_params(params):
    """Per-model (not per-call) layout prep: bf16 casts of the MXU weights, (1, half)
    view of the final weight column, (1, 1) final bias.  Call once, reuse across calls."""
    (w1, b1, g1, bt1, w2, b2, g2, bt2, w3, b3, g3, bt3, w4, b4) = params
    half = w3.shape[1]
    bf = jnp.bfloat16
    return (
        w1.astype(bf), b1, g1, bt1,
        w2.astype(bf), b2, g2, bt2,
        w3.astype(bf), b3, g3, bt3,
        jnp.reshape(w4, (1, half)).astype(jnp.float32),
        jnp.reshape(b4, (1, 1)).astype(jnp.float32),
    )


def _select_batch_tile(B, batch_tile):
    assert batch_tile % 128 == 0, "batch_tile must be a multiple of 128"
    if B <= 256:
        # Single tile: multiple of 16 (bf16 sublane packing); >=128 keeps the (1, bt)
        # output row lane-dense whenever the batch permits.
        return _round_up(B, 16) if B < 128 else _round_up(B, 128)
    # Keep at least two tiles so the "parallel" batch axis can shard across both v7x
    # TensorCores even when batch_tile > B/2 (cost on 1-TC chips: one ~0.35 us step).
    return min(batch_tile, _round_up(B, 256) // 2)


def mlp_regressor_forward(x, prepped_params, *, batch_tile=2048, ln_bf16=None):
    """Fused MLP forward. x: (B, D_in) float32; prepped_params from prepare_params().
    Returns (B,) float32."""
    if ln_bf16 is None:
        ln_bf16 = _default_ln_bf16()

    B, D_in = x.shape
    (w1, b1, g1, bt1, w2, b2, g2, bt2, w3, b3, g3, bt3, w4t, b4r) = prepped_params
    assert w1.shape[0] == D_in

    bt = _select_batch_tile(B, batch_tile)
    B_pad = _round_up(B, bt)
    num_tiles = B_pad // bt

    # Only the batch dim is padded (zeros -> pad rows are harmless, discarded at the end).
    if B_pad != B:
        x = jnp.pad(x, ((0, B_pad - B), (0, 0)))

    def rep(arr):
        # Grid-invariant parameter block (constant index_map -> not re-DMA'd across steps).
        # TODO(synk): pipeline_mode=pl.Buffered(1) would drop the unused second buffer
        # (~100 KB total); left at the default for portability.
        return pl.BlockSpec(arr.shape, lambda i: (0, 0))

    kernel = functools.partial(mlp_kernel, ln_bf16=ln_bf16)

    # Working set is roughly 2.5 KB per batch-tile row (double-buffered x tile + a few live
    # f32 activations); scale the scoped-VMEM request with the tile but cap at 64 MiB so a
    # large sweep stays safe on v7x (64 MiB physical VMEM per TensorCore).
    vmem_limit = int(min(64 << 20, max(32 << 20, bt * 4 * 1024)))

    out = pl.pallas_call(
        kernel,
        out_shape=jax.ShapeDtypeStruct((1, B_pad), jnp.float32),
        grid_spec=pltpu.PrefetchScalarGridSpec(
            num_scalar_prefetch=0,
            grid=(num_tiles,),
            in_specs=[
                # x tile: last dim equals the full array dim (D_in), so no (8,128) issue.
                pl.BlockSpec((bt, D_in), lambda i: (i, 0)),
                rep(w1), rep(b1), rep(g1), rep(bt1),
                rep(w2), rep(b2), rep(g2), rep(bt2),
                rep(w3), rep(b3), rep(g3), rep(bt3),
                rep(w4t), rep(b4r),
            ],
            # Lane-dense output: batch along lanes, one (1, bt) row per grid step.
            out_specs=pl.BlockSpec((1, bt), lambda i: (0, i)),
        ),
        compiler_params=pltpu.CompilerParams(
            # TODO(synk): if an xprof trace on v7x shows one idle TensorCore, switch this
            # axis to pltpu.CORE_PARALLEL ("parallel" is sufficient on v5e/v6e).
            dimension_semantics=("parallel",),
            vmem_limit_bytes=vmem_limit,
        ),
    )(x, w1, b1, g1, bt1, w2, b2, g2, bt2, w3, b3, g3, bt3, w4t, b4r)

    return out[0, :B]


def init_params(key, input_dim, hidden_scale=8):
    """Deterministic init matching the PyTorch module:
    Linear weights kaiming_normal_(fan_in, relu) -> N(0, sqrt(2/fan_in)); biases zero.
    LayerNorm gamma=1, beta=0.  Weights stored (in_features, out_features)."""
    hidden_dim = input_dim * hidden_scale
    half = hidden_dim // 2

    def linear(k, fan_in, fan_out):
        std = (2.0 / fan_in) ** 0.5
        w = std * jax.random.normal(k, (fan_in, fan_out), dtype=jnp.float32)
        b = jnp.zeros((1, fan_out), dtype=jnp.float32)
        return w, b

    k1, k2, k3, k4 = jax.random.split(key, 4)
    w1, b1 = linear(k1, input_dim, hidden_dim)
    w2, b2 = linear(k2, hidden_dim, hidden_dim)
    w3, b3 = linear(k3, hidden_dim, half)
    w4, b4 = linear(k4, half, 1)

    g1 = jnp.ones((1, hidden_dim), jnp.float32); bt1 = jnp.zeros((1, hidden_dim), jnp.float32)
    g2 = jnp.ones((1, hidden_dim), jnp.float32); bt2 = jnp.zeros((1, hidden_dim), jnp.float32)
    g3 = jnp.ones((1, half), jnp.float32);       bt3 = jnp.zeros((1, half), jnp.float32)

    return (w1, b1, g1, bt1, w2, b2, g2, bt2, w3, b3, g3, bt3, w4, b4)


def reference_forward(x, params, *, ln_bf16=False):
    """Pure-JAX reference mirroring the kernel math (bf16 MXU operands, f32 accumulation,
    f32 stats, optional bf16 normalize chain) for a tight sanity check."""
    (w1, b1, g1, bt1, w2, b2, g2, bt2, w3, b3, g3, bt3, w4, b4) = params
    bf = jnp.bfloat16

    def ln_relu(h, g, b):
        mu = jnp.mean(h, axis=-1, keepdims=True)
        var = jnp.maximum(jnp.mean(h * h, axis=-1, keepdims=True) - mu * mu, 0.0)
        inv = jax.lax.rsqrt(var + LN_EPS)
        if ln_bf16:
            hn = (h.astype(bf) - mu.astype(bf)) * inv.astype(bf)
            return jnp.maximum(hn * g.astype(bf) + b.astype(bf), 0.0)
        return jnp.maximum((h - mu) * inv * g + b, 0.0).astype(bf)

    h = ln_relu(jnp.dot(x.astype(bf), w1.astype(bf),
                        preferred_element_type=jnp.float32) + b1, g1, bt1)
    h = ln_relu(jnp.dot(h, w2.astype(bf),
                        preferred_element_type=jnp.float32) + b2, g2, bt2)
    h = ln_relu(jnp.dot(h, w3.astype(bf),
                        preferred_element_type=jnp.float32) + b3, g3, bt3)
    return jnp.sum(h * jnp.reshape(w4, (1, -1)), axis=-1) + b4[0, 0]


def reference_forward_f32(x, params):
    """Full-f32 reference matching PyTorch semantics (for drift validation)."""
    (w1, b1, g1, bt1, w2, b2, g2, bt2, w3, b3, g3, bt3, w4, b4) = params

    def ln_relu(h, g, b):
        mu = jnp.mean(h, axis=-1, keepdims=True)
        var = jnp.mean((h - mu) ** 2, axis=-1, keepdims=True)
        return jnp.maximum((h - mu) * jax.lax.rsqrt(var + LN_EPS) * g + b, 0.0)

    h = ln_relu(x @ w1 + b1, g1, bt1)
    h = ln_relu(h @ w2 + b2, g2, bt2)
    h = ln_relu(h @ w3 + b3, g3, bt3)
    return jnp.squeeze(h @ w4 + b4, axis=-1)


if __name__ == "__main__":
    key = jax.random.PRNGKey(0)
    k_x, k_p = jax.random.split(key)

    input_dim = 16     # feature count of the (synthetic) tabular input -> hidden = 128
    batch = 512
    x = jax.random.normal(k_x, (batch, input_dim), dtype=jnp.float32)

    params = init_params(k_p, input_dim, hidden_scale=8)
    prepped = prepare_params(params)   # hoisted weight prep: done once, reused per call

    # Multi-tile path (2 grid steps -> exercises the grid / both v7x TensorCores).
    y = mlp_regressor_forward(x, prepped, batch_tile=256)
    y = jax.block_until_ready(y)
    assert y.shape == (batch,)

    # Single-tile / ragged-batch path at the default (large) tile.
    x_small = x[:100]
    y_small = jax.block_until_ready(mlp_regressor_forward(x_small, prepped))
    assert y_small.shape == (100,)

    ln_bf16 = _default_ln_bf16()
    y_ref = reference_forward(x, params, ln_bf16=ln_bf16)
    assert jnp.allclose(y, y_ref, atol=1e-2, rtol=1e-2), (y[:8], y_ref[:8])
    assert jnp.allclose(y_small, y_ref[:100], atol=1e-2, rtol=1e-2), (y_small[:8], y_ref[:8])

    # Loose check against a true f32 PyTorch-style reference (only bf16 MXU/LN drift allowed).
    y_f32 = reference_forward_f32(x, params)
    assert jnp.allclose(y, y_f32, atol=1e-1, rtol=1e-1), float(jnp.max(jnp.abs(y - y_f32)))

    print("KERNEL_OK")
</pallas_src>

<mosaic_0001>
module attributes {stable_mosaic.version = 11 : i64} {
  func.func @mlp_kernel(%arg0: i32, %arg1: memref<256x16xf32, #tpu.memory_space<vmem>>, %arg2: memref<16x128xbf16, #tpu.memory_space<vmem>>, %arg3: memref<1x128xf32, #tpu.memory_space<vmem>>, %arg4: memref<1x128xf32, #tpu.memory_space<vmem>>, %arg5: memref<1x128xf32, #tpu.memory_space<vmem>>, %arg6: memref<128x128xbf16, #tpu.memory_space<vmem>>, %arg7: memref<1x128xf32, #tpu.memory_space<vmem>>, %arg8: memref<1x128xf32, #tpu.memory_space<vmem>>, %arg9: memref<1x128xf32, #tpu.memory_space<vmem>>, %arg10: memref<128x64xbf16, #tpu.memory_space<vmem>>, %arg11: memref<1x64xf32, #tpu.memory_space<vmem>>, %arg12: memref<1x64xf32, #tpu.memory_space<vmem>>, %arg13: memref<1x64xf32, #tpu.memory_space<vmem>>, %arg14: memref<1x64xf32, #tpu.memory_space<vmem>>, %arg15: memref<1x1xf32, #tpu.memory_space<vmem>>, %arg16: memref<1x256xf32, #tpu.memory_space<vmem>>) attributes {dimension_semantics = [#tpu.dimension_semantics<parallel>], iteration_bounds = array<i64: 2>, scalar_prefetch = 0 : i64, scratch_operands = 0 : i64, tpu.core_type = #tpu.core_type<tc>, window_params = [{transform_indices = @transform_0, window_bounds = array<i64: 256, 16>}, {pipeline_mode = #tpu.pipeline_mode<synchronous>, transform_indices = @transform_1, window_bounds = array<i64: 16, 128>}, {pipeline_mode = #tpu.pipeline_mode<synchronous>, transform_indices = @transform_2, window_bounds = array<i64: 1, 128>}, {pipeline_mode = #tpu.pipeline_mode<synchronous>, transform_indices = @transform_3, window_bounds = array<i64: 1, 128>}, {pipeline_mode = #tpu.pipeline_mode<synchronous>, transform_indices = @transform_4, window_bounds = array<i64: 1, 128>}, {pipeline_mode = #tpu.pipeline_mode<synchronous>, transform_indices = @transform_5, window_bounds = array<i64: 128, 128>}, {pipeline_mode = #tpu.pipeline_mode<synchronous>, transform_indices = @transform_6, window_bounds = array<i64: 1, 128>}, {pipeline_mode = #tpu.pipeline_mode<synchronous>, transform_indices = @transform_7, window_bounds = array<i64: 1, 128>}, {pipeline_mode = #tpu.pipeline_mode<synchronous>, transform_indices = @transform_8, window_bounds = array<i64: 1, 128>}, {pipeline_mode = #tpu.pipeline_mode<synchronous>, transform_indices = @transform_9, window_bounds = array<i64: 128, 64>}, {pipeline_mode = #tpu.pipeline_mode<synchronous>, transform_indices = @transform_10, window_bounds = array<i64: 1, 64>}, {pipeline_mode = #tpu.pipeline_mode<synchronous>, transform_indices = @transform_11, window_bounds = array<i64: 1, 64>}, {pipeline_mode = #tpu.pipeline_mode<synchronous>, transform_indices = @transform_12, window_bounds = array<i64: 1, 64>}, {pipeline_mode = #tpu.pipeline_mode<synchronous>, transform_indices = @transform_13, window_bounds = array<i64: 1, 64>}, {pipeline_mode = #tpu.pipeline_mode<synchronous>, transform_indices = @transform_14, window_bounds = array<i64: 1, 1>}, {transform_indices = @transform_15, window_bounds = array<i64: 1, 256>}]} {
    %c0 = arith.constant 0 : index
    %c0_0 = arith.constant 0 : index
    %0 = vector.load %arg1[%c0, %c0_0] : memref<256x16xf32, #tpu.memory_space<vmem>>, vector<256x16xf32>
    %1 = arith.truncf %0 : vector<256x16xf32> to vector<256x16xbf16>
    %c0_1 = arith.constant 0 : index
    %c0_2 = arith.constant 0 : index
    %2 = vector.load %arg2[%c0_1, %c0_2] : memref<16x128xbf16, #tpu.memory_space<vmem>>, vector<16x128xbf16>
    %cst = arith.constant dense<0.000000e+00> : vector<256x128xf32>
    %3 = tpu.matmul %1, %2, %cst {dimension_numbers = #tpu.dot_dimension_numbers<[1], [0], [0], [1], [0, 0, 1, 1], [], []>} : vector<256x16xbf16>, vector<16x128xbf16>, vector<256x128xf32> -> vector<256x128xf32>
    %c0_3 = arith.constant 0 : index
    %c0_4 = arith.constant 0 : index
    %4 = vector.load %arg3[%c0_3, %c0_4] : memref<1x128xf32, #tpu.memory_space<vmem>>, vector<1x128xf32>
    %5 = vector.broadcast %4 : vector<1x128xf32> to vector<256x128xf32>
    %6 = arith.addf %3, %5 : vector<256x128xf32>
    %c0_5 = arith.constant 0 : index
    %c0_6 = arith.constant 0 : index
    %7 = vector.load %arg4[%c0_5, %c0_6] : memref<1x128xf32, #tpu.memory_space<vmem>>, vector<1x128xf32>
    %c0_7 = arith.constant 0 : index
    %c0_8 = arith.constant 0 : index
    %8 = vector.load %arg5[%c0_7, %c0_8] : memref<1x128xf32, #tpu.memory_space<vmem>>, vector<1x128xf32>
    %cst_9 = arith.constant dense<0.000000e+00> : vector<256xf32>
    %9 = vector.multi_reduction <add>, %6, %cst_9 [1] : vector<256x128xf32> to vector<256xf32>
    %10 = vector.shape_cast %9 : vector<256xf32> to vector<256x1xf32>
    %cst_10 = arith.constant 1.280000e+02 : f32
    %11 = vector.broadcast %cst_10 : f32 to vector<256x1xf32>
    %12 = arith.divf %10, %11 : vector<256x1xf32>
    %13 = arith.mulf %6, %6 : vector<256x128xf32>
    %cst_11 = arith.constant dense<0.000000e+00> : vector<256xf32>
    %14 = vector.multi_reduction <add>, %13, %cst_11 [1] : vector<256x128xf32> to vector<256xf32>
    %15 = vector.shape_cast %14 : vector<256xf32> to vector<256x1xf32>
    %cst_12 = arith.constant 1.280000e+02 : f32
    %16 = vector.broadcast %cst_12 : f32 to vector<256x1xf32>
    %17 = arith.divf %15, %16 : vector<256x1xf32>
    %18 = arith.mulf %12, %12 : vector<256x1xf32>
    %19 = arith.subf %17, %18 : vector<256x1xf32>
    %cst_13 = arith.constant 0.000000e+00 : f32
    %20 = vector.broadcast %cst_13 : f32 to vector<256x1xf32>
    %21 = arith.maximumf %19, %20 : vector<256x1xf32>
    %cst_14 = arith.constant 9.99999974E-6 : f32
    %22 = vector.broadcast %cst_14 : f32 to vector<256x1xf32>
    %23 = arith.addf %21, %22 : vector<256x1xf32>
    %24 = math.rsqrt %23 : vector<256x1xf32>
    %25 = vector.broadcast %12 : vector<256x1xf32> to vector<256x128xf32>
    %26 = arith.subf %6, %25 : vector<256x128xf32>
    %27 = vector.broadcast %24 : vector<256x1xf32> to vector<256x128xf32>
    %28 = arith.mulf %26, %27 : vector<256x128xf32>
    %29 = vector.broadcast %7 : vector<1x128xf32> to vector<256x128xf32>
    %30 = arith.mulf %28, %29 : vector<256x128xf32>
    %31 = vector.broadcast %8 : vector<1x128xf32> to vector<256x128xf32>
    %32 = arith.addf %30, %31 : vector<256x128xf32>
    %cst_15 = arith.constant 0.000000e+00 : f32
    %33 = vector.broadcast %cst_15 : f32 to vector<256x128xf32>
    %34 = arith.maximumf %32, %33 : vector<256x128xf32>
    %35 = arith.truncf %34 : vector<256x128xf32> to vector<256x128xbf16>
    %c0_16 = arith.constant 0 : index
    %c0_17 = arith.constant 0 : index
    %36 = vector.load %arg6[%c0_16, %c0_17] : memref<128x128xbf16, #tpu.memory_space<vmem>>, vector<128x128xbf16>
    %cst_18 = arith.constant dense<0.000000e+00> : vector<256x128xf32>
    %37 = tpu.matmul %35, %36, %cst_18 {dimension_numbers = #tpu.dot_dimension_numbers<[1], [0], [0], [1], [0, 0, 1, 1], [], []>} : vector<256x128xbf16>, vector<128x128xbf16>, vector<256x128xf32> -> vector<256x128xf32>
    %c0_19 = arith.constant 0 : index
    %c0_20 = arith.constant 0 : index
    %38 = vector.load %arg7[%c0_19, %c0_20] : memref<1x128xf32, #tpu.memory_space<vmem>>, vector<1x128xf32>
    %39 = vector.broadcast %38 : vector<1x128xf32> to vector<256x128xf32>
    %40 = arith.addf %37, %39 : vector<256x128xf32>
    %c0_21 = arith.constant 0 : index
    %c0_22 = arith.constant 0 : index
    %41 = vector.load %arg8[%c0_21, %c0_22] : memref<1x128xf32, #tpu.memory_space<vmem>>, vector<1x128xf32>
    %c0_23 = arith.constant 0 : index
    %c0_24 = arith.constant 0 : index
    %42 = vector.load %arg9[%c0_23, %c0_24] : memref<1x128xf32, #tpu.memory_space<vmem>>, vector<1x128xf32>
    %cst_25 = arith.constant dense<0.000000e+00> : vector<256xf32>
    %43 = vector.multi_reduction <add>, %40, %cst_25 [1] : vector<256x128xf32> to vector<256xf32>
    %44 = vector.shape_cast %43 : vector<256xf32> to vector<256x1xf32>
    %cst_26 = arith.constant 1.280000e+02 : f32
    %45 = vector.broadcast %cst_26 : f32 to vector<256x1xf32>
    %46 = arith.divf %44, %45 : vector<256x1xf32>
    %47 = arith.mulf %40, %40 : vector<256x128xf32>
    %cst_27 = arith.constant dense<0.000000e+00> : vector<256xf32>
    %48 = vector.multi_reduction <add>, %47, %cst_27 [1] : vector<256x128xf32> to vector<256xf32>
    %49 = vector.shape_cast %48 : vector<256xf32> to vector<256x1xf32>
    %cst_28 = arith.constant 1.280000e+02 : f32
    %50 = vector.broadcast %cst_28 : f32 to vector<256x1xf32>
    %51 = arith.divf %49, %50 : vector<256x1xf32>
    %52 = arith.mulf %46, %46 : vector<256x1xf32>
    %53 = arith.subf %51, %52 : vector<256x1xf32>
    %cst_29 = arith.constant 0.000000e+00 : f32
    %54 = vector.broadcast %cst_29 : f32 to vector<256x1xf32>
    %55 = arith.maximumf %53, %54 : vector<256x1xf32>
    %cst_30 = arith.constant 9.99999974E-6 : f32
    %56 = vector.broadcast %cst_30 : f32 to vector<256x1xf32>
    %57 = arith.addf %55, %56 : vector<256x1xf32>
    %58 = math.rsqrt %57 : vector<256x1xf32>
    %59 = vector.broadcast %46 : vector<256x1xf32> to vector<256x128xf32>
    %60 = arith.subf %40, %59 : vector<256x128xf32>
    %61 = vector.broadcast %58 : vector<256x1xf32> to vector<256x128xf32>
    %62 = arith.mulf %60, %61 : vector<256x128xf32>
    %63 = vector.broadcast %41 : vector<1x128xf32> to vector<256x128xf32>
    %64 = arith.mulf %62, %63 : vector<256x128xf32>
    %65 = vector.broadcast %42 : vector<1x128xf32> to vector<256x128xf32>
    %66 = arith.addf %64, %65 : vector<256x128xf32>
    %cst_31 = arith.constant 0.000000e+00 : f32
    %67 = vector.broadcast %cst_31 : f32 to vector<256x128xf32>
    %68 = arith.maximumf %66, %67 : vector<256x128xf32>
    %69 = arith.truncf %68 : vector<256x128xf32> to vector<256x128xbf16>
    %c0_32 = arith.constant 0 : index
    %c0_33 = arith.constant 0 : index
    %70 = vector.load %arg10[%c0_32, %c0_33] : memref<128x64xbf16, #tpu.memory_space<vmem>>, vector<128x64xbf16>
    %cst_34 = arith.constant dense<0.000000e+00> : vector<256x64xf32>
    %71 = tpu.matmul %69, %70, %cst_34 {dimension_numbers = #tpu.dot_dimension_numbers<[1], [0], [0], [1], [0, 0, 1, 1], [], []>} : vector<256x128xbf16>, vector<128x64xbf16>, vector<256x64xf32> -> vector<256x64xf32>
    %c0_35 = arith.constant 0 : index
    %c0_36 = arith.constant 0 : index
    %72 = vector.load %arg11[%c0_35, %c0_36] : memref<1x64xf32, #tpu.memory_space<vmem>>, vector<1x64xf32>
    %73 = vector.broadcast %72 : vector<1x64xf32> to vector<256x64xf32>
    %74 = arith.addf %71, %73 : vector<256x64xf32>
    %c0_37 = arith.constant 0 : index
    %c0_38 = arith.constant 0 : index
    %75 = vector.load %arg12[%c0_37, %c0_38] : memref<1x64xf32, #tpu.memory_space<vmem>>, vector<1x64xf32>
    %c0_39 = arith.constant 0 : index
    %c0_40 = arith.constant 0 : index
    %76 = vector.load %arg13[%c0_39, %c0_40] : memref<1x64xf32, #tpu.memory_space<vmem>>, vector<1x64xf32>
    %cst_41 = arith.constant dense<0.000000e+00> : vector<256xf32>
    %77 = vector.multi_reduction <add>, %74, %cst_41 [1] : vector<256x64xf32> to vector<256xf32>
    %78 = vector.shape_cast %77 : vector<256xf32> to vector<256x1xf32>
    %cst_42 = arith.constant 6.400000e+01 : f32
    %79 = vector.broadcast %cst_42 : f32 to vector<256x1xf32>
    %80 = arith.divf %78, %79 : vector<256x1xf32>
    %81 = arith.mulf %74, %74 : vector<256x64xf32>
    %cst_43 = arith.constant dense<0.000000e+00> : vector<256xf32>
    %82 = vector.multi_reduction <add>, %81, %cst_43 [1] : vector<256x64xf32> to vector<256xf32>
    %83 = vector.shape_cast %82 : vector<256xf32> to vector<256x1xf32>
    %cst_44 = arith.constant 6.400000e+01 : f32
    %84 = vector.broadcast %cst_44 : f32 to vector<256x1xf32>
    %85 = arith.divf %83, %84 : vector<256x1xf32>
    %86 = arith.mulf %80, %80 : vector<256x1xf32>
    %87 = arith.subf %85, %86 : vector<256x1xf32>
    %cst_45 = arith.constant 0.000000e+00 : f32
    %88 = vector.broadcast %cst_45 : f32 to vector<256x1xf32>
    %89 = arith.maximumf %87, %88 : vector<256x1xf32>
    %cst_46 = arith.constant 9.99999974E-6 : f32
    %90 = vector.broadcast %cst_46 : f32 to vector<256x1xf32>
    %91 = arith.addf %89, %90 : vector<256x1xf32>
    %92 = math.rsqrt %91 : vector<256x1xf32>
    %93 = vector.broadcast %80 : vector<256x1xf32> to vector<256x64xf32>
    %94 = arith.subf %74, %93 : vector<256x64xf32>
    %95 = vector.broadcast %92 : vector<256x1xf32> to vector<256x64xf32>
    %96 = arith.mulf %94, %95 : vector<256x64xf32>
    %97 = vector.broadcast %75 : vector<1x64xf32> to vector<256x64xf32>
    %98 = arith.mulf %96, %97 : vector<256x64xf32>
    %99 = vector.broadcast %76 : vector<1x64xf32> to vector<256x64xf32>
    %100 = arith.addf %98, %99 : vector<256x64xf32>
    %cst_47 = arith.constant 0.000000e+00 : f32
    %101 = vector.broadcast %cst_47 : f32 to vector<256x64xf32>
    %102 = arith.maximumf %100, %101 : vector<256x64xf32>
    %103 = arith.truncf %102 : vector<256x64xf32> to vector<256x64xbf16>
    %c0_48 = arith.constant 0 : index
    %c0_49 = arith.constant 0 : index
    %104 = vector.load %arg14[%c0_48, %c0_49] : memref<1x64xf32, #tpu.memory_space<vmem>>, vector<1x64xf32>
    %105 = arith.extf %103 : vector<256x64xbf16> to vector<256x64xf32>
    %106 = vector.broadcast %104 : vector<1x64xf32> to vector<256x64xf32>
    %107 = arith.mulf %105, %106 : vector<256x64xf32>
    %cst_50 = arith.constant dense<0.000000e+00> : vector<256xf32>
    %108 = vector.multi_reduction <add>, %107, %cst_50 [1] : vector<256x64xf32> to vector<256xf32>
    %109 = vector.shape_cast %108 : vector<256xf32> to vector<1x256xf32>
    %c0_51 = arith.constant 0 : index
    %c0_52 = arith.constant 0 : index
    %110 = vector.load %arg15[%c0_51, %c0_52] : memref<1x1xf32, #tpu.memory_space<vmem>>, vector<1x1xf32>
    %111 = vector.broadcast %110 : vector<1x1xf32> to vector<1x256xf32>
    %112 = arith.addf %109, %111 : vector<1x256xf32>
    %c0_53 = arith.constant 0 : index
    %c0_54 = arith.constant 0 : index
    %113 = vector.load %arg16[%c0_53, %c0_54] : memref<1x256xf32, #tpu.memory_space<vmem>>, vector<1x256xf32>
    tpu.vector_store %arg16[%c0_53, %c0_54], %112 {strides = array<i32>} : memref<1x256xf32, #tpu.memory_space<vmem>>, vector<1x256xf32>,
    return
  }
  func.func @transform_0(%arg0: i32) -> (i32, i32) {
    %c0_i32 = arith.constant 0 : i32
    %c0_i32_0 = arith.constant 0 : i32
    return %arg0, %c0_i32 : i32, i32
  }
  func.func @transform_1(%arg0: i32) -> (i32, i32) {
    %c0_i32 = arith.constant 0 : i32
    %c0_i32_0 = arith.constant 0 : i32
    %c0_i32_1 = arith.constant 0 : i32
    return %c0_i32, %c0_i32_0 : i32, i32
  }
  func.func @transform_2(%arg0: i32) -> (i32, i32) {
    %c0_i32 = arith.constant 0 : i32
    %c0_i32_0 = arith.constant 0 : i32
    %c0_i32_1 = arith.constant 0 : i32
    return %c0_i32, %c0_i32_0 : i32, i32
  }
  func.func @transform_3(%arg0: i32) -> (i32, i32) {
    %c0_i32 = arith.constant 0 : i32
    %c0_i32_0 = arith.constant 0 : i32
    %c0_i32_1 = arith.constant 0 : i32
    return %c0_i32, %c0_i32_0 : i32, i32
  }
  func.func @transform_4(%arg0: i32) -> (i32, i32) {
    %c0_i32 = arith.constant 0 : i32
    %c0_i32_0 = arith.constant 0 : i32
    %c0_i32_1 = arith.constant 0 : i32
    return %c0_i32, %c0_i32_0 : i32, i32
  }
  func.func @transform_5(%arg0: i32) -> (i32, i32) {
    %c0_i32 = arith.constant 0 : i32
    %c0_i32_0 = arith.constant 0 : i32
    %c0_i32_1 = arith.constant 0 : i32
    return %c0_i32, %c0_i32_0 : i32, i32
  }
  func.func @transform_6(%arg0: i32) -> (i32, i32) {
    %c0_i32 = arith.constant 0 : i32
    %c0_i32_0 = arith.constant 0 : i32
    %c0_i32_1 = arith.constant 0 : i32
    return %c0_i32, %c0_i32_0 : i32, i32
  }
  func.func @transform_7(%arg0: i32) -> (i32, i32) {
    %c0_i32 = arith.constant 0 : i32
    %c0_i32_0 = arith.constant 0 : i32
    %c0_i32_1 = arith.constant 0 : i32
    return %c0_i32, %c0_i32_0 : i32, i32
  }
  func.func @transform_8(%arg0: i32) -> (i32, i32) {
    %c0_i32 = arith.constant 0 : i32
    %c0_i32_0 = arith.constant 0 : i32
    %c0_i32_1 = arith.constant 0 : i32
    return %c0_i32, %c0_i32_0 : i32, i32
  }
  func.func @transform_9(%arg0: i32) -> (i32, i32) {
    %c0_i32 = arith.constant 0 : i32
    %c0_i32_0 = arith.constant 0 : i32
    %c0_i32_1 = arith.constant 0 : i32
    return %c0_i32, %c0_i32_0 : i32, i32
  }
  func.func @transform_10(%arg0: i32) -> (i32, i32) {
    %c0_i32 = arith.constant 0 : i32
    %c0_i32_0 = arith.constant 0 : i32
    %c0_i32_1 = arith.constant 0 : i32
    return %c0_i32, %c0_i32_0 : i32, i32
  }
  func.func @transform_11(%arg0: i32) -> (i32, i32) {
    %c0_i32 = arith.constant 0 : i32
    %c0_i32_0 = arith.constant 0 : i32
    %c0_i32_1 = arith.constant 0 : i32
    return %c0_i32, %c0_i32_0 : i32, i32
  }
  func.func @transform_12(%arg0: i32) -> (i32, i32) {
    %c0_i32 = arith.constant 0 : i32
    %c0_i32_0 = arith.constant 0 : i32
    %c0_i32_1 = arith.constant 0 : i32
    return %c0_i32, %c0_i32_0 : i32, i32
  }
  func.func @transform_13(%arg0: i32) -> (i32, i32) {
    %c0_i32 = arith.constant 0 : i32
    %c0_i32_0 = arith.constant 0 : i32
    %c0_i32_1 = arith.constant 0 : i32
    return %c0_i32, %c0_i32_0 : i32, i32
  }
  func.func @transform_14(%arg0: i32) -> (i32, i32) {
    %c0_i32 = arith.constant 0 : i32
    %c0_i32_0 = arith.constant 0 : i32
    %c0_i32_1 = arith.constant 0 : i32
    return %c0_i32, %c0_i32_0 : i32, i32
  }
  func.func @transform_15(%arg0: i32) -> (i32, i32) {
    %c0_i32 = arith.constant 0 : i32
    %c0_i32_0 = arith.constant 0 : i32
    return %c0_i32, %arg0 : i32, i32
  }
}

</mosaic_0001>

<llo_original>
// kernel: tpu_custom_call.1
$region0: #{tpu_custom_call.1}
  #allocation0 [shape = 'u32[]', space=smem, size = 0x4, offset = 0x4, fixed_abs, tag = 'smem constant byte address 0x4 - core index']
  #allocation1 [shape = 'u32[144,128]{1,0:T(1,128)}', space=vmem, size = 0x12000, scoped, tag = 'internal scratch']
  #allocation2 [shape = 'f32[1,1]{1,0:T(1,128)S(1)}', space=vmem, size = 0x200, scoped, tag = 'scoped memory for tpu_custom_call.1']
  %s0 = inlined_call_operand.vmem [shape: f32[512,16], index: 0, kind: input, shape index: {}]
  %s1 = inlined_call_operand.vmem [shape: bf16[16,128], index: 1, kind: input, shape index: {}]
  %s2 = inlined_call_operand.vmem [shape: f32[1,128], index: 2, kind: input, shape index: {}]
  %s3 = inlined_call_operand.vmem [shape: f32[1,128], index: 3, kind: input, shape index: {}]
  %s4 = inlined_call_operand.vmem [shape: f32[1,128], index: 4, kind: input, shape index: {}]
  %s5 = inlined_call_operand.vmem [shape: bf16[128,128], index: 5, kind: input, shape index: {}]
  %s6 = inlined_call_operand.vmem [shape: f32[1,128], index: 6, kind: input, shape index: {}]
  %s7 = inlined_call_operand.vmem [shape: f32[1,128], index: 7, kind: input, shape index: {}]
  %s8 = inlined_call_operand.vmem [shape: f32[1,128], index: 8, kind: input, shape index: {}]
  %s9 = inlined_call_operand.vmem [shape: bf16[128,64], index: 9, kind: input, shape index: {}]
  %s10 = inlined_call_operand.vmem [shape: f32[1,64], index: 10, kind: input, shape index: {}]
  %s11 = inlined_call_operand.vmem [shape: f32[1,64], index: 11, kind: input, shape index: {}]
  %s12 = inlined_call_operand.vmem [shape: f32[1,64], index: 12, kind: input, shape index: {}]
  %s13 = inlined_call_operand.vmem [shape: f32[1,64], index: 13, kind: input, shape index: {}]
  %s14 = inlined_call_operand.<no memory space> [shape: f32[1,1], index: 14, kind: input, shape index: {}]
  %s15 = inlined_call_operand.hbm [shape: f32[1,512], index: 15, kind: output, shape index: {}]
  %s16 = sld [smem:[#allocation0]]
  $region93: #{tpu_custom_call.1} parent=0
    _
  %s18 = ssub.s32 1, %s16
  %s19 = scalar_select 0, %s18, %s16
  %v20 = vstv %s14
  %21 = vst [vmem:[#allocation2] sm:$0x1] %v20
  $region1: #{tpu_custom_call.1} parent=0
    #allocation3 [shape = 'u8[2048]{0}', space=vmem, size = 0x800, scoped, tag = 'output window, operand 0']
    #allocation4 [shape = 's32[2]{0}', space=sflag, size = 0x8, scoped, tag = 'scoped memory for tpu_custom_call.1']
    %22 = vsyncpa [#allocation4], 0
    %s23 = scalar_lea.sflag [#allocation4], 1
    %24 = vsyncpa %s23, 0
    loop: start=0, step=1, limit=4
    $region2: #{tpu_custom_call.1} parent=1 // loop_pre_header
      _
    $region3: #{tpu_custom_call.1} parent=1 // loop_header
      %s26 = sphi 0, %s30
      %p27 = scmp.ge.s32.totalorder %s26, 4
      %s36 = sphi 0, %s38
      %s39 = sphi 0, %s36
      %s40 = sphi 0, %s39
      %s56 = sphi 0, %s40
      %s60 = sphi 0, %s60
      %s62 = sphi 0, %s60
      %s63 = sphi 0, %s62
      %s77 = sphi 0, %s63
      %s81 = sphi 0, %s81
      %s83 = sphi 0, %s81
      %s84 = sphi 0, %s83
      %s98 = sphi 0, %s84
      %s102 = sphi 0, %s102
      %s104 = sphi 0, %s102
      %s105 = sphi 0, %s104
      %s119 = sphi 0, %s105
      %s123 = sphi 0, %s123
      %s125 = sphi 0, %s123
      %s126 = sphi 0, %s125
      %s140 = sphi 0, %s126
      %s144 = sphi 0, %s144
      %s146 = sphi 0, %s144
      %s147 = sphi 0, %s146
      %s161 = sphi 0, %s147
      %s165 = sphi 0, %s165
      %s167 = sphi 0, %s165
      %s168 = sphi 0, %s167
      %s182 = sphi 0, %s168
      %s186 = sphi 0, %s186
      %s188 = sphi 0, %s186
      %s189 = sphi 0, %s188
      %s203 = sphi 0, %s189
      %s207 = sphi 0, %s207
      %s209 = sphi 0, %s207
      %s210 = sphi 0, %s209
      %s224 = sphi 0, %s210
      %s228 = sphi 0, %s228
      %s230 = sphi 0, %s228
      %s231 = sphi 0, %s230
      %s245 = sphi 0, %s231
      %s249 = sphi 0, %s249
      %s251 = sphi 0, %s249
      %s252 = sphi 0, %s251
      %s266 = sphi 0, %s252
      %s270 = sphi 0, %s270
      %s272 = sphi 0, %s270
      %s273 = sphi 0, %s272
      %s287 = sphi 0, %s273
      %s291 = sphi 0, %s291
      %s293 = sphi 0, %s291
      %s294 = sphi 0, %s293
      %s308 = sphi 0, %s294
      %s312 = sphi 0, %s312
      %s314 = sphi 0, %s312
      %s315 = sphi 0, %s314
      %s329 = sphi 0, %s315
      %s333 = sphi 0, %s333
      %s335 = sphi 0, %s333
      %s336 = sphi 0, %s335
      %s350 = sphi 0, %s336
      %s356 = sphi 0, %s358
      %s359 = sphi 0, %s356
      %s360 = sphi 0, %s359
      %s376 = sphi 0, %s360
    $region4: #{tpu_custom_call.1} parent=1 // loop_header_branch
      %29 = sbr.rel (%p27) target = $region8
    $region5: #{tpu_custom_call.1} parent=1 // loop_body
      %s31 = ssub.s32 %s26, 1
      %s32 = ssub.s32 %s26, 2
      %s33 = sadd.s32 %s26, 1
      %s34 = ssub.s32 %s26, %s33
      %p35 = scmp.eq.s32.totalorder %s34, 0
      %s37 = sadd.s32 %s36, 1
      %s38 = scalar_select %p35, %s36, %s37
      %p41 = pneg %p35
      %p42 = scmp.eq.s32.totalorder %s26, 1
      %p43 = por %p41, %p42
      %p44 = scmp.ne.s32.totalorder %s36, %s39
      %p45 = scmp.eq.s32.totalorder %s26, 0
      %p46 = por %p44, %p45
      %p47 = scmp.ne.s32.totalorder %s36, %s39
      %p48 = scmp.eq.s32.totalorder %s31, 1
      %p49 = por %p47, %p48
      %p50 = scmp.ne.s32.totalorder %s39, %s40
      %p51 = scmp.eq.s32.totalorder %s31, 0
      %p52 = por %p50, %p51
      %p53 = scmp.ne.s32.totalorder %s39, %s40
      %p54 = scmp.eq.s32.totalorder %s32, 1
      %p55 = por %p53, %p54
      %p57 = scmp.ne.s32.totalorder %s40, %s56
      %p58 = scmp.eq.s32.totalorder %s32, 0
      %p59 = por %p57, %p58
      %s61 = sadd.s32 %s60, 1
      %p64 = scmp.eq.s32.totalorder %s26, 1
      %p65 = scmp.ne.s32.totalorder %s60, %s62
      %p66 = scmp.eq.s32.totalorder %s26, 0
      %p67 = por %p65, %p66
      %p68 = scmp.ne.s32.totalorder %s60, %s62
      %p69 = scmp.eq.s32.totalorder %s31, 1
      %p70 = por %p68, %p69
      %p71 = scmp.ne.s32.totalorder %s62, %s63
      %p72 = scmp.eq.s32.totalorder %s31, 0
      %p73 = por %p71, %p72
      %p74 = scmp.ne.s32.totalorder %s62, %s63
      %p75 = scmp.eq.s32.totalorder %s32, 1
      %p76 = por %p74, %p75
      %p78 = scmp.ne.s32.totalorder %s63, %s77
      %p79 = scmp.eq.s32.totalorder %s32, 0
      %p80 = por %p78, %p79
      %s82 = sadd.s32 %s81, 1
      %p85 = scmp.eq.s32.totalorder %s26, 1
      %p86 = scmp.ne.s32.totalorder %s81, %s83
      %p87 = scmp.eq.s32.totalorder %s26, 0
      %p88 = por %p86, %p87
      %p89 = scmp.ne.s32.totalorder %s81, %s83
      %p90 = scmp.eq.s32.totalorder %s31, 1
      %p91 = por %p89, %p90
      %p92 = scmp.ne.s32.totalorder %s83, %s84
      %p93 = scmp.eq.s32.totalorder %s31, 0
      %p94 = por %p92, %p93
      %p95 = scmp.ne.s32.totalorder %s83, %s84
      %p96 = scmp.eq.s32.totalorder %s32, 1
      %p97 = por %p95, %p96
      %p99 = scmp.ne.s32.totalorder %s84, %s98
      %p100 = scmp.eq.s32.totalorder %s32, 0
      %p101 = por %p99, %p100
      %s103 = sadd.s32 %s102, 1
      %p106 = scmp.eq.s32.totalorder %s26, 1
      %p107 = scmp.ne.s32.totalorder %s102, %s104
      %p108 = scmp.eq.s32.totalorder %s26, 0
      %p109 = por %p107, %p108
      %p110 = scmp.ne.s32.totalorder %s102, %s104
      %p111 = scmp.eq.s32.totalorder %s31, 1
      %p112 = por %p110, %p111
      %p113 = scmp.ne.s32.totalorder %s104, %s105
      %p114 = scmp.eq.s32.totalorder %s31, 0
      %p115 = por %p113, %p114
      %p116 = scmp.ne.s32.totalorder %s104, %s105
      %p117 = scmp.eq.s32.totalorder %s32, 1
      %p118 = por %p116, %p117
      %p120 = scmp.ne.s32.totalorder %s105, %s119
      %p121 = scmp.eq.s32.totalorder %s32, 0
      %p122 = por %p120, %p121
      %s124 = sadd.s32 %s123, 1
      %p127 = scmp.eq.s32.totalorder %s26, 1
      %p128 = scmp.ne.s32.totalorder %s123, %s125
      %p129 = scmp.eq.s32.totalorder %s26, 0
      %p130 = por %p128, %p129
      %p131 = scmp.ne.s32.totalorder %s123, %s125
      %p132 = scmp.eq.s32.totalorder %s31, 1
      %p133 = por %p131, %p132
      %p134 = scmp.ne.s32.totalorder %s125, %s126
      %p135 = scmp.eq.s32.totalorder %s31, 0
      %p136 = por %p134, %p135
      %p137 = scmp.ne.s32.totalorder %s125, %s126
      %p138 = scmp.eq.s32.totalorder %s32, 1
      %p139 = por %p137, %p138
      %p141 = scmp.ne.s32.totalorder %s126, %s140
      %p142 = scmp.eq.s32.totalorder %s32, 0
      %p143 = por %p141, %p142
      %s145 = sadd.s32 %s144, 1
      %p148 = scmp.eq.s32.totalorder %s26, 1
      %p149 = scmp.ne.s32.totalorder %s144, %s146
      %p150 = scmp.eq.s32.totalorder %s26, 0
      %p151 = por %p149, %p150
      %p152 = scmp.ne.s32.totalorder %s144, %s146
      %p153 = scmp.eq.s32.totalorder %s31, 1
      %p154 = por %p152, %p153
      %p155 = scmp.ne.s32.totalorder %s146, %s147
      %p156 = scmp.eq.s32.totalorder %s31, 0
      %p157 = por %p155, %p156
      %p158 = scmp.ne.s32.totalorder %s146, %s147
      %p159 = scmp.eq.s32.totalorder %s32, 1
      %p160 = por %p158, %p159
      %p162 = scmp.ne.s32.totalorder %s147, %s161
      %p163 = scmp.eq.s32.totalorder %s32, 0
      %p164 = por %p162, %p163
      %s166 = sadd.s32 %s165, 1
      %p169 = scmp.eq.s32.totalorder %s26, 1
      %p170 = scmp.ne.s32.totalorder %s165, %s167
      %p171 = scmp.eq.s32.totalorder %s26, 0
      %p172 = por %p170, %p171
      %p173 = scmp.ne.s32.totalorder %s165, %s167
      %p174 = scmp.eq.s32.totalorder %s31, 1
      %p175 = por %p173, %p174
      %p176 = scmp.ne.s32.totalorder %s167, %s168
      %p177 = scmp.eq.s32.totalorder %s31, 0
      %p178 = por %p176, %p177
      %p179 = scmp.ne.s32.totalorder %s167, %s168
      %p180 = scmp.eq.s32.totalorder %s32, 1
      %p181 = por %p179, %p180
      %p183 = scmp.ne.s32.totalorder %s168, %s182
      %p184 = scmp.eq.s32.totalorder %s32, 0
      %p185 = por %p183, %p184
      %s187 = sadd.s32 %s186, 1
      %p190 = scmp.eq.s32.totalorder %s26, 1
      %p191 = scmp.ne.s32.totalorder %s186, %s188
      %p192 = scmp.eq.s32.totalorder %s26, 0
      %p193 = por %p191, %p192
      %p194 = scmp.ne.s32.totalorder %s186, %s188
      %p195 = scmp.eq.s32.totalorder %s31, 1
      %p196 = por %p194, %p195
      %p197 = scmp.ne.s32.totalorder %s188, %s189
      %p198 = scmp.eq.s32.totalorder %s31, 0
      %p199 = por %p197, %p198
      %p200 = scmp.ne.s32.totalorder %s188, %s189
      %p201 = scmp.eq.s32.totalorder %s32, 1
      %p202 = por %p200, %p201
      %p204 = scmp.ne.s32.totalorder %s189, %s203
      %p205 = scmp.eq.s32.totalorder %s32, 0
      %p206 = por %p204, %p205
      %s208 = sadd.s32 %s207, 1
      %p211 = scmp.eq.s32.totalorder %s26, 1
      %p212 = scmp.ne.s32.totalorder %s207, %s209
      %p213 = scmp.eq.s32.totalorder %s26, 0
      %p214 = por %p212, %p213
      %p215 = scmp.ne.s32.totalorder %s207, %s209
      %p216 = scmp.eq.s32.totalorder %s31, 1
      %p217 = por %p215, %p216
      %p218 = scmp.ne.s32.totalorder %s209, %s210
      %p219 = scmp.eq.s32.totalorder %s31, 0
      %p220 = por %p218, %p219
      %p221 = scmp.ne.s32.totalorder %s209, %s210
      %p222 = scmp.eq.s32.totalorder %s32, 1
      %p223 = por %p221, %p222
      %p225 = scmp.ne.s32.totalorder %s210, %s224
      %p226 = scmp.eq.s32.totalorder %s32, 0
      %p227 = por %p225, %p226
      %s229 = sadd.s32 %s228, 1
      %p232 = scmp.eq.s32.totalorder %s26, 1
      %p233 = scmp.ne.s32.totalorder %s228, %s230
      %p234 = scmp.eq.s32.totalorder %s26, 0
      %p235 = por %p233, %p234
      %p236 = scmp.ne.s32.totalorder %s228, %s230
      %p237 = scmp.eq.s32.totalorder %s31, 1
      %p238 = por %p236, %p237
      %p239 = scmp.ne.s32.totalorder %s230, %s231
      %p240 = scmp.eq.s32.totalorder %s31, 0
      %p241 = por %p239, %p240
      %p242 = scmp.ne.s32.totalorder %s230, %s231
      %p243 = scmp.eq.s32.totalorder %s32, 1
      %p244 = por %p242, %p243
      %p246 = scmp.ne.s32.totalorder %s231, %s245
      %p247 = scmp.eq.s32.totalorder %s32, 0
      %p248 = por %p246, %p247
      %s250 = sadd.s32 %s249, 1
      %p253 = scmp.eq.s32.totalorder %s26, 1
      %p254 = scmp.ne.s32.totalorder %s249, %s251
      %p255 = scmp.eq.s32.totalorder %s26, 0
      %p256 = por %p254, %p255
      %p257 = scmp.ne.s32.totalorder %s249, %s251
      %p258 = scmp.eq.s32.totalorder %s31, 1
      %p259 = por %p257, %p258
      %p260 = scmp.ne.s32.totalorder %s251, %s252
      %p261 = scmp.eq.s32.totalorder %s31, 0
      %p262 = por %p260, %p261
      %p263 = scmp.ne.s32.totalorder %s251, %s252
      %p264 = scmp.eq.s32.totalorder %s32, 1
      %p265 = por %p263, %p264
      %p267 = scmp.ne.s32.totalorder %s252, %s266
      %p268 = scmp.eq.s32.totalorder %s32, 0
      %p269 = por %p267, %p268
      %s271 = sadd.s32 %s270, 1
      %p274 = scmp.eq.s32.totalorder %s26, 1
      %p275 = scmp.ne.s32.totalorder %s270, %s272
      %p276 = scmp.eq.s32.totalorder %s26, 0
      %p277 = por %p275, %p276
      %p278 = scmp.ne.s32.totalorder %s270, %s272
      %p279 = scmp.eq.s32.totalorder %s31, 1
      %p280 = por %p278, %p279
      %p281 = scmp.ne.s32.totalorder %s272, %s273
      %p282 = scmp.eq.s32.totalorder %s31, 0
      %p283 = por %p281, %p282
      %p284 = scmp.ne.s32.totalorder %s272, %s273
      %p285 = scmp.eq.s32.totalorder %s32, 1
      %p286 = por %p284, %p285
      %p288 = scmp.ne.s32.totalorder %s273, %s287
      %p289 = scmp.eq.s32.totalorder %s32, 0
      %p290 = por %p288, %p289
      %s292 = sadd.s32 %s291, 1
      %p295 = scmp.eq.s32.totalorder %s26, 1
      %p296 = scmp.ne.s32.totalorder %s291, %s293
      %p297 = scmp.eq.s32.totalorder %s26, 0
      %p298 = por %p296, %p297
      %p299 = scmp.ne.s32.totalorder %s291, %s293
      %p300 = scmp.eq.s32.totalorder %s31, 1
      %p301 = por %p299, %p300
      %p302 = scmp.ne.s32.totalorder %s293, %s294
      %p303 = scmp.eq.s32.totalorder %s31, 0
      %p304 = por %p302, %p303
      %p305 = scmp.ne.s32.totalorder %s293, %s294
      %p306 = scmp.eq.s32.totalorder %s32, 1
      %p307 = por %p305, %p306
      %p309 = scmp.ne.s32.totalorder %s294, %s308
      %p310 = scmp.eq.s32.totalorder %s32, 0
      %p311 = por %p309, %p310
      %s313 = sadd.s32 %s312, 1
      %p316 = scmp.eq.s32.totalorder %s26, 1
      %p317 = scmp.ne.s32.totalorder %s312, %s314
      %p318 = scmp.eq.s32.totalorder %s26, 0
      %p319 = por %p317, %p318
      %p320 = scmp.ne.s32.totalorder %s312, %s314
      %p321 = scmp.eq.s32.totalorder %s31, 1
      %p322 = por %p320, %p321
      %p323 = scmp.ne.s32.totalorder %s314, %s315
      %p324 = scmp.eq.s32.totalorder %s31, 0
      %p325 = por %p323, %p324
      %p326 = scmp.ne.s32.totalorder %s314, %s315
      %p327 = scmp.eq.s32.totalorder %s32, 1
      %p328 = por %p326, %p327
      %p330 = scmp.ne.s32.totalorder %s315, %s329
      %p331 = scmp.eq.s32.totalorder %s32, 0
      %p332 = por %p330, %p331
      %s334 = sadd.s32 %s333, 1
      %p337 = scmp.eq.s32.totalorder %s26, 1
      %p338 = scmp.ne.s32.totalorder %s333, %s335
      %p339 = scmp.eq.s32.totalorder %s26, 0
      %p340 = por %p338, %p339
      %p341 = scmp.ne.s32.totalorder %s333, %s335
      %p342 = scmp.eq.s32.totalorder %s31, 1
      %p343 = por %p341, %p342
      %p344 = scmp.ne.s32.totalorder %s335, %s336
      %p345 = scmp.eq.s32.totalorder %s31, 0
      %p346 = por %p344, %p345
      %p347 = scmp.ne.s32.totalorder %s335, %s336
      %p348 = scmp.eq.s32.totalorder %s32, 1
      %p349 = por %p347, %p348
      %p351 = scmp.ne.s32.totalorder %s336, %s350
      %p352 = scmp.eq.s32.totalorder %s32, 0
      %p353 = por %p351, %p352
      %s354 = ssub.s32 %s26, %s33
      %p355 = scmp.eq.s32.totalorder %s354, 0
      %s357 = sadd.s32 %s356, 1
      %s358 = scalar_select %p355, %s356, %s357
      %p361 = pneg %p355
      %p362 = scmp.eq.s32.totalorder %s26, 1
      %p363 = por %p361, %p362
      %p364 = scmp.ne.s32.totalorder %s356, %s359
      %p365 = scmp.eq.s32.totalorder %s26, 0
      %p366 = por %p364, %p365
      %p367 = scmp.ne.s32.totalorder %s356, %s359
      %p368 = scmp.eq.s32.totalorder %s31, 1
      %p369 = por %p367, %p368
      %p370 = scmp.ne.s32.totalorder %s359, %s360
      %p371 = scmp.eq.s32.totalorder %s31, 0
      %p372 = por %p370, %p371
      %p373 = scmp.ne.s32.totalorder %s359, %s360
      %p374 = scmp.eq.s32.totalorder %s32, 1
      %p375 = por %p373, %p374
      %p377 = scmp.ne.s32.totalorder %s360, %s376
      %p378 = scmp.eq.s32.totalorder %s32, 0
      %p379 = por %p377, %p378
      %p380 = scmp.le.s32.totalorder 1, %s26
      %p381 = scmp.lt.s32.totalorder %s26, 3
      %p382 = pnand %p380, %p381
      %p383 = pneg %p382
      // Predicated region
      $region9: #{tpu_custom_call.1} parent=5 // pred_check
        _
      $region10: #{tpu_custom_call.1} parent=5 // pred_check_branch
        %385 = sbr.rel (%p382) target = $region12
      $region11: #{tpu_custom_call.1} parent=5 // pred_region
        %s386 = ssub.s32 %s26, 1
        // Predicated region
        $region13: #{tpu_custom_call.1} parent=11 // pred_check
          %p387 = pneg %p73
        $region14: #{tpu_custom_call.1} parent=11 // pred_check_branch
          %389 = sbr.rel (%p387) target = $region16
        $region15: #{tpu_custom_call.1} parent=11 // pred_region
          _
        $region16: #{tpu_custom_call.1} parent=11 // pred_fallthru
          _
        // Predicated region
        $region17: #{tpu_custom_call.1} parent=11 // pred_check
          %p390 = pneg %p94
        $region18: #{tpu_custom_call.1} parent=11 // pred_check_branch
          %392 = sbr.rel (%p390) target = $region20
        $region19: #{tpu_custom_call.1} parent=11 // pred_region
          _
        $region20: #{tpu_custom_call.1} parent=11 // pred_fallthru
          _
        // Predicated region
        $region21: #{tpu_custom_call.1} parent=11 // pred_check
          %p393 = pneg %p115
        $region22: #{tpu_custom_call.1} parent=11 // pred_check_branch
          %395 = sbr.rel (%p393) target = $region24
        $region23: #{tpu_custom_call.1} parent=11 // pred_region
          _
        $region24: #{tpu_custom_call.1} parent=11 // pred_fallthru
          _
        // Predicated region
        $region25: #{tpu_custom_call.1} parent=11 // pred_check
          %p396 = pneg %p136
        $region26: #{tpu_custom_call.1} parent=11 // pred_check_branch
          %398 = sbr.rel (%p396) target = $region28
        $region27: #{tpu_custom_call.1} parent=11 // pred_region
          _
        $region28: #{tpu_custom_call.1} parent=11 // pred_fallthru
          _
        // Predicated region
        $region29: #{tpu_custom_call.1} parent=11 // pred_check
          %p399 = pneg %p157
        $region30: #{tpu_custom_call.1} parent=11 // pred_check_branch
          %401 = sbr.rel (%p399) target = $region32
        $region31: #{tpu_custom_call.1} parent=11 // pred_region
          _
        $region32: #{tpu_custom_call.1} parent=11 // pred_fallthru
          _
        // Predicated region
        $region33: #{tpu_custom_call.1} parent=11 // pred_check
          %p402 = pneg %p178
        $region34: #{tpu_custom_call.1} parent=11 // pred_check_branch
          %404 = sbr.rel (%p402) target = $region36
        $region35: #{tpu_custom_call.1} parent=11 // pred_region
          _
        $region36: #{tpu_custom_call.1} parent=11 // pred_fallthru
          _
        // Predicated region
        $region37: #{tpu_custom_call.1} parent=11 // pred_check
          %p405 = pneg %p199
        $region38: #{tpu_custom_call.1} parent=11 // pred_check_branch
          %407 = sbr.rel (%p405) target = $region40
        $region39: #{tpu_custom_call.1} parent=11 // pred_region
          _
        $region40: #{tpu_custom_call.1} parent=11 // pred_fallthru
          _
        // Predicated region
        $region41: #{tpu_custom_call.1} parent=11 // pred_check
          %p408 = pneg %p220
        $region42: #{tpu_custom_call.1} parent=11 // pred_check_branch
          %410 = sbr.rel (%p408) target = $region44
        $region43: #{tpu_custom_call.1} parent=11 // pred_region
          _
        $region44: #{tpu_custom_call.1} parent=11 // pred_fallthru
          _
        // Predicated region
        $region45: #{tpu_custom_call.1} parent=11 // pred_check
          %p411 = pneg %p241
        $region46: #{tpu_custom_call.1} parent=11 // pred_check_branch
          %413 = sbr.rel (%p411) target = $region48
        $region47: #{tpu_custom_call.1} parent=11 // pred_region
          _
        $region48: #{tpu_custom_call.1} parent=11 // pred_fallthru
          _
        // Predicated region
        $region49: #{tpu_custom_call.1} parent=11 // pred_check
          %p414 = pneg %p262
        $region50: #{tpu_custom_call.1} parent=11 // pred_check_branch
          %416 = sbr.rel (%p414) target = $region52
        $region51: #{tpu_custom_call.1} parent=11 // pred_region
          _
        $region52: #{tpu_custom_call.1} parent=11 // pred_fallthru
          _
        // Predicated region
        $region53: #{tpu_custom_call.1} parent=11 // pred_check
          %p417 = pneg %p283
        $region54: #{tpu_custom_call.1} parent=11 // pred_check_branch
          %419 = sbr.rel (%p417) target = $region56
        $region55: #{tpu_custom_call.1} parent=11 // pred_region
          _
        $region56: #{tpu_custom_call.1} parent=11 // pred_fallthru
          _
        // Predicated region
        $region57: #{tpu_custom_call.1} parent=11 // pred_check
          %p420 = pneg %p304
        $region58: #{tpu_custom_call.1} parent=11 // pred_check_branch
          %422 = sbr.rel (%p420) target = $region60
        $region59: #{tpu_custom_call.1} parent=11 // pred_region
          _
        $region60: #{tpu_custom_call.1} parent=11 // pred_fallthru
          _
        // Predicated region
        $region61: #{tpu_custom_call.1} parent=11 // pred_check
          %p423 = pneg %p325
        $region62: #{tpu_custom_call.1} parent=11 // pred_check_branch
          %425 = sbr.rel (%p423) target = $region64
        $region63: #{tpu_custom_call.1} parent=11 // pred_region
          _
        $region64: #{tpu_custom_call.1} parent=11 // pred_fallthru
          _
        // Predicated region
        $region65: #{tpu_custom_call.1} parent=11 // pred_check
          %p426 = pneg %p346
        $region66: #{tpu_custom_call.1} parent=11 // pred_check_branch
          %428 = sbr.rel (%p426) target = $region68
        $region67: #{tpu_custom_call.1} parent=11 // pred_region
          _
        $region68: #{tpu_custom_call.1} parent=11 // pred_fallthru
          _
      $region12: #{tpu_custom_call.1} parent=5 // pred_fallthru
        _
      %p429 = scmp.lt.s32.totalorder %s26, 2
      // Predicated region
      $region69: #{tpu_custom_call.1} parent=5 // pred_check
        %p430 = pneg %p429
      $region70: #{tpu_custom_call.1} parent=5 // pred_check_branch
        %432 = sbr.rel (%p430) target = $region72
      $region71: #{tpu_custom_call.1} parent=5 // pred_region
        // Predicated region
        $region73: #{tpu_custom_call.1} parent=71 // pred_check
          %p433 = pneg %p46
        $region74: #{tpu_custom_call.1} parent=71 // pred_check_branch
          %435 = sbr.rel (%p433) target = $region76
        $region75: #{tpu_custom_call.1} parent=71 // pred_region
          %s436 = smul.u32 32, %s26
          %p437 = scmp.lt.s32.totalorder %s436, 63
          %s438 = scalar_select %p437, %s436, 63
          %s439 = smul.addr %s438, 8
          %s440 = scalar_lea.vmem %s0, %s439
          %s441 = smul.u32 32, %s26
        $region76: #{tpu_custom_call.1} parent=71 // pred_fallthru
          _
      $region72: #{tpu_custom_call.1} parent=5 // pred_fallthru
        _
      %p442 = scmp.le.s32.totalorder 1, %s26
      %p443 = scmp.lt.s32.totalorder %s26, 3
      %p444 = pnand %p442, %p443
      %p445 = pneg %p444
      // Predicated region
      $region77: #{tpu_custom_call.1} parent=5 // pred_check
        _
      $region78: #{tpu_custom_call.1} parent=5 // pred_check_branch
        %447 = sbr.rel (%p444) target = $region80
      $region79: #{tpu_custom_call.1} parent=5 // pred_region
        %s448 = ssub.s32 %s26, 1
        %s449 = smul.u32 32, %s31
        %p450 = scmp.lt.s32.totalorder %s449, 63
        %s451 = scalar_select %p450, %s449, 63
        %s452 = smul.addr %s451, 8
        %s453 = scalar_lea.vmem %s0, %s452
        %p454 = pneg %p52
        %p455 = pneg %p49
        %p456 = pneg %p73
        %p457 = pneg %p70
        %p458 = pneg %p94
        %p459 = pneg %p91
        %p460 = pneg %p115
        %p461 = pneg %p112
        %p462 = pneg %p136
        %p463 = pneg %p133
        %p464 = pneg %p157
        %p465 = pneg %p154
        %p466 = pneg %p178
        %p467 = pneg %p175
        %p468 = pneg %p199
        %p469 = pneg %p196
        %p470 = pneg %p220
        %p471 = pneg %p217
        %p472 = pneg %p241
        %p473 = pneg %p238
        %p474 = pneg %p262
        %p475 = pneg %p259
        %p476 = pneg %p283
        %p477 = pneg %p280
        %p478 = pneg %p304
        %p479 = pneg %p301
        %p480 = pneg %p325
        %p481 = pneg %p322
        %p482 = pneg %p346
        %p483 = pneg %p343
        %p484 = pneg %p372
        %p485 = pneg %p369
        %s486 = sand.u32 %s359, 1
        %s487 = scalar_lea.sflag [#allocation4], %s486
        %s488 = sand.u32 %s359, 1
        %s489 = smul.addr %s488, 2
        %s490 = scalar_lea.vmem [#allocation3], %s489
        %s491 = smul.u32 32, %s31
        %p492 = scmp.lt.s32.totalorder %s491, 63
        %s493 = scalar_select %p492, %s491, 63
        %s494 = smul.addr %s493, 8
        %s495 = scalar_lea.vmem %s0, %s494
        %s496 = smul.u32 32, %s31
        %s497 = smul.u32 2, %s31
        %v499 = vld [vmem:[%s495] sm:$0xff]
        %v500 = vld [vmem:[%s495 + $0x8] sm:$0xff]
        %v501 = vld [vmem:[%s495 + $0x10] sm:$0xff]
        %v502 = vld [vmem:[%s495 + $0x18] sm:$0xff]
        %v503 = vld [vmem:[%s495 + $0x20] sm:$0xff]
        %v504 = vld [vmem:[%s495 + $0x28] sm:$0xff]
        %v505 = vld [vmem:[%s495 + $0x30] sm:$0xff]
        %v506 = vld [vmem:[%s495 + $0x38] sm:$0xff]
        %v507 = vld [vmem:[%s495 + $0x40] sm:$0xff]
        %v508 = vld [vmem:[%s495 + $0x48] sm:$0xff]
        %v509 = vld [vmem:[%s495 + $0x50] sm:$0xff]
        %v510 = vld [vmem:[%s495 + $0x58] sm:$0xff]
        %v511 = vld [vmem:[%s495 + $0x60] sm:$0xff]
        %v512 = vld [vmem:[%s495 + $0x68] sm:$0xff]
        %v513 = vld [vmem:[%s495 + $0x70] sm:$0xff]
        %v514 = vld [vmem:[%s495 + $0x78] sm:$0xff]
        %v515 = vld [vmem:[%s495 + $0x80] sm:$0xff]
        %v516 = vld [vmem:[%s495 + $0x88] sm:$0xff]
        %v517 = vld [vmem:[%s495 + $0x90] sm:$0xff]
        %v518 = vld [vmem:[%s495 + $0x98] sm:$0xff]
        %v519 = vld [vmem:[%s495 + $0xa0] sm:$0xff]
        %v520 = vld [vmem:[%s495 + $0xa8] sm:$0xff]
        %v521 = vld [vmem:[%s495 + $0xb0] sm:$0xff]
        %v522 = vld [vmem:[%s495 + $0xb8] sm:$0xff]
        %v523 = vld [vmem:[%s495 + $0xc0] sm:$0xff]
        %v524 = vld [vmem:[%s495 + $0xc8] sm:$0xff]
        %v525 = vld [vmem:[%s495 + $0xd0] sm:$0xff]
        %v526 = vld [vmem:[%s495 + $0xd8] sm:$0xff]
        %v527 = vld [vmem:[%s495 + $0xe0] sm:$0xff]
        %v528 = vld [vmem:[%s495 + $0xe8] sm:$0xff]
        %v529 = vld [vmem:[%s495 + $0xf0] sm:$0xff]
        %v530 = vld [vmem:[%s495 + $0xf8] sm:$0xff]
        %v531 = vpack.c.bf16 %v500, %v499
        %v532 = vpack.c.bf16 %v502, %v501
        %v533 = vpack.c.bf16 %v504, %v503
        %v534 = vpack.c.bf16 %v506, %v505
        %v535 = vpack.c.bf16 %v508, %v507
        %v536 = vpack.c.bf16 %v510, %v509
        %v537 = vpack.c.bf16 %v512, %v511
        %v538 = vpack.c.bf16 %v514, %v513
        %v539 = vpack.c.bf16 %v516, %v515
        %v540 = vpack.c.bf16 %v518, %v517
        %v541 = vpack.c.bf16 %v520, %v519
        %v542 = vpack.c.bf16 %v522, %v521
        %v543 = vpack.c.bf16 %v524, %v523
        %v544 = vpack.c.bf16 %v526, %v525
        %v545 = vpack.c.bf16 %v528, %v527
        %v546 = vpack.c.bf16 %v530, %v529
        %v547 = vld [vmem:[%s1] sm:$0xf]
        %v548 = vld [vmem:[%s1 + $0x4] sm:$0xf]
        %v549 = vld [vmem:[%s2] sm:$0x1]
        %v551 = vlaneseq
        %v552 = vshrl.u32 %v551, 7
        %v553 = vsub.s32 0, %v552
        %v554 = vrot.slane %v549, %v553
        %v558 = vunpack.c.l.b16 %v547
        %v559 = vunpack.c.l.b16 %v548
        %v560 = vpack.c.b16 %v559, %v558
        %vm562 = vcmask 130048
        %v564 = vsel %vm562, %v531, 0
        %v567 = vsel %vm562, %v532, 0
        %v570 = vsel %vm562, %v533, 0
        %v573 = vsel %vm562, %v534, 0
        %v576 = vsel %vm562, %v535, 0
        %v579 = vsel %vm562, %v536, 0
        %v582 = vsel %vm562, %v537, 0
        %v585 = vsel %vm562, %v538, 0
        %v588 = vsel %vm562, %v539, 0
        %v591 = vsel %vm562, %v540, 0
        %v594 = vsel %vm562, %v541, 0
        %v597 = vsel %vm562, %v542, 0
        %v600 = vsel %vm562, %v543, 0
        %v603 = vsel %vm562, %v544, 0
        %v606 = vsel %vm562, %v545, 0
        %v609 = vsel %vm562, %v546, 0
        %611 = vmatprep.subr.bf16.mxu0 0
        %612 = vmatpush1.bf16.msra.mxu0 %v560
        %613 = vmatprep.subr.bf16.mxu0 0
        %614 = vmatpush1.bf16.msra.mxu0 0
        %615 = vmatprep.subr.bf16.mxu0 0
        %616 = vmatpush1.bf16.msra.mxu0 0
        %617 = vmatprep.subr.bf16.mxu0 0
        %618 = vmatpush1.bf16.msra.mxu0 0
        %619 = vmatprep.subr.bf16.mxu0 0
        %620 = vmatpush1.bf16.msra.mxu0 0
        %621 = vmatprep.subr.bf16.mxu0 0
        %622 = vmatpush1.bf16.msra.mxu0 0
        %623 = vmatprep.subr.bf16.mxu0 0
        %624 = vmatpush1.bf16.msra.mxu0 0
        %625 = vmatprep.subr.bf16.mxu0 0
        %626 = vmatpush1.bf16.msra.mxu0 0
        %627 = vmatprep.subr.bf16.mxu0 0
        %628 = vmatpush1.bf16.msra.mxu0 0
        %629 = vmatprep.subr.bf16.mxu0 0
        %630 = vmatpush1.bf16.msra.mxu0 0
        %631 = vmatprep.subr.bf16.mxu0 0
        %632 = vmatpush1.bf16.msra.mxu0 0
        %633 = vmatprep.subr.bf16.mxu0 0
        %634 = vmatpush1.bf16.msra.mxu0 0
        %635 = vmatprep.subr.bf16.mxu0 0
        %636 = vmatpush1.bf16.msra.mxu0 0
        %637 = vmatprep.subr.bf16.mxu0 0
        %638 = vmatpush1.bf16.msra.mxu0 0
        %639 = vmatprep.subr.bf16.mxu0 0
        %640 = vmatpush1.bf16.msra.mxu0 0
        %641 = vmatprep.subr.bf16.mxu0 0
        %642 = vmatpush1.bf16.msra.mxu0 0
        %643 = vmatprep.mubr.bf16.mxu0 0
        %644 = vmatmul.mubr.bf16.gmra.mrb[0].mxu0 %v564
        %v645 = vpop.f32.mrb[0].mxu0
        %v646 = vadd.f32 %v554, %v645
        %v647 = vpop.f32.mrb[0].mxu0
        %v648 = vpop.f32.mrb[0].mxu0
        %v649 = vadd.f32 %v554, %v648
        %v650 = vpop.f32.mrb[0].mxu0
        %651 = vmatprep.mubr.bf16.mxu0 0
        %652 = vmatmul.mubr.bf16.gmra.mrb[0].mxu0 %v567
        %v653 = vpop.f32.mrb[0].mxu0
        %v654 = vadd.f32 %v554, %v653
        %v655 = vpop.f32.mrb[0].mxu0
        %v656 = vpop.f32.mrb[0].mxu0
        %v657 = vadd.f32 %v554, %v656
        %v658 = vpop.f32.mrb[0].mxu0
        %659 = vmatprep.mubr.bf16.mxu0 0
        %660 = vmatmul.mubr.bf16.gmra.mrb[0].mxu0 %v570
        %v661 = vpop.f32.mrb[0].mxu0
        %v662 = vadd.f32 %v554, %v661
        %v663 = vpop.f32.mrb[0].mxu0
        %v664 = vpop.f32.mrb[0].mxu0
        %v665 = vadd.f32 %v554, %v664
        %v666 = vpop.f32.mrb[0].mxu0
        %667 = vmatprep.mubr.bf16.mxu0 0
        %668 = vmatmul.mubr.bf16.gmra.mrb[0].mxu0 %v573
        %v669 = vpop.f32.mrb[0].mxu0
        %v670 = vadd.f32 %v554, %v669
        %v671 = vpop.f32.mrb[0].mxu0
        %v672 = vpop.f32.mrb[0].mxu0
        %v673 = vadd.f32 %v554, %v672
        %v674 = vpop.f32.mrb[0].mxu0
        %675 = vmatprep.mubr.bf16.mxu0 0
        %676 = vmatmul.mubr.bf16.gmra.mrb[0].mxu0 %v576
        %v677 = vpop.f32.mrb[0].mxu0
        %v678 = vadd.f32 %v554, %v677
        %v679 = vpop.f32.mrb[0].mxu0
        %v680 = vpop.f32.mrb[0].mxu0
        %v681 = vadd.f32 %v554, %v680
        %v682 = vpop.f32.mrb[0].mxu0
        %683 = vmatprep.mubr.bf16.mxu0 0
        %684 = vmatmul.mubr.bf16.gmra.mrb[0].mxu0 %v579
        %v685 = vpop.f32.mrb[0].mxu0
        %v686 = vadd.f32 %v554, %v685
        %v687 = vpop.f32.mrb[0].mxu0
        %v688 = vpop.f32.mrb[0].mxu0
        %v689 = vadd.f32 %v554, %v688
        %v690 = vpop.f32.mrb[0].mxu0
        %691 = vmatprep.mubr.bf16.mxu0 0
        %692 = vmatmul.mubr.bf16.gmra.mrb[0].mxu0 %v582
        %v693 = vpop.f32.mrb[0].mxu0
        %v694 = vadd.f32 %v554, %v693
        %v695 = vpop.f32.mrb[0].mxu0
        %v696 = vpop.f32.mrb[0].mxu0
        %v697 = vadd.f32 %v554, %v696
        %v698 = vpop.f32.mrb[0].mxu0
        %699 = vmatprep.mubr.bf16.mxu0 0
        %700 = vmatmul.mubr.bf16.gmra.mrb[0].mxu0 %v585
        %v701 = vpop.f32.mrb[0].mxu0
        %v702 = vadd.f32 %v554, %v701
        %v703 = vpop.f32.mrb[0].mxu0
        %v704 = vpop.f32.mrb[0].mxu0
        %v705 = vadd.f32 %v554, %v704
        %v706 = vpop.f32.mrb[0].mxu0
        %707 = vmatprep.mubr.bf16.mxu0 0
        %708 = vmatmul.mubr.bf16.gmra.mrb[0].mxu0 %v588
        %v709 = vpop.f32.mrb[0].mxu0
        %v710 = vadd.f32 %v554, %v709
        %v711 = vpop.f32.mrb[0].mxu0
        %v712 = vpop.f32.mrb[0].mxu0
        %v713 = vadd.f32 %v554, %v712
        %v714 = vpop.f32.mrb[0].mxu0
        %715 = vmatprep.mubr.bf16.mxu0 0
        %716 = vmatmul.mubr.bf16.gmra.mrb[0].mxu0 %v591
        %v717 = vpop.f32.mrb[0].mxu0
        %v718 = vadd.f32 %v554, %v717
        %v719 = vpop.f32.mrb[0].mxu0
        %v720 = vpop.f32.mrb[0].mxu0
        %v721 = vadd.f32 %v554, %v720
        %v722 = vpop.f32.mrb[0].mxu0
        %723 = vmatprep.mubr.bf16.mxu0 0
        %724 = vmatmul.mubr.bf16.gmra.mrb[0].mxu0 %v594
        %v725 = vpop.f32.mrb[0].mxu0
        %v726 = vadd.f32 %v554, %v725
        %v727 = vpop.f32.mrb[0].mxu0
        %v728 = vpop.f32.mrb[0].mxu0
        %v729 = vadd.f32 %v554, %v728
        %v730 = vpop.f32.mrb[0].mxu0
        %731 = vmatprep.mubr.bf16.mxu0 0
        %732 = vmatmul.mubr.bf16.gmra.mrb[0].mxu0 %v597
        %v733 = vpop.f32.mrb[0].mxu0
        %v734 = vadd.f32 %v554, %v733
        %v735 = vpop.f32.mrb[0].mxu0
        %v736 = vpop.f32.mrb[0].mxu0
        %v737 = vadd.f32 %v554, %v736
        %v738 = vpop.f32.mrb[0].mxu0
        %739 = vmatprep.mubr.bf16.mxu0 0
        %740 = vmatmul.mubr.bf16.gmra.mrb[0].mxu0 %v600
        %v741 = vpop.f32.mrb[0].mxu0
        %v742 = vadd.f32 %v554, %v741
        %v743 = vpop.f32.mrb[0].mxu0
        %v744 = vpop.f32.mrb[0].mxu0
        %v745 = vadd.f32 %v554, %v744
        %v746 = vpop.f32.mrb[0].mxu0
        %747 = vmatprep.mubr.bf16.mxu0 0
        %748 = vmatmul.mubr.bf16.gmra.mrb[0].mxu0 %v603
        %v749 = vpop.f32.mrb[0].mxu0
        %v750 = vadd.f32 %v554, %v749
        %v751 = vpop.f32.mrb[0].mxu0
        %v752 = vpop.f32.mrb[0].mxu0
        %v753 = vadd.f32 %v554, %v752
        %v754 = vpop.f32.mrb[0].mxu0
        %755 = vmatprep.mubr.bf16.mxu0 0
        %756 = vmatmul.mubr.bf16.gmra.mrb[0].mxu0 %v606
        %v757 = vpop.f32.mrb[0].mxu0
        %v758 = vadd.f32 %v554, %v757
        %v759 = vpop.f32.mrb[0].mxu0
        %v760 = vpop.f32.mrb[0].mxu0
        %v761 = vadd.f32 %v554, %v760
        %v762 = vpop.f32.mrb[0].mxu0
        %763 = vmatprep.mubr.bf16.mxu0 0
        %764 = vmatmul.mubr.bf16.gmra.mrb[0].mxu0 %v609
        %v765 = vpop.f32.mrb[0].mxu0
        %v766 = vadd.f32 %v554, %v765
        %v767 = vpop.f32.mrb[0].mxu0
        %v768 = vpop.f32.mrb[0].mxu0
        %v769 = vadd.f32 %v554, %v768
        %v770 = vpop.f32.mrb[0].mxu0
        %771 = vdwg.mxu0
        %v772 = vld [vmem:[%s3] sm:$0x1]
        %v773 = vld [vmem:[%s4] sm:$0x1]
        %774 = vadd.xlane.f32.xlu0 %v646
        %v775 = vpop.xlane.xlu0 %774
        %776 = vadd.xlane.f32.xlu0 %v649
        %v777 = vpop.xlane.xlu0 %776
        %778 = vadd.xlane.f32.xlu0 %v654
        %v779 = vpop.xlane.xlu0 %778
        %780 = vadd.xlane.f32.xlu0 %v657
        %v781 = vpop.xlane.xlu0 %780
        %782 = vadd.xlane.f32.xlu0 %v662
        %v783 = vpop.xlane.xlu0 %782
        %784 = vadd.xlane.f32.xlu0 %v665
        %v785 = vpop.xlane.xlu0 %784
        %786 = vadd.xlane.f32.xlu0 %v670
        %v787 = vpop.xlane.xlu0 %786
        %788 = vadd.xlane.f32.xlu0 %v673
        %v789 = vpop.xlane.xlu0 %788
        %790 = vadd.xlane.f32.xlu0 %v678
        %v791 = vpop.xlane.xlu0 %790
        %792 = vadd.xlane.f32.xlu0 %v681
        %v793 = vpop.xlane.xlu0 %792
        %794 = vadd.xlane.f32.xlu0 %v686
        %v795 = vpop.xlane.xlu0 %794
        %796 = vadd.xlane.f32.xlu0 %v689
        %v797 = vpop.xlane.xlu0 %796
        %798 = vadd.xlane.f32.xlu0 %v694
        %v799 = vpop.xlane.xlu0 %798
        %800 = vadd.xlane.f32.xlu0 %v697
        %v801 = vpop.xlane.xlu0 %800
        %802 = vadd.xlane.f32.xlu0 %v702
        %v803 = vpop.xlane.xlu0 %802
        %804 = vadd.xlane.f32.xlu0 %v705
        %v805 = vpop.xlane.xlu0 %804
        %806 = vadd.xlane.f32.xlu0 %v710
        %v807 = vpop.xlane.xlu0 %806
        %808 = vadd.xlane.f32.xlu0 %v713
        %v809 = vpop.xlane.xlu0 %808
        %810 = vadd.xlane.f32.xlu0 %v718
        %v811 = vpop.xlane.xlu0 %810
        %812 = vadd.xlane.f32.xlu0 %v721
        %v813 = vpop.xlane.xlu0 %812
        %814 = vadd.xlane.f32.xlu0 %v726
        %v815 = vpop.xlane.xlu0 %814
        %816 = vadd.xlane.f32.xlu0 %v729
        %v817 = vpop.xlane.xlu0 %816
        %818 = vadd.xlane.f32.xlu0 %v734
        %v819 = vpop.xlane.xlu0 %818
        %820 = vadd.xlane.f32.xlu0 %v737
        %v821 = vpop.xlane.xlu0 %820
        %822 = vadd.xlane.f32.xlu0 %v742
        %v823 = vpop.xlane.xlu0 %822
        %824 = vadd.xlane.f32.xlu0 %v745
        %v825 = vpop.xlane.xlu0 %824
        %826 = vadd.xlane.f32.xlu0 %v750
        %v827 = vpop.xlane.xlu0 %826
        %828 = vadd.xlane.f32.xlu0 %v753
        %v829 = vpop.xlane.xlu0 %828
        %830 = vadd.xlane.f32.xlu0 %v758
        %v831 = vpop.xlane.xlu0 %830
        %832 = vadd.xlane.f32.xlu0 %v761
        %v833 = vpop.xlane.xlu0 %832
        %834 = vadd.xlane.f32.xlu0 %v766
        %v835 = vpop.xlane.xlu0 %834
        %836 = vadd.xlane.f32.xlu0 %v769
        %v837 = vpop.xlane.xlu0 %836
        %v838 = vrcp.pop 128.0
        %v839 = vmul.f32 %v775, %v838
        %v840 = vmul.f32 %v777, %v838
        %v841 = vmul.f32 %v779, %v838
        %v842 = vmul.f32 %v781, %v838
        %v843 = vmul.f32 %v783, %v838
        %v844 = vmul.f32 %v785, %v838
        %v845 = vmul.f32 %v787, %v838
        %v846 = vmul.f32 %v789, %v838
        %v847 = vmul.f32 %v791, %v838
        %v848 = vmul.f32 %v793, %v838
        %v849 = vmul.f32 %v795, %v838
        %v850 = vmul.f32 %v797, %v838
        %v851 = vmul.f32 %v799, %v838
        %v852 = vmul.f32 %v801, %v838
        %v853 = vmul.f32 %v803, %v838
        %v854 = vmul.f32 %v805, %v838
        %v855 = vmul.f32 %v807, %v838
        %v856 = vmul.f32 %v809, %v838
        %v857 = vmul.f32 %v811, %v838
        %v858 = vmul.f32 %v813, %v838
        %v859 = vmul.f32 %v815, %v838
        %v860 = vmul.f32 %v817, %v838
        %v861 = vmul.f32 %v819, %v838
        %v862 = vmul.f32 %v821, %v838
        %v863 = vmul.f32 %v823, %v838
        %v864 = vmul.f32 %v825, %v838
        %v865 = vmul.f32 %v827, %v838
        %v866 = vmul.f32 %v829, %v838
        %v867 = vmul.f32 %v831, %v838
        %v868 = vmul.f32 %v833, %v838
        %v869 = vmul.f32 %v835, %v838
        %v870 = vmul.f32 %v837, %v838
        %v871 = vmul.f32 %v646, %v646
        %v872 = vmul.f32 %v649, %v649
        %v873 = vmul.f32 %v654, %v654
        %v874 = vmul.f32 %v657, %v657
        %v875 = vmul.f32 %v662, %v662
        %v876 = vmul.f32 %v665, %v665
        %v877 = vmul.f32 %v670, %v670
        %v878 = vmul.f32 %v673, %v673
        %v879 = vmul.f32 %v678, %v678
        %v880 = vmul.f32 %v681, %v681
        %v881 = vmul.f32 %v686, %v686
        %v882 = vmul.f32 %v689, %v689
        %v883 = vmul.f32 %v694, %v694
        %v884 = vmul.f32 %v697, %v697
        %v885 = vmul.f32 %v702, %v702
        %v886 = vmul.f32 %v705, %v705
        %v887 = vmul.f32 %v710, %v710
        %v888 = vmul.f32 %v713, %v713
        %v889 = vmul.f32 %v718, %v718
        %v890 = vmul.f32 %v721, %v721
        %v891 = vmul.f32 %v726, %v726
        %v892 = vmul.f32 %v729, %v729
        %v893 = vmul.f32 %v734, %v734
        %v894 = vmul.f32 %v737, %v737
        %v895 = vmul.f32 %v742, %v742
        %v896 = vmul.f32 %v745, %v745
        %v897 = vmul.f32 %v750, %v750
        %v898 = vmul.f32 %v753, %v753
        %v899 = vmul.f32 %v758, %v758
        %v900 = vmul.f32 %v761, %v761
        %v901 = vmul.f32 %v766, %v766
        %v902 = vmul.f32 %v769, %v769
        %903 = vadd.xlane.f32.xlu0 %v871
        %v904 = vpop.xlane.xlu0 %903
        %905 = vadd.xlane.f32.xlu0 %v872
        %v906 = vpop.xlane.xlu0 %905
        %907 = vadd.xlane.f32.xlu0 %v873
        %v908 = vpop.xlane.xlu0 %907
        %909 = vadd.xlane.f32.xlu0 %v874
        %v910 = vpop.xlane.xlu0 %909
        %911 = vadd.xlane.f32.xlu0 %v875
        %v912 = vpop.xlane.xlu0 %911
        %913 = vadd.xlane.f32.xlu0 %v876
        %v914 = vpop.xlane.xlu0 %913
        %915 = vadd.xlane.f32.xlu0 %v877
        %v916 = vpop.xlane.xlu0 %915
        %917 = vadd.xlane.f32.xlu0 %v878
        %v918 = vpop.xlane.xlu0 %917
        %919 = vadd.xlane.f32.xlu0 %v879
        %v920 = vpop.xlane.xlu0 %919
        %921 = vadd.xlane.f32.xlu0 %v880
        %v922 = vpop.xlane.xlu0 %921
        %923 = vadd.xlane.f32.xlu0 %v881
        %v924 = vpop.xlane.xlu0 %923
        %925 = vadd.xlane.f32.xlu0 %v882
        %v926 = vpop.xlane.xlu0 %925
        %927 = vadd.xlane.f32.xlu0 %v883
        %v928 = vpop.xlane.xlu0 %927
        %929 = vadd.xlane.f32.xlu0 %v884
        %v930 = vpop.xlane.xlu0 %929
        %931 = vadd.xlane.f32.xlu0 %v885
        %v932 = vpop.xlane.xlu0 %931
        %933 = vadd.xlane.f32.xlu0 %v886
        %v934 = vpop.xlane.xlu0 %933
        %935 = vadd.xlane.f32.xlu0 %v887
        %v936 = vpop.xlane.xlu0 %935
        %937 = vadd.xlane.f32.xlu0 %v888
        %v938 = vpop.xlane.xlu0 %937
        %939 = vadd.xlane.f32.xlu0 %v889
        %v940 = vpop.xlane.xlu0 %939
        %941 = vadd.xlane.f32.xlu0 %v890
        %v942 = vpop.xlane.xlu0 %941
        %943 = vadd.xlane.f32.xlu0 %v891
        %v944 = vpop.xlane.xlu0 %943
        %945 = vadd.xlane.f32.xlu0 %v892
        %v946 = vpop.xlane.xlu0 %945
        %947 = vadd.xlane.f32.xlu0 %v893
        %v948 = vpop.xlane.xlu0 %947
        %949 = vadd.xlane.f32.xlu0 %v894
        %v950 = vpop.xlane.xlu0 %949
        %951 = vadd.xlane.f32.xlu0 %v895
        %v952 = vpop.xlane.xlu0 %951
        %953 = vadd.xlane.f32.xlu0 %v896
        %v954 = vpop.xlane.xlu0 %953
        %955 = vadd.xlane.f32.xlu0 %v897
        %v956 = vpop.xlane.xlu0 %955
        %957 = vadd.xlane.f32.xlu0 %v898
        %v958 = vpop.xlane.xlu0 %957
        %959 = vadd.xlane.f32.xlu0 %v899
        %v960 = vpop.xlane.xlu0 %959
        %961 = vadd.xlane.f32.xlu0 %v900
        %v962 = vpop.xlane.xlu0 %961
        %963 = vadd.xlane.f32.xlu0 %v901
        %v964 = vpop.xlane.xlu0 %963
        %965 = vadd.xlane.f32.xlu0 %v902
        %v966 = vpop.xlane.xlu0 %965
        %v967 = vmul.f32 %v904, %v838
        %v968 = vmul.f32 %v906, %v838
        %v969 = vmul.f32 %v908, %v838
        %v970 = vmul.f32 %v910, %v838
        %v971 = vmul.f32 %v912, %v838
        %v972 = vmul.f32 %v914, %v838
        %v973 = vmul.f32 %v916, %v838
        %v974 = vmul.f32 %v918, %v838
        %v975 = vmul.f32 %v920, %v838
        %v976 = vmul.f32 %v922, %v838
        %v977 = vmul.f32 %v924, %v838
        %v978 = vmul.f32 %v926, %v838
        %v979 = vmul.f32 %v928, %v838
        %v980 = vmul.f32 %v930, %v838
        %v981 = vmul.f32 %v932, %v838
        %v982 = vmul.f32 %v934, %v838
        %v983 = vmul.f32 %v936, %v838
        %v984 = vmul.f32 %v938, %v838
        %v985 = vmul.f32 %v940, %v838
        %v986 = vmul.f32 %v942, %v838
        %v987 = vmul.f32 %v944, %v838
        %v988 = vmul.f32 %v946, %v838
        %v989 = vmul.f32 %v948, %v838
        %v990 = vmul.f32 %v950, %v838
        %v991 = vmul.f32 %v952, %v838
        %v992 = vmul.f32 %v954, %v838
        %v993 = vmul.f32 %v956, %v838
        %v994 = vmul.f32 %v958, %v838
        %v995 = vmul.f32 %v960, %v838
        %v996 = vmul.f32 %v962, %v838
        %v997 = vmul.f32 %v964, %v838
        %v998 = vmul.f32 %v966, %v838
        %v999 = vmul.f32 %v839, %v839
        %v1000 = vmul.f32 %v840, %v840
        %v1001 = vmul.f32 %v841, %v841
        %v1002 = vmul.f32 %v842, %v842
        %v1003 = vmul.f32 %v843, %v843
        %v1004 = vmul.f32 %v844, %v844
        %v1005 = vmul.f32 %v845, %v845
        %v1006 = vmul.f32 %v846, %v846
        %v1007 = vmul.f32 %v847, %v847
        %v1008 = vmul.f32 %v848, %v848
        %v1009 = vmul.f32 %v849, %v849
        %v1010 = vmul.f32 %v850, %v850
        %v1011 = vmul.f32 %v851, %v851
        %v1012 = vmul.f32 %v852, %v852
        %v1013 = vmul.f32 %v853, %v853
        %v1014 = vmul.f32 %v854, %v854
        %v1015 = vmul.f32 %v855, %v855
        %v1016 = vmul.f32 %v856, %v856
        %v1017 = vmul.f32 %v857, %v857
        %v1018 = vmul.f32 %v858, %v858
        %v1019 = vmul.f32 %v859, %v859
        %v1020 = vmul.f32 %v860, %v860
        %v1021 = vmul.f32 %v861, %v861
        %v1022 = vmul.f32 %v862, %v862
        %v1023 = vmul.f32 %v863, %v863
        %v1024 = vmul.f32 %v864, %v864
        %v1025 = vmul.f32 %v865, %v865
        %v1026 = vmul.f32 %v866, %v866
        %v1027 = vmul.f32 %v867, %v867
        %v1028 = vmul.f32 %v868, %v868
        %v1029 = vmul.f32 %v869, %v869
        %v1030 = vmul.f32 %v870, %v870
        %v1031 = vsub.f32 %v967, %v999
        %v1032 = vsub.f32 %v968, %v1000
        %v1033 = vsub.f32 %v969, %v1001
        %v1034 = vsub.f32 %v970, %v1002
        %v1035 = vsub.f32 %v971, %v1003
        %v1036 = vsub.f32 %v972, %v1004
        %v1037 = vsub.f32 %v973, %v1005
        %v1038 = vsub.f32 %v974, %v1006
        %v1039 = vsub.f32 %v975, %v1007
        %v1040 = vsub.f32 %v976, %v1008
        %v1041 = vsub.f32 %v977, %v1009
        %v1042 = vsub.f32 %v978, %v1010
        %v1043 = vsub.f32 %v979, %v1011
        %v1044 = vsub.f32 %v980, %v1012
        %v1045 = vsub.f32 %v981, %v1013
        %v1046 = vsub.f32 %v982, %v1014
        %v1047 = vsub.f32 %v983, %v1015
        %v1048 = vsub.f32 %v984, %v1016
        %v1049 = vsub.f32 %v985, %v1017
        %v1050 = vsub.f32 %v986, %v1018
        %v1051 = vsub.f32 %v987, %v1019
        %v1052 = vsub.f32 %v988, %v1020
        %v1053 = vsub.f32 %v989, %v1021
        %v1054 = vsub.f32 %v990, %v1022
        %v1055 = vsub.f32 %v991, %v1023
        %v1056 = vsub.f32 %v992, %v1024
        %v1057 = vsub.f32 %v993, %v1025
        %v1058 = vsub.f32 %v994, %v1026
        %v1059 = vsub.f32 %v995, %v1027
        %v1060 = vsub.f32 %v996, %v1028
        %v1061 = vsub.f32 %v997, %v1029
        %v1062 = vsub.f32 %v998, %v1030
        %v1063 = vmax.f32 %v1031, 0.0
        %v1064 = vmax.f32 %v1032, 0.0
        %v1065 = vmax.f32 %v1033, 0.0
        %v1066 = vmax.f32 %v1034, 0.0
        %v1067 = vmax.f32 %v1035, 0.0
        %v1068 = vmax.f32 %v1036, 0.0
        %v1069 = vmax.f32 %v1037, 0.0
        %v1070 = vmax.f32 %v1038, 0.0
        %v1071 = vmax.f32 %v1039, 0.0
        %v1072 = vmax.f32 %v1040, 0.0
        %v1073 = vmax.f32 %v1041, 0.0
        %v1074 = vmax.f32 %v1042, 0.0
        %v1075 = vmax.f32 %v1043, 0.0
        %v1076 = vmax.f32 %v1044, 0.0
        %v1077 = vmax.f32 %v1045, 0.0
        %v1078 = vmax.f32 %v1046, 0.0
        %v1079 = vmax.f32 %v1047, 0.0
        %v1080 = vmax.f32 %v1048, 0.0
        %v1081 = vmax.f32 %v1049, 0.0
        %v1082 = vmax.f32 %v1050, 0.0
        %v1083 = vmax.f32 %v1051, 0.0
        %v1084 = vmax.f32 %v1052, 0.0
        %v1085 = vmax.f32 %v1053, 0.0
        %v1086 = vmax.f32 %v1054, 0.0
        %v1087 = vmax.f32 %v1055, 0.0
        %v1088 = vmax.f32 %v1056, 0.0
        %v1089 = vmax.f32 %v1057, 0.0
        %v1090 = vmax.f32 %v1058, 0.0
        %v1091 = vmax.f32 %v1059, 0.0
        %v1092 = vmax.f32 %v1060, 0.0
        %v1093 = vmax.f32 %v1061, 0.0
        %v1094 = vmax.f32 %v1062, 0.0
        %v1095 = vadd.f32 %v1063, 1e-05
        %v1096 = vadd.f32 %v1064, 1e-05
        %v1097 = vadd.f32 %v1065, 1e-05
        %v1098 = vadd.f32 %v1066, 1e-05
        %v1099 = vadd.f32 %v1067, 1e-05
        %v1100 = vadd.f32 %v1068, 1e-05
        %v1101 = vadd.f32 %v1069, 1e-05
        %v1102 = vadd.f32 %v1070, 1e-05
        %v1103 = vadd.f32 %v1071, 1e-05
        %v1104 = vadd.f32 %v1072, 1e-05
        %v1105 = vadd.f32 %v1073, 1e-05
        %v1106 = vadd.f32 %v1074, 1e-05
        %v1107 = vadd.f32 %v1075, 1e-05
        %v1108 = vadd.f32 %v1076, 1e-05
        %v1109 = vadd.f32 %v1077, 1e-05
        %v1110 = vadd.f32 %v1078, 1e-05
        %v1111 = vadd.f32 %v1079, 1e-05
        %v1112 = vadd.f32 %v1080, 1e-05
        %v1113 = vadd.f32 %v1081, 1e-05
        %v1114 = vadd.f32 %v1082, 1e-05
        %v1115 = vadd.f32 %v1083, 1e-05
        %v1116 = vadd.f32 %v1084, 1e-05
        %v1117 = vadd.f32 %v1085, 1e-05
        %v1118 = vadd.f32 %v1086, 1e-05
        %v1119 = vadd.f32 %v1087, 1e-05
        %v1120 = vadd.f32 %v1088, 1e-05
        %v1121 = vadd.f32 %v1089, 1e-05
        %v1122 = vadd.f32 %v1090, 1e-05
        %v1123 = vadd.f32 %v1091, 1e-05
        %v1124 = vadd.f32 %v1092, 1e-05
        %v1125 = vadd.f32 %v1093, 1e-05
        %v1126 = vadd.f32 %v1094, 1e-05
        %v1127 = vrsqrt.pop %v1095
        %v1128 = vrsqrt.pop %v1096
        %v1129 = vrsqrt.pop %v1097
        %v1130 = vrsqrt.pop %v1098
        %v1131 = vrsqrt.pop %v1099
        %v1132 = vrsqrt.pop %v1100
        %v1133 = vrsqrt.pop %v1101
        %v1134 = vrsqrt.pop %v1102
        %v1135 = vrsqrt.pop %v1103
        %v1136 = vrsqrt.pop %v1104
        %v1137 = vrsqrt.pop %v1105
        %v1138 = vrsqrt.pop %v1106
        %v1139 = vrsqrt.pop %v1107
        %v1140 = vrsqrt.pop %v1108
        %v1141 = vrsqrt.pop %v1109
        %v1142 = vrsqrt.pop %v1110
        %v1143 = vrsqrt.pop %v1111
        %v1144 = vrsqrt.pop %v1112
        %v1145 = vrsqrt.pop %v1113
        %v1146 = vrsqrt.pop %v1114
        %v1147 = vrsqrt.pop %v1115
        %v1148 = vrsqrt.pop %v1116
        %v1149 = vrsqrt.pop %v1117
        %v1150 = vrsqrt.pop %v1118
        %v1151 = vrsqrt.pop %v1119
        %v1152 = vrsqrt.pop %v1120
        %v1153 = vrsqrt.pop %v1121
        %v1154 = vrsqrt.pop %v1122
        %v1155 = vrsqrt.pop %v1123
        %v1156 = vrsqrt.pop %v1124
        %v1157 = vrsqrt.pop %v1125
        %v1158 = vrsqrt.pop %v1126
        %v1159 = vsub.f32 %v646, %v839
        %v1160 = vsub.f32 %v649, %v840
        %v1161 = vsub.f32 %v654, %v841
        %v1162 = vsub.f32 %v657, %v842
        %v1163 = vsub.f32 %v662, %v843
        %v1164 = vsub.f32 %v665, %v844
        %v1165 = vsub.f32 %v670, %v845
        %v1166 = vsub.f32 %v673, %v846
        %v1167 = vsub.f32 %v678, %v847
        %v1168 = vsub.f32 %v681, %v848
        %v1169 = vsub.f32 %v686, %v849
        %v1170 = vsub.f32 %v689, %v850
        %v1171 = vsub.f32 %v694, %v851
        %v1172 = vsub.f32 %v697, %v852
        %v1173 = vsub.f32 %v702, %v853
        %v1174 = vsub.f32 %v705, %v854
        %v1175 = vsub.f32 %v710, %v855
        %v1176 = vsub.f32 %v713, %v856
        %v1177 = vsub.f32 %v718, %v857
        %v1178 = vsub.f32 %v721, %v858
        %v1179 = vsub.f32 %v726, %v859
        %v1180 = vsub.f32 %v729, %v860
        %v1181 = vsub.f32 %v734, %v861
        %v1182 = vsub.f32 %v737, %v862
        %v1183 = vsub.f32 %v742, %v863
        %v1184 = vsub.f32 %v745, %v864
        %v1185 = vsub.f32 %v750, %v865
        %v1186 = vsub.f32 %v753, %v866
        %v1187 = vsub.f32 %v758, %v867
        %v1188 = vsub.f32 %v761, %v868
        %v1189 = vsub.f32 %v766, %v869
        %v1190 = vsub.f32 %v769, %v870
        %v1191 = vmul.f32 %v1159, %v1127
        %v1192 = vmul.f32 %v1160, %v1128
        %v1193 = vmul.f32 %v1161, %v1129
        %v1194 = vmul.f32 %v1162, %v1130
        %v1195 = vmul.f32 %v1163, %v1131
        %v1196 = vmul.f32 %v1164, %v1132
        %v1197 = vmul.f32 %v1165, %v1133
        %v1198 = vmul.f32 %v1166, %v1134
        %v1199 = vmul.f32 %v1167, %v1135
        %v1200 = vmul.f32 %v1168, %v1136
        %v1201 = vmul.f32 %v1169, %v1137
        %v1202 = vmul.f32 %v1170, %v1138
        %v1203 = vmul.f32 %v1171, %v1139
        %v1204 = vmul.f32 %v1172, %v1140
        %v1205 = vmul.f32 %v1173, %v1141
        %v1206 = vmul.f32 %v1174, %v1142
        %v1207 = vmul.f32 %v1175, %v1143
        %v1208 = vmul.f32 %v1176, %v1144
        %v1209 = vmul.f32 %v1177, %v1145
        %v1210 = vmul.f32 %v1178, %v1146
        %v1211 = vmul.f32 %v1179, %v1147
        %v1212 = vmul.f32 %v1180, %v1148
        %v1213 = vmul.f32 %v1181, %v1149
        %v1214 = vmul.f32 %v1182, %v1150
        %v1215 = vmul.f32 %v1183, %v1151
        %v1216 = vmul.f32 %v1184, %v1152
        %v1217 = vmul.f32 %v1185, %v1153
        %v1218 = vmul.f32 %v1186, %v1154
        %v1219 = vmul.f32 %v1187, %v1155
        %v1220 = vmul.f32 %v1188, %v1156
        %v1221 = vmul.f32 %v1189, %v1157
        %v1222 = vmul.f32 %v1190, %v1158
        %v1224 = vlaneseq
        %v1225 = vshrl.u32 %v1224, 7
        %v1226 = vsub.s32 0, %v1225
        %v1227 = vrot.slane %v772, %v1226
        %v1229 = vmul.f32 %v1191, %v1227
        %v1230 = vmul.f32 %v1192, %v1227
        %v1231 = vmul.f32 %v1193, %v1227
        %v1232 = vmul.f32 %v1194, %v1227
        %v1233 = vmul.f32 %v1195, %v1227
        %v1234 = vmul.f32 %v1196, %v1227
        %v1235 = vmul.f32 %v1197, %v1227
        %v1236 = vmul.f32 %v1198, %v1227
        %v1237 = vmul.f32 %v1199, %v1227
        %v1238 = vmul.f32 %v1200, %v1227
        %v1239 = vmul.f32 %v1201, %v1227
        %v1240 = vmul.f32 %v1202, %v1227
        %v1241 = vmul.f32 %v1203, %v1227
        %v1242 = vmul.f32 %v1204, %v1227
        %v1243 = vmul.f32 %v1205, %v1227
        %v1244 = vmul.f32 %v1206, %v1227
        %v1245 = vmul.f32 %v1207, %v1227
        %v1246 = vmul.f32 %v1208, %v1227
        %v1247 = vmul.f32 %v1209, %v1227
        %v1248 = vmul.f32 %v1210, %v1227
        %v1249 = vmul.f32 %v1211, %v1227
        %v1250 = vmul.f32 %v1212, %v1227
        %v1251 = vmul.f32 %v1213, %v1227
        %v1252 = vmul.f32 %v1214, %v1227
        %v1253 = vmul.f32 %v1215, %v1227
        %v1254 = vmul.f32 %v1216, %v1227
        %v1255 = vmul.f32 %v1217, %v1227
        %v1256 = vmul.f32 %v1218, %v1227
        %v1257 = vmul.f32 %v1219, %v1227
        %v1258 = vmul.f32 %v1220, %v1227
        %v1259 = vmul.f32 %v1221, %v1227
        %v1260 = vmul.f32 %v1222, %v1227
        %v1262 = vlaneseq
        %v1263 = vshrl.u32 %v1262, 7
        %v1264 = vsub.s32 0, %v1263
        %v1265 = vrot.slane %v773, %v1264
        %v1267 = vadd.f32 %v1229, %v1265
        %v1268 = vadd.f32 %v1230, %v1265
        %v1269 = vadd.f32 %v1231, %v1265
        %v1270 = vadd.f32 %v1232, %v1265
        %v1271 = vadd.f32 %v1233, %v1265
        %v1272 = vadd.f32 %v1234, %v1265
        %v1273 = vadd.f32 %v1235, %v1265
        %v1274 = vadd.f32 %v1236, %v1265
        %v1275 = vadd.f32 %v1237, %v1265
        %v1276 = vadd.f32 %v1238, %v1265
        %v1277 = vadd.f32 %v1239, %v1265
        %v1278 = vadd.f32 %v1240, %v1265
        %v1279 = vadd.f32 %v1241, %v1265
        %v1280 = vadd.f32 %v1242, %v1265
        %v1281 = vadd.f32 %v1243, %v1265
        %v1282 = vadd.f32 %v1244, %v1265
        %v1283 = vadd.f32 %v1245, %v1265
        %v1284 = vadd.f32 %v1246, %v1265
        %v1285 = vadd.f32 %v1247, %v1265
        %v1286 = vadd.f32 %v1248, %v1265
        %v1287 = vadd.f32 %v1249, %v1265
        %v1288 = vadd.f32 %v1250, %v1265
        %v1289 = vadd.f32 %v1251, %v1265
        %v1290 = vadd.f32 %v1252, %v1265
        %v1291 = vadd.f32 %v1253, %v1265
        %v1292 = vadd.f32 %v1254, %v1265
        %v1293 = vadd.f32 %v1255, %v1265
        %v1294 = vadd.f32 %v1256, %v1265
        %v1295 = vadd.f32 %v1257, %v1265
        %v1296 = vadd.f32 %v1258, %v1265
        %v1297 = vadd.f32 %v1259, %v1265
        %v1298 = vadd.f32 %v1260, %v1265
        %v1299 = vmax.f32 %v1267, 0.0
        %v1300 = vmax.f32 %v1268, 0.0
        %v1301 = vmax.f32 %v1269, 0.0
        %v1302 = vmax.f32 %v1270, 0.0
        %v1303 = vmax.f32 %v1271, 0.0
        %v1304 = vmax.f32 %v1272, 0.0
        %v1305 = vmax.f32 %v1273, 0.0
        %v1306 = vmax.f32 %v1274, 0.0
        %v1307 = vmax.f32 %v1275, 0.0
        %v1308 = vmax.f32 %v1276, 0.0
        %v1309 = vmax.f32 %v1277, 0.0
        %v1310 = vmax.f32 %v1278, 0.0
        %v1311 = vmax.f32 %v1279, 0.0
        %v1312 = vmax.f32 %v1280, 0.0
        %v1313 = vmax.f32 %v1281, 0.0
        %v1314 = vmax.f32 %v1282, 0.0
        %v1315 = vmax.f32 %v1283, 0.0
        %v1316 = vmax.f32 %v1284, 0.0
        %v1317 = vmax.f32 %v1285, 0.0
        %v1318 = vmax.f32 %v1286, 0.0
        %v1319 = vmax.f32 %v1287, 0.0
        %v1320 = vmax.f32 %v1288, 0.0
        %v1321 = vmax.f32 %v1289, 0.0
        %v1322 = vmax.f32 %v1290, 0.0
        %v1323 = vmax.f32 %v1291, 0.0
        %v1324 = vmax.f32 %v1292, 0.0
        %v1325 = vmax.f32 %v1293, 0.0
        %v1326 = vmax.f32 %v1294, 0.0
        %v1327 = vmax.f32 %v1295, 0.0
        %v1328 = vmax.f32 %v1296, 0.0
        %v1329 = vmax.f32 %v1297, 0.0
        %v1330 = vmax.f32 %v1298, 0.0
        %v1331 = vpack.c.bf16 %v1300, %v1299
        %v1332 = vpack.c.bf16 %v1302, %v1301
        %v1333 = vpack.c.bf16 %v1304, %v1303
        %v1334 = vpack.c.bf16 %v1306, %v1305
        %v1335 = vpack.c.bf16 %v1308, %v1307
        %v1336 = vpack.c.bf16 %v1310, %v1309
        %v1337 = vpack.c.bf16 %v1312, %v1311
        %v1338 = vpack.c.bf16 %v1314, %v1313
        %v1339 = vpack.c.bf16 %v1316, %v1315
        %v1340 = vpack.c.bf16 %v1318, %v1317
        %v1341 = vpack.c.bf16 %v1320, %v1319
        %v1342 = vpack.c.bf16 %v1322, %v1321
        %v1343 = vpack.c.bf16 %v1324, %v1323
        %v1344 = vpack.c.bf16 %v1326, %v1325
        %v1345 = vpack.c.bf16 %v1328, %v1327
        %v1346 = vpack.c.bf16 %v1330, %v1329
        %v1347 = vld [vmem:[%s5] sm:$0xf]
        %v1348 = vld [vmem:[%s5 + $0x4] sm:$0xf]
        %v1349 = vld [vmem:[%s5 + $0x8] sm:$0xf]
        %v1350 = vld [vmem:[%s5 + $0xc] sm:$0xf]
        %v1351 = vld [vmem:[%s5 + $0x10] sm:$0xf]
        %v1352 = vld [vmem:[%s5 + $0x14] sm:$0xf]
        %v1353 = vld [vmem:[%s5 + $0x18] sm:$0xf]
        %v1354 = vld [vmem:[%s5 + $0x1c] sm:$0xf]
        %v1355 = vld [vmem:[%s5 + $0x20] sm:$0xf]
        %v1356 = vld [vmem:[%s5 + $0x24] sm:$0xf]
        %v1357 = vld [vmem:[%s5 + $0x28] sm:$0xf]
        %v1358 = vld [vmem:[%s5 + $0x2c] sm:$0xf]
        %v1359 = vld [vmem:[%s5 + $0x30] sm:$0xf]
        %v1360 = vld [vmem:[%s5 + $0x34] sm:$0xf]
        %v1361 = vld [vmem:[%s5 + $0x38] sm:$0xf]
        %v1362 = vld [vmem:[%s5 + $0x3c] sm:$0xf]
        %v1363 = vld [vmem:[%s6] sm:$0x1]
        %v1365 = vlaneseq
        %v1366 = vshrl.u32 %v1365, 7
        %v1367 = vsub.s32 0, %v1366
        %v1368 = vrot.slane %v1363, %v1367
        %v1386 = vunpack.c.l.b16 %v1347
        %v1387 = vunpack.c.l.b16 %v1348
        %v1388 = vunpack.c.l.b16 %v1349
        %v1389 = vunpack.c.l.b16 %v1350
        %v1390 = vunpack.c.l.b16 %v1351
        %v1391 = vunpack.c.l.b16 %v1352
        %v1392 = vunpack.c.l.b16 %v1353
        %v1393 = vunpack.c.l.b16 %v1354
        %v1394 = vunpack.c.l.b16 %v1355
        %v1395 = vunpack.c.l.b16 %v1356
        %v1396 = vunpack.c.l.b16 %v1357
        %v1397 = vunpack.c.l.b16 %v1358
        %v1398 = vunpack.c.l.b16 %v1359
        %v1399 = vunpack.c.l.b16 %v1360
        %v1400 = vunpack.c.l.b16 %v1361
        %v1401 = vunpack.c.l.b16 %v1362
        %v1402 = vpack.c.b16 %v1387, %v1386
        %v1403 = vpack.c.b16 %v1389, %v1388
        %v1404 = vpack.c.b16 %v1391, %v1390
        %v1405 = vpack.c.b16 %v1393, %v1392
        %v1406 = vpack.c.b16 %v1395, %v1394
        %v1407 = vpack.c.b16 %v1397, %v1396
        %v1408 = vpack.c.b16 %v1399, %v1398
        %v1409 = vpack.c.b16 %v1401, %v1400
        %1418 = vmatprep.subr.bf16.mxu0 0
        %1419 = vmatpush1.bf16.msra.mxu0 %v1402
        %1420 = vmatprep.subr.bf16.mxu0 0
        %1421 = vmatpush1.bf16.msra.mxu0 %v1403
        %1422 = vmatprep.subr.bf16.mxu0 0
        %1423 = vmatpush1.bf16.msra.mxu0 %v1404
        %1424 = vmatprep.subr.bf16.mxu0 0
        %1425 = vmatpush1.bf16.msra.mxu0 %v1405
        %1426 = vmatprep.subr.bf16.mxu0 0
        %1427 = vmatpush1.bf16.msra.mxu0 %v1406
        %1428 = vmatprep.subr.bf16.mxu0 0
        %1429 = vmatpush1.bf16.msra.mxu0 %v1407
        %1430 = vmatprep.subr.bf16.mxu0 0
        %1431 = vmatpush1.bf16.msra.mxu0 %v1408
        %1432 = vmatprep.subr.bf16.mxu0 0
        %1433 = vmatpush1.bf16.msra.mxu0 %v1409
        %1434 = vmatprep.subr.bf16.mxu0 0
        %1435 = vmatpush1.bf16.msra.mxu0 0
        %1436 = vmatprep.subr.bf16.mxu0 0
        %1437 = vmatpush1.bf16.msra.mxu0 0
        %1438 = vmatprep.subr.bf16.mxu0 0
        %1439 = vmatpush1.bf16.msra.mxu0 0
        %1440 = vmatprep.subr.bf16.mxu0 0
        %1441 = vmatpush1.bf16.msra.mxu0 0
        %1442 = vmatprep.subr.bf16.mxu0 0
        %1443 = vmatpush1.bf16.msra.mxu0 0
        %1444 = vmatprep.subr.bf16.mxu0 0
        %1445 = vmatpush1.bf16.msra.mxu0 0
        %1446 = vmatprep.subr.bf16.mxu0 0
        %1447 = vmatpush1.bf16.msra.mxu0 0
        %1448 = vmatprep.subr.bf16.mxu0 0
        %1449 = vmatpush1.bf16.msra.mxu0 0
        %1450 = vmatprep.mubr.bf16.mxu0 0
        %1451 = vmatmul.mubr.bf16.gmra.mrb[0].mxu0 %v1331
        %v1452 = vpop.f32.mrb[0].mxu0
        %v1453 = vadd.f32 %v1368, %v1452
        %v1454 = vpop.f32.mrb[0].mxu0
        %v1455 = vpop.f32.mrb[0].mxu0
        %v1456 = vadd.f32 %v1368, %v1455
        %v1457 = vpop.f32.mrb[0].mxu0
        %1458 = vmatprep.mubr.bf16.mxu0 0
        %1459 = vmatmul.mubr.bf16.gmra.mrb[0].mxu0 %v1332
        %v1460 = vpop.f32.mrb[0].mxu0
        %v1461 = vadd.f32 %v1368, %v1460
        %v1462 = vpop.f32.mrb[0].mxu0
        %v1463 = vpop.f32.mrb[0].mxu0
        %v1464 = vadd.f32 %v1368, %v1463
        %v1465 = vpop.f32.mrb[0].mxu0
        %1466 = vmatprep.mubr.bf16.mxu0 0
        %1467 = vmatmul.mubr.bf16.gmra.mrb[0].mxu0 %v1333
        %v1468 = vpop.f32.mrb[0].mxu0
        %v1469 = vadd.f32 %v1368, %v1468
        %v1470 = vpop.f32.mrb[0].mxu0
        %v1471 = vpop.f32.mrb[0].mxu0
        %v1472 = vadd.f32 %v1368, %v1471
        %v1473 = vpop.f32.mrb[0].mxu0
        %1474 = vmatprep.mubr.bf16.mxu0 0
        %1475 = vmatmul.mubr.bf16.gmra.mrb[0].mxu0 %v1334
        %v1476 = vpop.f32.mrb[0].mxu0
        %v1477 = vadd.f32 %v1368, %v1476
        %v1478 = vpop.f32.mrb[0].mxu0
        %v1479 = vpop.f32.mrb[0].mxu0
        %v1480 = vadd.f32 %v1368, %v1479
        %v1481 = vpop.f32.mrb[0].mxu0
        %1482 = vmatprep.mubr.bf16.mxu0 0
        %1483 = vmatmul.mubr.bf16.gmra.mrb[0].mxu0 %v1335
        %v1484 = vpop.f32.mrb[0].mxu0
        %v1485 = vadd.f32 %v1368, %v1484
        %v1486 = vpop.f32.mrb[0].mxu0
        %v1487 = vpop.f32.mrb[0].mxu0
        %v1488 = vadd.f32 %v1368, %v1487
        %v1489 = vpop.f32.mrb[0].mxu0
        %1490 = vmatprep.mubr.bf16.mxu0 0
        %1491 = vmatmul.mubr.bf16.gmra.mrb[0].mxu0 %v1336
        %v1492 = vpop.f32.mrb[0].mxu0
        %v1493 = vadd.f32 %v1368, %v1492
        %v1494 = vpop.f32.mrb[0].mxu0
        %v1495 = vpop.f32.mrb[0].mxu0
        %v1496 = vadd.f32 %v1368, %v1495
        %v1497 = vpop.f32.mrb[0].mxu0
        %1498 = vmatprep.mubr.bf16.mxu0 0
        %1499 = vmatmul.mubr.bf16.gmra.mrb[0].mxu0 %v1337
        %v1500 = vpop.f32.mrb[0].mxu0
        %v1501 = vadd.f32 %v1368, %v1500
        %v1502 = vpop.f32.mrb[0].mxu0
        %v1503 = vpop.f32.mrb[0].mxu0
        %v1504 = vadd.f32 %v1368, %v1503
        %v1505 = vpop.f32.mrb[0].mxu0
        %1506 = vmatprep.mubr.bf16.mxu0 0
        %1507 = vmatmul.mubr.bf16.gmra.mrb[0].mxu0 %v1338
        %v1508 = vpop.f32.mrb[0].mxu0
        %v1509 = vadd.f32 %v1368, %v1508
        %v1510 = vpop.f32.mrb[0].mxu0
        %v1511 = vpop.f32.mrb[0].mxu0
        %v1512 = vadd.f32 %v1368, %v1511
        %v1513 = vpop.f32.mrb[0].mxu0
        %1514 = vmatprep.mubr.bf16.mxu0 0
        %1515 = vmatmul.mubr.bf16.gmra.mrb[0].mxu0 %v1339
        %v1516 = vpop.f32.mrb[0].mxu0
        %v1517 = vadd.f32 %v1368, %v1516
        %v1518 = vpop.f32.mrb[0].mxu0
        %v1519 = vpop.f32.mrb[0].mxu0
        %v1520 = vadd.f32 %v1368, %v1519
        %v1521 = vpop.f32.mrb[0].mxu0
        %1522 = vmatprep.mubr.bf16.mxu0 0
        %1523 = vmatmul.mubr.bf16.gmra.mrb[0].mxu0 %v1340
        %v1524 = vpop.f32.mrb[0].mxu0
        %v1525 = vadd.f32 %v1368, %v1524
        %v1526 = vpop.f32.mrb[0].mxu0
        %v1527 = vpop.f32.mrb[0].mxu0
        %v1528 = vadd.f32 %v1368, %v1527
        %v1529 = vpop.f32.mrb[0].mxu0
        %1530 = vmatprep.mubr.bf16.mxu0 0
        %1531 = vmatmul.mubr.bf16.gmra.mrb[0].mxu0 %v1341
        %v1532 = vpop.f32.mrb[0].mxu0
        %v1533 = vadd.f32 %v1368, %v1532
        %v1534 = vpop.f32.mrb[0].mxu0
        %v1535 = vpop.f32.mrb[0].mxu0
        %v1536 = vadd.f32 %v1368, %v1535
        %v1537 = vpop.f32.mrb[0].mxu0
        %1538 = vmatprep.mubr.bf16.mxu0 0
        %1539 = vmatmul.mubr.bf16.gmra.mrb[0].mxu0 %v1342
        %v1540 = vpop.f32.mrb[0].mxu0
        %v1541 = vadd.f32 %v1368, %v1540
        %v1542 = vpop.f32.mrb[0].mxu0
        %v1543 = vpop.f32.mrb[0].mxu0
        %v1544 = vadd.f32 %v1368, %v1543
        %v1545 = vpop.f32.mrb[0].mxu0
        %1546 = vmatprep.mubr.bf16.mxu0 0
        %1547 = vmatmul.mubr.bf16.gmra.mrb[0].mxu0 %v1343
        %v1548 = vpop.f32.mrb[0].mxu0
        %v1549 = vadd.f32 %v1368, %v1548
        %v1550 = vpop.f32.mrb[0].mxu0
        %v1551 = vpop.f32.mrb[0].mxu0
        %v1552 = vadd.f32 %v1368, %v1551
        %v1553 = vpop.f32.mrb[0].mxu0
        %1554 = vmatprep.mubr.bf16.mxu0 0
        %1555 = vmatmul.mubr.bf16.gmra.mrb[0].mxu0 %v1344
        %v1556 = vpop.f32.mrb[0].mxu0
        %v1557 = vadd.f32 %v1368, %v1556
        %v1558 = vpop.f32.mrb[0].mxu0
        %v1559 = vpop.f32.mrb[0].mxu0
        %v1560 = vadd.f32 %v1368, %v1559
        %v1561 = vpop.f32.mrb[0].mxu0
        %1562 = vmatprep.mubr.bf16.mxu0 0
        %1563 = vmatmul.mubr.bf16.gmra.mrb[0].mxu0 %v1345
        %v1564 = vpop.f32.mrb[0].mxu0
        %v1565 = vadd.f32 %v1368, %v1564
        %v1566 = vpop.f32.mrb[0].mxu0
        %v1567 = vpop.f32.mrb[0].mxu0
        %v1568 = vadd.f32 %v1368, %v1567
        %v1569 = vpop.f32.mrb[0].mxu0
        %1570 = vmatprep.mubr.bf16.mxu0 0
        %1571 = vmatmul.mubr.bf16.gmra.mrb[0].mxu0 %v1346
        %v1572 = vpop.f32.mrb[0].mxu0
        %v1573 = vadd.f32 %v1368, %v1572
        %v1574 = vpop.f32.mrb[0].mxu0
        %v1575 = vpop.f32.mrb[0].mxu0
        %v1576 = vadd.f32 %v1368, %v1575
        %v1577 = vpop.f32.mrb[0].mxu0
        %1578 = vdwg.mxu0
        %v1579 = vld [vmem:[%s7] sm:$0x1]
        %v1580 = vld [vmem:[%s8] sm:$0x1]
        %1581 = vadd.xlane.f32.xlu0 %v1453
        %v1582 = vpop.xlane.xlu0 %1581
        %1583 = vadd.xlane.f32.xlu0 %v1456
        %v1584 = vpop.xlane.xlu0 %1583
        %1585 = vadd.xlane.f32.xlu0 %v1461
        %v1586 = vpop.xlane.xlu0 %1585
        %1587 = vadd.xlane.f32.xlu0 %v1464
        %v1588 = vpop.xlane.xlu0 %1587
        %1589 = vadd.xlane.f32.xlu0 %v1469
        %v1590 = vpop.xlane.xlu0 %1589
        %1591 = vadd.xlane.f32.xlu0 %v1472
        %v1592 = vpop.xlane.xlu0 %1591
        %1593 = vadd.xlane.f32.xlu0 %v1477
        %v1594 = vpop.xlane.xlu0 %1593
        %1595 = vadd.xlane.f32.xlu0 %v1480
        %v1596 = vpop.xlane.xlu0 %1595
        %1597 = vadd.xlane.f32.xlu0 %v1485
        %v1598 = vpop.xlane.xlu0 %1597
        %1599 = vadd.xlane.f32.xlu0 %v1488
        %v1600 = vpop.xlane.xlu0 %1599
        %1601 = vadd.xlane.f32.xlu0 %v1493
        %v1602 = vpop.xlane.xlu0 %1601
        %1603 = vadd.xlane.f32.xlu0 %v1496
        %v1604 = vpop.xlane.xlu0 %1603
        %1605 = vadd.xlane.f32.xlu0 %v1501
        %v1606 = vpop.xlane.xlu0 %1605
        %1607 = vadd.xlane.f32.xlu0 %v1504
        %v1608 = vpop.xlane.xlu0 %1607
        %1609 = vadd.xlane.f32.xlu0 %v1509
        %v1610 = vpop.xlane.xlu0 %1609
        %1611 = vadd.xlane.f32.xlu0 %v1512
        %v1612 = vpop.xlane.xlu0 %1611
        %1613 = vadd.xlane.f32.xlu0 %v1517
        %v1614 = vpop.xlane.xlu0 %1613
        %1615 = vadd.xlane.f32.xlu0 %v1520
        %v1616 = vpop.xlane.xlu0 %1615
        %1617 = vadd.xlane.f32.xlu0 %v1525
        %v1618 = vpop.xlane.xlu0 %1617
        %1619 = vadd.xlane.f32.xlu0 %v1528
        %v1620 = vpop.xlane.xlu0 %1619
        %1621 = vadd.xlane.f32.xlu0 %v1533
        %v1622 = vpop.xlane.xlu0 %1621
        %1623 = vadd.xlane.f32.xlu0 %v1536
        %v1624 = vpop.xlane.xlu0 %1623
        %1625 = vadd.xlane.f32.xlu0 %v1541
        %v1626 = vpop.xlane.xlu0 %1625
        %1627 = vadd.xlane.f32.xlu0 %v1544
        %v1628 = vpop.xlane.xlu0 %1627
        %1629 = vadd.xlane.f32.xlu0 %v1549
        %v1630 = vpop.xlane.xlu0 %1629
        %1631 = vadd.xlane.f32.xlu0 %v1552
        %v1632 = vpop.xlane.xlu0 %1631
        %1633 = vadd.xlane.f32.xlu0 %v1557
        %v1634 = vpop.xlane.xlu0 %1633
        %1635 = vadd.xlane.f32.xlu0 %v1560
        %v1636 = vpop.xlane.xlu0 %1635
        %1637 = vadd.xlane.f32.xlu0 %v1565
        %v1638 = vpop.xlane.xlu0 %1637
        %1639 = vadd.xlane.f32.xlu0 %v1568
        %v1640 = vpop.xlane.xlu0 %1639
        %1641 = vadd.xlane.f32.xlu0 %v1573
        %v1642 = vpop.xlane.xlu0 %1641
        %1643 = vadd.xlane.f32.xlu0 %v1576
        %v1644 = vpop.xlane.xlu0 %1643
        %v1645 = vmul.f32 %v1582, %v838
        %v1646 = vmul.f32 %v1584, %v838
        %v1647 = vmul.f32 %v1586, %v838
        %v1648 = vmul.f32 %v1588, %v838
        %v1649 = vmul.f32 %v1590, %v838
        %v1650 = vmul.f32 %v1592, %v838
        %v1651 = vmul.f32 %v1594, %v838
        %v1652 = vmul.f32 %v1596, %v838
        %v1653 = vmul.f32 %v1598, %v838
        %v1654 = vmul.f32 %v1600, %v838
        %v1655 = vmul.f32 %v1602, %v838
        %v1656 = vmul.f32 %v1604, %v838
        %v1657 = vmul.f32 %v1606, %v838
        %v1658 = vmul.f32 %v1608, %v838
        %v1659 = vmul.f32 %v1610, %v838
        %v1660 = vmul.f32 %v1612, %v838
        %v1661 = vmul.f32 %v1614, %v838
        %v1662 = vmul.f32 %v1616, %v838
        %v1663 = vmul.f32 %v1618, %v838
        %v1664 = vmul.f32 %v1620, %v838
        %v1665 = vmul.f32 %v1622, %v838
        %v1666 = vmul.f32 %v1624, %v838
        %v1667 = vmul.f32 %v1626, %v838
        %v1668 = vmul.f32 %v1628, %v838
        %v1669 = vmul.f32 %v1630, %v838
        %v1670 = vmul.f32 %v1632, %v838
        %v1671 = vmul.f32 %v1634, %v838
        %v1672 = vmul.f32 %v1636, %v838
        %v1673 = vmul.f32 %v1638, %v838
        %v1674 = vmul.f32 %v1640, %v838
        %v1675 = vmul.f32 %v1642, %v838
        %v1676 = vmul.f32 %v1644, %v838
        %v1677 = vmul.f32 %v1453, %v1453
        %v1678 = vmul.f32 %v1456, %v1456
        %v1679 = vmul.f32 %v1461, %v1461
        %v1680 = vmul.f32 %v1464, %v1464
        %v1681 = vmul.f32 %v1469, %v1469
        %v1682 = vmul.f32 %v1472, %v1472
        %v1683 = vmul.f32 %v1477, %v1477
        %v1684 = vmul.f32 %v1480, %v1480
        %v1685 = vmul.f32 %v1485, %v1485
        %v1686 = vmul.f32 %v1488, %v1488
        %v1687 = vmul.f32 %v1493, %v1493
        %v1688 = vmul.f32 %v1496, %v1496
        %v1689 = vmul.f32 %v1501, %v1501
        %v1690 = vmul.f32 %v1504, %v1504
        %v1691 = vmul.f32 %v1509, %v1509
        %v1692 = vmul.f32 %v1512, %v1512
        %v1693 = vmul.f32 %v1517, %v1517
        %v1694 = vmul.f32 %v1520, %v1520
        %v1695 = vmul.f32 %v1525, %v1525
        %v1696 = vmul.f32 %v1528, %v1528
        %v1697 = vmul.f32 %v1533, %v1533
        %v1698 = vmul.f32 %v1536, %v1536
        %v1699 = vmul.f32 %v1541, %v1541
        %v1700 = vmul.f32 %v1544, %v1544
        %v1701 = vmul.f32 %v1549, %v1549
        %v1702 = vmul.f32 %v1552, %v1552
        %v1703 = vmul.f32 %v1557, %v1557
        %v1704 = vmul.f32 %v1560, %v1560
        %v1705 = vmul.f32 %v1565, %v1565
        %v1706 = vmul.f32 %v1568, %v1568
        %v1707 = vmul.f32 %v1573, %v1573
        %v1708 = vmul.f32 %v1576, %v1576
        %1709 = vadd.xlane.f32.xlu0 %v1677
        %v1710 = vpop.xlane.xlu0 %1709
        %1711 = vadd.xlane.f32.xlu0 %v1678
        %v1712 = vpop.xlane.xlu0 %1711
        %1713 = vadd.xlane.f32.xlu0 %v1679
        %v1714 = vpop.xlane.xlu0 %1713
        %1715 = vadd.xlane.f32.xlu0 %v1680
        %v1716 = vpop.xlane.xlu0 %1715
        %1717 = vadd.xlane.f32.xlu0 %v1681
        %v1718 = vpop.xlane.xlu0 %1717
        %1719 = vadd.xlane.f32.xlu0 %v1682
        %v1720 = vpop.xlane.xlu0 %1719
        %1721 = vadd.xlane.f32.xlu0 %v1683
        %v1722 = vpop.xlane.xlu0 %1721
        %1723 = vadd.xlane.f32.xlu0 %v1684
        %v1724 = vpop.xlane.xlu0 %1723
        %1725 = vadd.xlane.f32.xlu0 %v1685
        %v1726 = vpop.xlane.xlu0 %1725
        %1727 = vadd.xlane.f32.xlu0 %v1686
        %v1728 = vpop.xlane.xlu0 %1727
        %1729 = vadd.xlane.f32.xlu0 %v1687
        %v1730 = vpop.xlane.xlu0 %1729
        %1731 = vadd.xlane.f32.xlu0 %v1688
        %v1732 = vpop.xlane.xlu0 %1731
        %1733 = vadd.xlane.f32.xlu0 %v1689
        %v1734 = vpop.xlane.xlu0 %1733
        %1735 = vadd.xlane.f32.xlu0 %v1690
        %v1736 = vpop.xlane.xlu0 %1735
        %1737 = vadd.xlane.f32.xlu0 %v1691
        %v1738 = vpop.xlane.xlu0 %1737
        %1739 = vadd.xlane.f32.xlu0 %v1692
        %v1740 = vpop.xlane.xlu0 %1739
        %1741 = vadd.xlane.f32.xlu0 %v1693
        %v1742 = vpop.xlane.xlu0 %1741
        %1743 = vadd.xlane.f32.xlu0 %v1694
        %v1744 = vpop.xlane.xlu0 %1743
        %1745 = vadd.xlane.f32.xlu0 %v1695
        %v1746 = vpop.xlane.xlu0 %1745
        %1747 = vadd.xlane.f32.xlu0 %v1696
        %v1748 = vpop.xlane.xlu0 %1747
        %1749 = vadd.xlane.f32.xlu0 %v1697
        %v1750 = vpop.xlane.xlu0 %1749
        %1751 = vadd.xlane.f32.xlu0 %v1698
        %v1752 = vpop.xlane.xlu0 %1751
        %1753 = vadd.xlane.f32.xlu0 %v1699
        %v1754 = vpop.xlane.xlu0 %1753
        %1755 = vadd.xlane.f32.xlu0 %v1700
        %v1756 = vpop.xlane.xlu0 %1755
        %1757 = vadd.xlane.f32.xlu0 %v1701
        %v1758 = vpop.xlane.xlu0 %1757
        %1759 = vadd.xlane.f32.xlu0 %v1702
        %v1760 = vpop.xlane.xlu0 %1759
        %1761 = vadd.xlane.f32.xlu0 %v1703
        %v1762 = vpop.xlane.xlu0 %1761
        %1763 = vadd.xlane.f32.xlu0 %v1704
        %v1764 = vpop.xlane.xlu0 %1763
        %1765 = vadd.xlane.f32.xlu0 %v1705
        %v1766 = vpop.xlane.xlu0 %1765
        %1767 = vadd.xlane.f32.xlu0 %v1706
        %v1768 = vpop.xlane.xlu0 %1767
        %1769 = vadd.xlane.f32.xlu0 %v1707
        %v1770 = vpop.xlane.xlu0 %1769
        %1771 = vadd.xlane.f32.xlu0 %v1708
        %v1772 = vpop.xlane.xlu0 %1771
        %v1773 = vmul.f32 %v1710, %v838
        %v1774 = vmul.f32 %v1712, %v838
        %v1775 = vmul.f32 %v1714, %v838
        %v1776 = vmul.f32 %v1716, %v838
        %v1777 = vmul.f32 %v1718, %v838
        %v1778 = vmul.f32 %v1720, %v838
        %v1779 = vmul.f32 %v1722, %v838
        %v1780 = vmul.f32 %v1724, %v838
        %v1781 = vmul.f32 %v1726, %v838
        %v1782 = vmul.f32 %v1728, %v838
        %v1783 = vmul.f32 %v1730, %v838
        %v1784 = vmul.f32 %v1732, %v838
        %v1785 = vmul.f32 %v1734, %v838
        %v1786 = vmul.f32 %v1736, %v838
        %v1787 = vmul.f32 %v1738, %v838
        %v1788 = vmul.f32 %v1740, %v838
        %v1789 = vmul.f32 %v1742, %v838
        %v1790 = vmul.f32 %v1744, %v838
        %v1791 = vmul.f32 %v1746, %v838
        %v1792 = vmul.f32 %v1748, %v838
        %v1793 = vmul.f32 %v1750, %v838
        %v1794 = vmul.f32 %v1752, %v838
        %v1795 = vmul.f32 %v1754, %v838
        %v1796 = vmul.f32 %v1756, %v838
        %v1797 = vmul.f32 %v1758, %v838
        %v1798 = vmul.f32 %v1760, %v838
        %v1799 = vmul.f32 %v1762, %v838
        %v1800 = vmul.f32 %v1764, %v838
        %v1801 = vmul.f32 %v1766, %v838
        %v1802 = vmul.f32 %v1768, %v838
        %v1803 = vmul.f32 %v1770, %v838
        %v1804 = vmul.f32 %v1772, %v838
        %v1805 = vmul.f32 %v1645, %v1645
        %v1806 = vmul.f32 %v1646, %v1646
        %v1807 = vmul.f32 %v1647, %v1647
        %v1808 = vmul.f32 %v1648, %v1648
        %v1809 = vmul.f32 %v1649, %v1649
        %v1810 = vmul.f32 %v1650, %v1650
        %v1811 = vmul.f32 %v1651, %v1651
        %v1812 = vmul.f32 %v1652, %v1652
        %v1813 = vmul.f32 %v1653, %v1653
        %v1814 = vmul.f32 %v1654, %v1654
        %v1815 = vmul.f32 %v1655, %v1655
        %v1816 = vmul.f32 %v1656, %v1656
        %v1817 = vmul.f32 %v1657, %v1657
        %v1818 = vmul.f32 %v1658, %v1658
        %v1819 = vmul.f32 %v1659, %v1659
        %v1820 = vmul.f32 %v1660, %v1660
        %v1821 = vmul.f32 %v1661, %v1661
        %v1822 = vmul.f32 %v1662, %v1662
        %v1823 = vmul.f32 %v1663, %v1663
        %v1824 = vmul.f32 %v1664, %v1664
        %v1825 = vmul.f32 %v1665, %v1665
        %v1826 = vmul.f32 %v1666, %v1666
        %v1827 = vmul.f32 %v1667, %v1667
        %v1828 = vmul.f32 %v1668, %v1668
        %v1829 = vmul.f32 %v1669, %v1669
        %v1830 = vmul.f32 %v1670, %v1670
        %v1831 = vmul.f32 %v1671, %v1671
        %v1832 = vmul.f32 %v1672, %v1672
        %v1833 = vmul.f32 %v1673, %v1673
        %v1834 = vmul.f32 %v1674, %v1674
        %v1835 = vmul.f32 %v1675, %v1675
        %v1836 = vmul.f32 %v1676, %v1676
        %v1837 = vsub.f32 %v1773, %v1805
        %v1838 = vsub.f32 %v1774, %v1806
        %v1839 = vsub.f32 %v1775, %v1807
        %v1840 = vsub.f32 %v1776, %v1808
        %v1841 = vsub.f32 %v1777, %v1809
        %v1842 = vsub.f32 %v1778, %v1810
        %v1843 = vsub.f32 %v1779, %v1811
        %v1844 = vsub.f32 %v1780, %v1812
        %v1845 = vsub.f32 %v1781, %v1813
        %v1846 = vsub.f32 %v1782, %v1814
        %v1847 = vsub.f32 %v1783, %v1815
        %v1848 = vsub.f32 %v1784, %v1816
        %v1849 = vsub.f32 %v1785, %v1817
        %v1850 = vsub.f32 %v1786, %v1818
        %v1851 = vsub.f32 %v1787, %v1819
        %v1852 = vsub.f32 %v1788, %v1820
        %v1853 = vsub.f32 %v1789, %v1821
        %v1854 = vsub.f32 %v1790, %v1822
        %v1855 = vsub.f32 %v1791, %v1823
        %v1856 = vsub.f32 %v1792, %v1824
        %v1857 = vsub.f32 %v1793, %v1825
        %v1858 = vsub.f32 %v1794, %v1826
        %v1859 = vsub.f32 %v1795, %v1827
        %v1860 = vsub.f32 %v1796, %v1828
        %v1861 = vsub.f32 %v1797, %v1829
        %v1862 = vsub.f32 %v1798, %v1830
        %v1863 = vsub.f32 %v1799, %v1831
        %v1864 = vsub.f32 %v1800, %v1832
        %v1865 = vsub.f32 %v1801, %v1833
        %v1866 = vsub.f32 %v1802, %v1834
        %v1867 = vsub.f32 %v1803, %v1835
        %v1868 = vsub.f32 %v1804, %v1836
        %v1869 = vmax.f32 %v1837, 0.0
        %v1870 = vmax.f32 %v1838, 0.0
        %v1871 = vmax.f32 %v1839, 0.0
        %v1872 = vmax.f32 %v1840, 0.0
        %v1873 = vmax.f32 %v1841, 0.0
        %v1874 = vmax.f32 %v1842, 0.0
        %v1875 = vmax.f32 %v1843, 0.0
        %v1876 = vmax.f32 %v1844, 0.0
        %v1877 = vmax.f32 %v1845, 0.0
        %v1878 = vmax.f32 %v1846, 0.0
        %v1879 = vmax.f32 %v1847, 0.0
        %v1880 = vmax.f32 %v1848, 0.0
        %v1881 = vmax.f32 %v1849, 0.0
        %v1882 = vmax.f32 %v1850, 0.0
        %v1883 = vmax.f32 %v1851, 0.0
        %v1884 = vmax.f32 %v1852, 0.0
        %v1885 = vmax.f32 %v1853, 0.0
        %v1886 = vmax.f32 %v1854, 0.0
        %v1887 = vmax.f32 %v1855, 0.0
        %v1888 = vmax.f32 %v1856, 0.0
        %v1889 = vmax.f32 %v1857, 0.0
        %v1890 = vmax.f32 %v1858, 0.0
        %v1891 = vmax.f32 %v1859, 0.0
        %v1892 = vmax.f32 %v1860, 0.0
        %v1893 = vmax.f32 %v1861, 0.0
        %v1894 = vmax.f32 %v1862, 0.0
        %v1895 = vmax.f32 %v1863, 0.0
        %v1896 = vmax.f32 %v1864, 0.0
        %v1897 = vmax.f32 %v1865, 0.0
        %v1898 = vmax.f32 %v1866, 0.0
        %v1899 = vmax.f32 %v1867, 0.0
        %v1900 = vmax.f32 %v1868, 0.0
        %v1901 = vadd.f32 %v1869, 1e-05
        %v1902 = vadd.f32 %v1870, 1e-05
        %v1903 = vadd.f32 %v1871, 1e-05
        %v1904 = vadd.f32 %v1872, 1e-05
        %v1905 = vadd.f32 %v1873, 1e-05
        %v1906 = vadd.f32 %v1874, 1e-05
        %v1907 = vadd.f32 %v1875, 1e-05
        %v1908 = vadd.f32 %v1876, 1e-05
        %v1909 = vadd.f32 %v1877, 1e-05
        %v1910 = vadd.f32 %v1878, 1e-05
        %v1911 = vadd.f32 %v1879, 1e-05
        %v1912 = vadd.f32 %v1880, 1e-05
        %v1913 = vadd.f32 %v1881, 1e-05
        %v1914 = vadd.f32 %v1882, 1e-05
        %v1915 = vadd.f32 %v1883, 1e-05
        %v1916 = vadd.f32 %v1884, 1e-05
        %v1917 = vadd.f32 %v1885, 1e-05
        %v1918 = vadd.f32 %v1886, 1e-05
        %v1919 = vadd.f32 %v1887, 1e-05
        %v1920 = vadd.f32 %v1888, 1e-05
        %v1921 = vadd.f32 %v1889, 1e-05
        %v1922 = vadd.f32 %v1890, 1e-05
        %v1923 = vadd.f32 %v1891, 1e-05
        %v1924 = vadd.f32 %v1892, 1e-05
        %v1925 = vadd.f32 %v1893, 1e-05
        %v1926 = vadd.f32 %v1894, 1e-05
        %v1927 = vadd.f32 %v1895, 1e-05
        %v1928 = vadd.f32 %v1896, 1e-05
        %v1929 = vadd.f32 %v1897, 1e-05
        %v1930 = vadd.f32 %v1898, 1e-05
        %v1931 = vadd.f32 %v1899, 1e-05
        %v1932 = vadd.f32 %v1900, 1e-05
        %v1933 = vrsqrt.pop %v1901
        %v1934 = vrsqrt.pop %v1902
        %v1935 = vrsqrt.pop %v1903
        %v1936 = vrsqrt.pop %v1904
        %v1937 = vrsqrt.pop %v1905
        %v1938 = vrsqrt.pop %v1906
        %v1939 = vrsqrt.pop %v1907
        %v1940 = vrsqrt.pop %v1908
        %v1941 = vrsqrt.pop %v1909
        %v1942 = vrsqrt.pop %v1910
        %v1943 = vrsqrt.pop %v1911
        %v1944 = vrsqrt.pop %v1912
        %v1945 = vrsqrt.pop %v1913
        %v1946 = vrsqrt.pop %v1914
        %v1947 = vrsqrt.pop %v1915
        %v1948 = vrsqrt.pop %v1916
        %v1949 = vrsqrt.pop %v1917
        %v1950 = vrsqrt.pop %v1918
        %v1951 = vrsqrt.pop %v1919
        %v1952 = vrsqrt.pop %v1920
        %v1953 = vrsqrt.pop %v1921
        %v1954 = vrsqrt.pop %v1922
        %v1955 = vrsqrt.pop %v1923
        %v1956 = vrsqrt.pop %v1924
        %v1957 = vrsqrt.pop %v1925
        %v1958 = vrsqrt.pop %v1926
        %v1959 = vrsqrt.pop %v1927
        %v1960 = vrsqrt.pop %v1928
        %v1961 = vrsqrt.pop %v1929
        %v1962 = vrsqrt.pop %v1930
        %v1963 = vrsqrt.pop %v1931
        %v1964 = vrsqrt.pop %v1932
        %v1965 = vsub.f32 %v1453, %v1645
        %v1966 = vsub.f32 %v1456, %v1646
        %v1967 = vsub.f32 %v1461, %v1647
        %v1968 = vsub.f32 %v1464, %v1648
        %v1969 = vsub.f32 %v1469, %v1649
        %v1970 = vsub.f32 %v1472, %v1650
        %v1971 = vsub.f32 %v1477, %v1651
        %v1972 = vsub.f32 %v1480, %v1652
        %v1973 = vsub.f32 %v1485, %v1653
        %v1974 = vsub.f32 %v1488, %v1654
        %v1975 = vsub.f32 %v1493, %v1655
        %v1976 = vsub.f32 %v1496, %v1656
        %v1977 = vsub.f32 %v1501, %v1657
        %v1978 = vsub.f32 %v1504, %v1658
        %v1979 = vsub.f32 %v1509, %v1659
        %v1980 = vsub.f32 %v1512, %v1660
        %v1981 = vsub.f32 %v1517, %v1661
        %v1982 = vsub.f32 %v1520, %v1662
        %v1983 = vsub.f32 %v1525, %v1663
        %v1984 = vsub.f32 %v1528, %v1664
        %v1985 = vsub.f32 %v1533, %v1665
        %v1986 = vsub.f32 %v1536, %v1666
        %v1987 = vsub.f32 %v1541, %v1667
        %v1988 = vsub.f32 %v1544, %v1668
        %v1989 = vsub.f32 %v1549, %v1669
        %v1990 = vsub.f32 %v1552, %v1670
        %v1991 = vsub.f32 %v1557, %v1671
        %v1992 = vsub.f32 %v1560, %v1672
        %v1993 = vsub.f32 %v1565, %v1673
        %v1994 = vsub.f32 %v1568, %v1674
        %v1995 = vsub.f32 %v1573, %v1675
        %v1996 = vsub.f32 %v1576, %v1676
        %v1997 = vmul.f32 %v1965, %v1933
        %v1998 = vmul.f32 %v1966, %v1934
        %v1999 = vmul.f32 %v1967, %v1935
        %v2000 = vmul.f32 %v1968, %v1936
        %v2001 = vmul.f32 %v1969, %v1937
        %v2002 = vmul.f32 %v1970, %v1938
        %v2003 = vmul.f32 %v1971, %v1939
        %v2004 = vmul.f32 %v1972, %v1940
        %v2005 = vmul.f32 %v1973, %v1941
        %v2006 = vmul.f32 %v1974, %v1942
        %v2007 = vmul.f32 %v1975, %v1943
        %v2008 = vmul.f32 %v1976, %v1944
        %v2009 = vmul.f32 %v1977, %v1945
        %v2010 = vmul.f32 %v1978, %v1946
        %v2011 = vmul.f32 %v1979, %v1947
        %v2012 = vmul.f32 %v1980, %v1948
        %v2013 = vmul.f32 %v1981, %v1949
        %v2014 = vmul.f32 %v1982, %v1950
        %v2015 = vmul.f32 %v1983, %v1951
        %v2016 = vmul.f32 %v1984, %v1952
        %v2017 = vmul.f32 %v1985, %v1953
        %v2018 = vmul.f32 %v1986, %v1954
        %v2019 = vmul.f32 %v1987, %v1955
        %v2020 = vmul.f32 %v1988, %v1956
        %v2021 = vmul.f32 %v1989, %v1957
        %v2022 = vmul.f32 %v1990, %v1958
        %v2023 = vmul.f32 %v1991, %v1959
        %v2024 = vmul.f32 %v1992, %v1960
        %v2025 = vmul.f32 %v1993, %v1961
        %v2026 = vmul.f32 %v1994, %v1962
        %v2027 = vmul.f32 %v1995, %v1963
        %v2028 = vmul.f32 %v1996, %v1964
        %v2030 = vlaneseq
        %v2031 = vshrl.u32 %v2030, 7
        %v2032 = vsub.s32 0, %v2031
        %v2033 = vrot.slane %v1579, %v2032
        %v2035 = vmul.f32 %v1997, %v2033
        %v2036 = vmul.f32 %v1998, %v2033
        %v2037 = vmul.f32 %v1999, %v2033
        %v2038 = vmul.f32 %v2000, %v2033
        %v2039 = vmul.f32 %v2001, %v2033
        %v2040 = vmul.f32 %v2002, %v2033
        %v2041 = vmul.f32 %v2003, %v2033
        %v2042 = vmul.f32 %v2004, %v2033
        %v2043 = vmul.f32 %v2005, %v2033
        %v2044 = vmul.f32 %v2006, %v2033
        %v2045 = vmul.f32 %v2007, %v2033
        %v2046 = vmul.f32 %v2008, %v2033
        %v2047 = vmul.f32 %v2009, %v2033
        %v2048 = vmul.f32 %v2010, %v2033
        %v2049 = vmul.f32 %v2011, %v2033
        %v2050 = vmul.f32 %v2012, %v2033
        %v2051 = vmul.f32 %v2013, %v2033
        %v2052 = vmul.f32 %v2014, %v2033
        %v2053 = vmul.f32 %v2015, %v2033
        %v2054 = vmul.f32 %v2016, %v2033
        %v2055 = vmul.f32 %v2017, %v2033
        %v2056 = vmul.f32 %v2018, %v2033
        %v2057 = vmul.f32 %v2019, %v2033
        %v2058 = vmul.f32 %v2020, %v2033
        %v2059 = vmul.f32 %v2021, %v2033
        %v2060 = vmul.f32 %v2022, %v2033
        %v2061 = vmul.f32 %v2023, %v2033
        %v2062 = vmul.f32 %v2024, %v2033
        %v2063 = vmul.f32 %v2025, %v2033
        %v2064 = vmul.f32 %v2026, %v2033
        %v2065 = vmul.f32 %v2027, %v2033
        %v2066 = vmul.f32 %v2028, %v2033
        %v2068 = vlaneseq
        %v2069 = vshrl.u32 %v2068, 7
        %v2070 = vsub.s32 0, %v2069
        %v2071 = vrot.slane %v1580, %v2070
        %v2073 = vadd.f32 %v2035, %v2071
        %v2074 = vadd.f32 %v2036, %v2071
        %v2075 = vadd.f32 %v2037, %v2071
        %v2076 = vadd.f32 %v2038, %v2071
        %v2077 = vadd.f32 %v2039, %v2071
        %v2078 = vadd.f32 %v2040, %v2071
        %v2079 = vadd.f32 %v2041, %v2071
        %v2080 = vadd.f32 %v2042, %v2071
        %v2081 = vadd.f32 %v2043, %v2071
        %v2082 = vadd.f32 %v2044, %v2071
        %v2083 = vadd.f32 %v2045, %v2071
        %v2084 = vadd.f32 %v2046, %v2071
        %v2085 = vadd.f32 %v2047, %v2071
        %v2086 = vadd.f32 %v2048, %v2071
        %v2087 = vadd.f32 %v2049, %v2071
        %v2088 = vadd.f32 %v2050, %v2071
        %v2089 = vadd.f32 %v2051, %v2071
        %v2090 = vadd.f32 %v2052, %v2071
        %v2091 = vadd.f32 %v2053, %v2071
        %v2092 = vadd.f32 %v2054, %v2071
        %v2093 = vadd.f32 %v2055, %v2071
        %v2094 = vadd.f32 %v2056, %v2071
        %v2095 = vadd.f32 %v2057, %v2071
        %v2096 = vadd.f32 %v2058, %v2071
        %v2097 = vadd.f32 %v2059, %v2071
        %v2098 = vadd.f32 %v2060, %v2071
        %v2099 = vadd.f32 %v2061, %v2071
        %v2100 = vadd.f32 %v2062, %v2071
        %v2101 = vadd.f32 %v2063, %v2071
        %v2102 = vadd.f32 %v2064, %v2071
        %v2103 = vadd.f32 %v2065, %v2071
        %v2104 = vadd.f32 %v2066, %v2071
        %v2105 = vmax.f32 %v2073, 0.0
        %v2106 = vmax.f32 %v2074, 0.0
        %v2107 = vmax.f32 %v2075, 0.0
        %v2108 = vmax.f32 %v2076, 0.0
        %v2109 = vmax.f32 %v2077, 0.0
        %v2110 = vmax.f32 %v2078, 0.0
        %v2111 = vmax.f32 %v2079, 0.0
        %v2112 = vmax.f32 %v2080, 0.0
        %v2113 = vmax.f32 %v2081, 0.0
        %v2114 = vmax.f32 %v2082, 0.0
        %v2115 = vmax.f32 %v2083, 0.0
        %v2116 = vmax.f32 %v2084, 0.0
        %v2117 = vmax.f32 %v2085, 0.0
        %v2118 = vmax.f32 %v2086, 0.0
        %v2119 = vmax.f32 %v2087, 0.0
        %v2120 = vmax.f32 %v2088, 0.0
        %v2121 = vmax.f32 %v2089, 0.0
        %v2122 = vmax.f32 %v2090, 0.0
        %v2123 = vmax.f32 %v2091, 0.0
        %v2124 = vmax.f32 %v2092, 0.0
        %v2125 = vmax.f32 %v2093, 0.0
        %v2126 = vmax.f32 %v2094, 0.0
        %v2127 = vmax.f32 %v2095, 0.0
        %v2128 = vmax.f32 %v2096, 0.0
        %v2129 = vmax.f32 %v2097, 0.0
        %v2130 = vmax.f32 %v2098, 0.0
        %v2131 = vmax.f32 %v2099, 0.0
        %v2132 = vmax.f32 %v2100, 0.0
        %v2133 = vmax.f32 %v2101, 0.0
        %v2134 = vmax.f32 %v2102, 0.0
        %v2135 = vmax.f32 %v2103, 0.0
        %v2136 = vmax.f32 %v2104, 0.0
        %v2137 = vpack.c.bf16 %v2106, %v2105
        %v2138 = vpack.c.bf16 %v2108, %v2107
        %v2139 = vpack.c.bf16 %v2110, %v2109
        %v2140 = vpack.c.bf16 %v2112, %v2111
        %v2141 = vpack.c.bf16 %v2114, %v2113
        %v2142 = vpack.c.bf16 %v2116, %v2115
        %v2143 = vpack.c.bf16 %v2118, %v2117
        %v2144 = vpack.c.bf16 %v2120, %v2119
        %v2145 = vpack.c.bf16 %v2122, %v2121
        %v2146 = vpack.c.bf16 %v2124, %v2123
        %v2147 = vpack.c.bf16 %v2126, %v2125
        %v2148 = vpack.c.bf16 %v2128, %v2127
        %v2149 = vpack.c.bf16 %v2130, %v2129
        %v2150 = vpack.c.bf16 %v2132, %v2131
        %v2151 = vpack.c.bf16 %v2134, %v2133
        %v2152 = vpack.c.bf16 %v2136, %v2135
        %v2153 = vld [vmem:[%s9] sm:$0xf]
        %v2154 = vld [vmem:[%s9 + $0x4] sm:$0xf]
        %v2155 = vld [vmem:[%s9 + $0x8] sm:$0xf]
        %v2156 = vld [vmem:[%s9 + $0xc] sm:$0xf]
        %v2157 = vld [vmem:[%s9 + $0x10] sm:$0xf]
        %v2158 = vld [vmem:[%s9 + $0x14] sm:$0xf]
        %v2159 = vld [vmem:[%s9 + $0x18] sm:$0xf]
        %v2160 = vld [vmem:[%s9 + $0x1c] sm:$0xf]
        %v2161 = vld [vmem:[%s9 + $0x20] sm:$0xf]
        %v2162 = vld [vmem:[%s9 + $0x24] sm:$0xf]
        %v2163 = vld [vmem:[%s9 + $0x28] sm:$0xf]
        %v2164 = vld [vmem:[%s9 + $0x2c] sm:$0xf]
        %v2165 = vld [vmem:[%s9 + $0x30] sm:$0xf]
        %v2166 = vld [vmem:[%s9 + $0x34] sm:$0xf]
        %v2167 = vld [vmem:[%s9 + $0x38] sm:$0xf]
        %v2168 = vld [vmem:[%s9 + $0x3c] sm:$0xf]
        %v2169 = vld [vmem:[%s10] sm:$0x1]
        %v2171 = vlaneseq
        %v2172 = vshrl.u32 %v2171, 7
        %v2173 = vsub.s32 0, %v2172
        %v2174 = vrot.slane %v2169, %v2173
        %v2192 = vunpack.c.l.b16 %v2153
        %v2193 = vunpack.c.l.b16 %v2154
        %v2194 = vunpack.c.l.b16 %v2155
        %v2195 = vunpack.c.l.b16 %v2156
        %v2196 = vunpack.c.l.b16 %v2157
        %v2197 = vunpack.c.l.b16 %v2158
        %v2198 = vunpack.c.l.b16 %v2159
        %v2199 = vunpack.c.l.b16 %v2160
        %v2200 = vunpack.c.l.b16 %v2161
        %v2201 = vunpack.c.l.b16 %v2162
        %v2202 = vunpack.c.l.b16 %v2163
        %v2203 = vunpack.c.l.b16 %v2164
        %v2204 = vunpack.c.l.b16 %v2165
        %v2205 = vunpack.c.l.b16 %v2166
        %v2206 = vunpack.c.l.b16 %v2167
        %v2207 = vunpack.c.l.b16 %v2168
        %v2208 = vpack.c.b16 %v2193, %v2192
        %v2209 = vpack.c.b16 %v2195, %v2194
        %v2210 = vpack.c.b16 %v2197, %v2196
        %v2211 = vpack.c.b16 %v2199, %v2198
        %v2212 = vpack.c.b16 %v2201, %v2200
        %v2213 = vpack.c.b16 %v2203, %v2202
        %v2214 = vpack.c.b16 %v2205, %v2204
        %v2215 = vpack.c.b16 %v2207, %v2206
        %2224 = vmatprep.subr.bf16.mxu0 0
        %2225 = vmatpush1.bf16.msra.mxu0 %v2208
        %2226 = vmatprep.subr.bf16.mxu0 0
        %2227 = vmatpush1.bf16.msra.mxu0 %v2209
        %2228 = vmatprep.subr.bf16.mxu0 0
        %2229 = vmatpush1.bf16.msra.mxu0 %v2210
        %2230 = vmatprep.subr.bf16.mxu0 0
        %2231 = vmatpush1.bf16.msra.mxu0 %v2211
        %2232 = vmatprep.subr.bf16.mxu0 0
        %2233 = vmatpush1.bf16.msra.mxu0 %v2212
        %2234 = vmatprep.subr.bf16.mxu0 0
        %2235 = vmatpush1.bf16.msra.mxu0 %v2213
        %2236 = vmatprep.subr.bf16.mxu0 0
        %2237 = vmatpush1.bf16.msra.mxu0 %v2214
        %2238 = vmatprep.subr.bf16.mxu0 0
        %2239 = vmatpush1.bf16.msra.mxu0 %v2215
        %2240 = vmatprep.subr.bf16.mxu0 0
        %2241 = vmatpush1.bf16.msra.mxu0 0
        %2242 = vmatprep.subr.bf16.mxu0 0
        %2243 = vmatpush1.bf16.msra.mxu0 0
        %2244 = vmatprep.subr.bf16.mxu0 0
        %2245 = vmatpush1.bf16.msra.mxu0 0
        %2246 = vmatprep.subr.bf16.mxu0 0
        %2247 = vmatpush1.bf16.msra.mxu0 0
        %2248 = vmatprep.subr.bf16.mxu0 0
        %2249 = vmatpush1.bf16.msra.mxu0 0
        %2250 = vmatprep.subr.bf16.mxu0 0
        %2251 = vmatpush1.bf16.msra.mxu0 0
        %2252 = vmatprep.subr.bf16.mxu0 0
        %2253 = vmatpush1.bf16.msra.mxu0 0
        %2254 = vmatprep.subr.bf16.mxu0 0
        %2255 = vmatpush1.bf16.msra.mxu0 0
        %2256 = vmatprep.mubr.bf16.mxu0 0
        %2257 = vmatmul.mubr.bf16.gmra.mrb[0].mxu0 %v2137
        %v2258 = vpop.f32.mrb[0].mxu0
        %v2259 = vadd.f32 %v2174, %v2258
        %v2260 = vpop.f32.mrb[0].mxu0
        %v2261 = vpop.f32.mrb[0].mxu0
        %v2262 = vadd.f32 %v2174, %v2261
        %v2263 = vpop.f32.mrb[0].mxu0
        %2264 = vmatprep.mubr.bf16.mxu0 0
        %2265 = vmatmul.mubr.bf16.gmra.mrb[0].mxu0 %v2138
        %v2266 = vpop.f32.mrb[0].mxu0
        %v2267 = vadd.f32 %v2174, %v2266
        %v2268 = vpop.f32.mrb[0].mxu0
        %v2269 = vpop.f32.mrb[0].mxu0
        %v2270 = vadd.f32 %v2174, %v2269
        %v2271 = vpop.f32.mrb[0].mxu0
        %2272 = vmatprep.mubr.bf16.mxu0 0
        %2273 = vmatmul.mubr.bf16.gmra.mrb[0].mxu0 %v2139
        %v2274 = vpop.f32.mrb[0].mxu0
        %v2275 = vadd.f32 %v2174, %v2274
        %v2276 = vpop.f32.mrb[0].mxu0
        %v2277 = vpop.f32.mrb[0].mxu0
        %v2278 = vadd.f32 %v2174, %v2277
        %v2279 = vpop.f32.mrb[0].mxu0
        %2280 = vmatprep.mubr.bf16.mxu0 0
        %2281 = vmatmul.mubr.bf16.gmra.mrb[0].mxu0 %v2140
        %v2282 = vpop.f32.mrb[0].mxu0
        %v2283 = vadd.f32 %v2174, %v2282
        %v2284 = vpop.f32.mrb[0].mxu0
        %v2285 = vpop.f32.mrb[0].mxu0
        %v2286 = vadd.f32 %v2174, %v2285
        %v2287 = vpop.f32.mrb[0].mxu0
        %2288 = vmatprep.mubr.bf16.mxu0 0
        %2289 = vmatmul.mubr.bf16.gmra.mrb[0].mxu0 %v2141
        %v2290 = vpop.f32.mrb[0].mxu0
        %v2291 = vadd.f32 %v2174, %v2290
        %v2292 = vpop.f32.mrb[0].mxu0
        %v2293 = vpop.f32.mrb[0].mxu0
        %v2294 = vadd.f32 %v2174, %v2293
        %v2295 = vpop.f32.mrb[0].mxu0
        %2296 = vmatprep.mubr.bf16.mxu0 0
        %2297 = vmatmul.mubr.bf16.gmra.mrb[0].mxu0 %v2142
        %v2298 = vpop.f32.mrb[0].mxu0
        %v2299 = vadd.f32 %v2174, %v2298
        %v2300 = vpop.f32.mrb[0].mxu0
        %v2301 = vpop.f32.mrb[0].mxu0
        %v2302 = vadd.f32 %v2174, %v2301
        %v2303 = vpop.f32.mrb[0].mxu0
        %2304 = vmatprep.mubr.bf16.mxu0 0
        %2305 = vmatmul.mubr.bf16.gmra.mrb[0].mxu0 %v2143
        %v2306 = vpop.f32.mrb[0].mxu0
        %v2307 = vadd.f32 %v2174, %v2306
        %v2308 = vpop.f32.mrb[0].mxu0
        %v2309 = vpop.f32.mrb[0].mxu0
        %v2310 = vadd.f32 %v2174, %v2309
        %v2311 = vpop.f32.mrb[0].mxu0
        %2312 = vmatprep.mubr.bf16.mxu0 0
        %2313 = vmatmul.mubr.bf16.gmra.mrb[0].mxu0 %v2144
        %v2314 = vpop.f32.mrb[0].mxu0
        %v2315 = vadd.f32 %v2174, %v2314
        %v2316 = vpop.f32.mrb[0].mxu0
        %v2317 = vpop.f32.mrb[0].mxu0
        %v2318 = vadd.f32 %v2174, %v2317
        %v2319 = vpop.f32.mrb[0].mxu0
        %2320 = vmatprep.mubr.bf16.mxu0 0
        %2321 = vmatmul.mubr.bf16.gmra.mrb[0].mxu0 %v2145
        %v2322 = vpop.f32.mrb[0].mxu0
        %v2323 = vadd.f32 %v2174, %v2322
        %v2324 = vpop.f32.mrb[0].mxu0
        %v2325 = vpop.f32.mrb[0].mxu0
        %v2326 = vadd.f32 %v2174, %v2325
        %v2327 = vpop.f32.mrb[0].mxu0
        %2328 = vmatprep.mubr.bf16.mxu0 0
        %2329 = vmatmul.mubr.bf16.gmra.mrb[0].mxu0 %v2146
        %v2330 = vpop.f32.mrb[0].mxu0
        %v2331 = vadd.f32 %v2174, %v2330
        %v2332 = vpop.f32.mrb[0].mxu0
        %v2333 = vpop.f32.mrb[0].mxu0
        %v2334 = vadd.f32 %v2174, %v2333
        %v2335 = vpop.f32.mrb[0].mxu0
        %2336 = vmatprep.mubr.bf16.mxu0 0
        %2337 = vmatmul.mubr.bf16.gmra.mrb[0].mxu0 %v2147
        %v2338 = vpop.f32.mrb[0].mxu0
        %v2339 = vadd.f32 %v2174, %v2338
        %v2340 = vpop.f32.mrb[0].mxu0
        %v2341 = vpop.f32.mrb[0].mxu0
        %v2342 = vadd.f32 %v2174, %v2341
        %v2343 = vpop.f32.mrb[0].mxu0
        %2344 = vmatprep.mubr.bf16.mxu0 0
        %2345 = vmatmul.mubr.bf16.gmra.mrb[0].mxu0 %v2148
        %v2346 = vpop.f32.mrb[0].mxu0
        %v2347 = vadd.f32 %v2174, %v2346
        %v2348 = vpop.f32.mrb[0].mxu0
        %v2349 = vpop.f32.mrb[0].mxu0
        %v2350 = vadd.f32 %v2174, %v2349
        %v2351 = vpop.f32.mrb[0].mxu0
        %2352 = vmatprep.mubr.bf16.mxu0 0
        %2353 = vmatmul.mubr.bf16.gmra.mrb[0].mxu0 %v2149
        %v2354 = vpop.f32.mrb[0].mxu0
        %v2355 = vadd.f32 %v2174, %v2354
        %v2356 = vpop.f32.mrb[0].mxu0
        %v2357 = vpop.f32.mrb[0].mxu0
        %v2358 = vadd.f32 %v2174, %v2357
        %v2359 = vpop.f32.mrb[0].mxu0
        %2360 = vmatprep.mubr.bf16.mxu0 0
        %2361 = vmatmul.mubr.bf16.gmra.mrb[0].mxu0 %v2150
        %v2362 = vpop.f32.mrb[0].mxu0
        %v2363 = vadd.f32 %v2174, %v2362
        %v2364 = vpop.f32.mrb[0].mxu0
        %v2365 = vpop.f32.mrb[0].mxu0
        %v2366 = vadd.f32 %v2174, %v2365
        %v2367 = vpop.f32.mrb[0].mxu0
        %2368 = vmatprep.mubr.bf16.mxu0 0
        %2369 = vmatmul.mubr.bf16.gmra.mrb[0].mxu0 %v2151
        %v2370 = vpop.f32.mrb[0].mxu0
        %v2371 = vadd.f32 %v2174, %v2370
        %v2372 = vpop.f32.mrb[0].mxu0
        %v2373 = vpop.f32.mrb[0].mxu0
        %v2374 = vadd.f32 %v2174, %v2373
        %v2375 = vpop.f32.mrb[0].mxu0
        %2376 = vmatprep.mubr.bf16.mxu0 0
        %2377 = vmatmul.mubr.bf16.gmra.mrb[0].mxu0 %v2152
        %v2378 = vpop.f32.mrb[0].mxu0
        %v2379 = vadd.f32 %v2174, %v2378
        %v2380 = vpop.f32.mrb[0].mxu0
        %v2381 = vpop.f32.mrb[0].mxu0
        %v2382 = vadd.f32 %v2174, %v2381
        %v2383 = vpop.f32.mrb[0].mxu0
        %2384 = vdwg.mxu0
        %v2385 = vld [vmem:[%s11] sm:$0x1]
        %v2386 = vld [vmem:[%s12] sm:$0x1]
        %vm2387 = vcmask 523264
        %v2388 = vsel %vm2387, %v2259, 0.0
        %2389 = vadd.xlane.f32.xlu0 %v2388
        %v2390 = vpop.xlane.xlu0 %2389
        %v2391 = vsel %vm2387, %v2262, 0.0
        %2392 = vadd.xlane.f32.xlu0 %v2391
        %v2393 = vpop.xlane.xlu0 %2392
        %v2394 = vsel %vm2387, %v2267, 0.0
        %2395 = vadd.xlane.f32.xlu0 %v2394
        %v2396 = vpop.xlane.xlu0 %2395
        %v2397 = vsel %vm2387, %v2270, 0.0
        %2398 = vadd.xlane.f32.xlu0 %v2397
        %v2399 = vpop.xlane.xlu0 %2398
        %v2400 = vsel %vm2387, %v2275, 0.0
        %2401 = vadd.xlane.f32.xlu0 %v2400
        %v2402 = vpop.xlane.xlu0 %2401
        %v2403 = vsel %vm2387, %v2278, 0.0
        %2404 = vadd.xlane.f32.xlu0 %v2403
        %v2405 = vpop.xlane.xlu0 %2404
        %v2406 = vsel %vm2387, %v2283, 0.0
        %2407 = vadd.xlane.f32.xlu0 %v2406
        %v2408 = vpop.xlane.xlu0 %2407
        %v2409 = vsel %vm2387, %v2286, 0.0
        %2410 = vadd.xlane.f32.xlu0 %v2409
        %v2411 = vpop.xlane.xlu0 %2410
        %v2412 = vsel %vm2387, %v2291, 0.0
        %2413 = vadd.xlane.f32.xlu0 %v2412
        %v2414 = vpop.xlane.xlu0 %2413
        %v2415 = vsel %vm2387, %v2294, 0.0
        %2416 = vadd.xlane.f32.xlu0 %v2415
        %v2417 = vpop.xlane.xlu0 %2416
        %v2418 = vsel %vm2387, %v2299, 0.0
        %2419 = vadd.xlane.f32.xlu0 %v2418
        %v2420 = vpop.xlane.xlu0 %2419
        %v2421 = vsel %vm2387, %v2302, 0.0
        %2422 = vadd.xlane.f32.xlu0 %v2421
        %v2423 = vpop.xlane.xlu0 %2422
        %v2424 = vsel %vm2387, %v2307, 0.0
        %2425 = vadd.xlane.f32.xlu0 %v2424
        %v2426 = vpop.xlane.xlu0 %2425
        %v2427 = vsel %vm2387, %v2310, 0.0
        %2428 = vadd.xlane.f32.xlu0 %v2427
        %v2429 = vpop.xlane.xlu0 %2428
        %v2430 = vsel %vm2387, %v2315, 0.0
        %2431 = vadd.xlane.f32.xlu0 %v2430
        %v2432 = vpop.xlane.xlu0 %2431
        %v2433 = vsel %vm2387, %v2318, 0.0
        %2434 = vadd.xlane.f32.xlu0 %v2433
        %v2435 = vpop.xlane.xlu0 %2434
        %v2436 = vsel %vm2387, %v2323, 0.0
        %2437 = vadd.xlane.f32.xlu0 %v2436
        %v2438 = vpop.xlane.xlu0 %2437
        %v2439 = vsel %vm2387, %v2326, 0.0
        %2440 = vadd.xlane.f32.xlu0 %v2439
        %v2441 = vpop.xlane.xlu0 %2440
        %v2442 = vsel %vm2387, %v2331, 0.0
        %2443 = vadd.xlane.f32.xlu0 %v2442
        %v2444 = vpop.xlane.xlu0 %2443
        %v2445 = vsel %vm2387, %v2334, 0.0
        %2446 = vadd.xlane.f32.xlu0 %v2445
        %v2447 = vpop.xlane.xlu0 %2446
        %v2448 = vsel %vm2387, %v2339, 0.0
        %2449 = vadd.xlane.f32.xlu0 %v2448
        %v2450 = vpop.xlane.xlu0 %2449
        %v2451 = vsel %vm2387, %v2342, 0.0
        %2452 = vadd.xlane.f32.xlu0 %v2451
        %v2453 = vpop.xlane.xlu0 %2452
        %v2454 = vsel %vm2387, %v2347, 0.0
        %2455 = vadd.xlane.f32.xlu0 %v2454
        %v2456 = vpop.xlane.xlu0 %2455
        %v2457 = vsel %vm2387, %v2350, 0.0
        %2458 = vadd.xlane.f32.xlu0 %v2457
        %v2459 = vpop.xlane.xlu0 %2458
        %v2460 = vsel %vm2387, %v2355, 0.0
        %2461 = vadd.xlane.f32.xlu0 %v2460
        %v2462 = vpop.xlane.xlu0 %2461
        %v2463 = vsel %vm2387, %v2358, 0.0
        %2464 = vadd.xlane.f32.xlu0 %v2463
        %v2465 = vpop.xlane.xlu0 %2464
        %v2466 = vsel %vm2387, %v2363, 0.0
        %2467 = vadd.xlane.f32.xlu0 %v2466
        %v2468 = vpop.xlane.xlu0 %2467
        %v2469 = vsel %vm2387, %v2366, 0.0
        %2470 = vadd.xlane.f32.xlu0 %v2469
        %v2471 = vpop.xlane.xlu0 %2470
        %v2472 = vsel %vm2387, %v2371, 0.0
        %2473 = vadd.xlane.f32.xlu0 %v2472
        %v2474 = vpop.xlane.xlu0 %2473
        %v2475 = vsel %vm2387, %v2374, 0.0
        %2476 = vadd.xlane.f32.xlu0 %v2475
        %v2477 = vpop.xlane.xlu0 %2476
        %v2478 = vsel %vm2387, %v2379, 0.0
        %2479 = vadd.xlane.f32.xlu0 %v2478
        %v2480 = vpop.xlane.xlu0 %2479
        %v2481 = vsel %vm2387, %v2382, 0.0
        %2482 = vadd.xlane.f32.xlu0 %v2481
        %v2483 = vpop.xlane.xlu0 %2482
        %v2484 = vrcp.pop 64.0
        %v2485 = vmul.f32 %v2390, %v2484
        %v2486 = vmul.f32 %v2393, %v2484
        %v2487 = vmul.f32 %v2396, %v2484
        %v2488 = vmul.f32 %v2399, %v2484
        %v2489 = vmul.f32 %v2402, %v2484
        %v2490 = vmul.f32 %v2405, %v2484
        %v2491 = vmul.f32 %v2408, %v2484
        %v2492 = vmul.f32 %v2411, %v2484
        %v2493 = vmul.f32 %v2414, %v2484
        %v2494 = vmul.f32 %v2417, %v2484
        %v2495 = vmul.f32 %v2420, %v2484
        %v2496 = vmul.f32 %v2423, %v2484
        %v2497 = vmul.f32 %v2426, %v2484
        %v2498 = vmul.f32 %v2429, %v2484
        %v2499 = vmul.f32 %v2432, %v2484
        %v2500 = vmul.f32 %v2435, %v2484
        %v2501 = vmul.f32 %v2438, %v2484
        %v2502 = vmul.f32 %v2441, %v2484
        %v2503 = vmul.f32 %v2444, %v2484
        %v2504 = vmul.f32 %v2447, %v2484
        %v2505 = vmul.f32 %v2450, %v2484
        %v2506 = vmul.f32 %v2453, %v2484
        %v2507 = vmul.f32 %v2456, %v2484
        %v2508 = vmul.f32 %v2459, %v2484
        %v2509 = vmul.f32 %v2462, %v2484
        %v2510 = vmul.f32 %v2465, %v2484
        %v2511 = vmul.f32 %v2468, %v2484
        %v2512 = vmul.f32 %v2471, %v2484
        %v2513 = vmul.f32 %v2474, %v2484
        %v2514 = vmul.f32 %v2477, %v2484
        %v2515 = vmul.f32 %v2480, %v2484
        %v2516 = vmul.f32 %v2483, %v2484
        %v2517 = vmul.f32 %v2259, %v2259
        %v2518 = vmul.f32 %v2262, %v2262
        %v2519 = vmul.f32 %v2267, %v2267
        %v2520 = vmul.f32 %v2270, %v2270
        %v2521 = vmul.f32 %v2275, %v2275
        %v2522 = vmul.f32 %v2278, %v2278
        %v2523 = vmul.f32 %v2283, %v2283
        %v2524 = vmul.f32 %v2286, %v2286
        %v2525 = vmul.f32 %v2291, %v2291
        %v2526 = vmul.f32 %v2294, %v2294
        %v2527 = vmul.f32 %v2299, %v2299
        %v2528 = vmul.f32 %v2302, %v2302
        %v2529 = vmul.f32 %v2307, %v2307
        %v2530 = vmul.f32 %v2310, %v2310
        %v2531 = vmul.f32 %v2315, %v2315
        %v2532 = vmul.f32 %v2318, %v2318
        %v2533 = vmul.f32 %v2323, %v2323
        %v2534 = vmul.f32 %v2326, %v2326
        %v2535 = vmul.f32 %v2331, %v2331
        %v2536 = vmul.f32 %v2334, %v2334
        %v2537 = vmul.f32 %v2339, %v2339
        %v2538 = vmul.f32 %v2342, %v2342
        %v2539 = vmul.f32 %v2347, %v2347
        %v2540 = vmul.f32 %v2350, %v2350
        %v2541 = vmul.f32 %v2355, %v2355
        %v2542 = vmul.f32 %v2358, %v2358
        %v2543 = vmul.f32 %v2363, %v2363
        %v2544 = vmul.f32 %v2366, %v2366
        %v2545 = vmul.f32 %v2371, %v2371
        %v2546 = vmul.f32 %v2374, %v2374
        %v2547 = vmul.f32 %v2379, %v2379
        %v2548 = vmul.f32 %v2382, %v2382
        %v2549 = vsel %vm2387, %v2517, 0.0
        %2550 = vadd.xlane.f32.xlu0 %v2549
        %v2551 = vpop.xlane.xlu0 %2550
        %v2552 = vsel %vm2387, %v2518, 0.0
        %2553 = vadd.xlane.f32.xlu0 %v2552
        %v2554 = vpop.xlane.xlu0 %2553
        %v2555 = vsel %vm2387, %v2519, 0.0
        %2556 = vadd.xlane.f32.xlu0 %v2555
        %v2557 = vpop.xlane.xlu0 %2556
        %v2558 = vsel %vm2387, %v2520, 0.0
        %2559 = vadd.xlane.f32.xlu0 %v2558
        %v2560 = vpop.xlane.xlu0 %2559
        %v2561 = vsel %vm2387, %v2521, 0.0
        %2562 = vadd.xlane.f32.xlu0 %v2561
        %v2563 = vpop.xlane.xlu0 %2562
        %v2564 = vsel %vm2387, %v2522, 0.0
        %2565 = vadd.xlane.f32.xlu0 %v2564
        %v2566 = vpop.xlane.xlu0 %2565
        %v2567 = vsel %vm2387, %v2523, 0.0
        %2568 = vadd.xlane.f32.xlu0 %v2567
        %v2569 = vpop.xlane.xlu0 %2568
        %v2570 = vsel %vm2387, %v2524, 0.0
        %2571 = vadd.xlane.f32.xlu0 %v2570
        %v2572 = vpop.xlane.xlu0 %2571
        %v2573 = vsel %vm2387, %v2525, 0.0
        %2574 = vadd.xlane.f32.xlu0 %v2573
        %v2575 = vpop.xlane.xlu0 %2574
        %v2576 = vsel %vm2387, %v2526, 0.0
        %2577 = vadd.xlane.f32.xlu0 %v2576
        %v2578 = vpop.xlane.xlu0 %2577
        %v2579 = vsel %vm2387, %v2527, 0.0
        %2580 = vadd.xlane.f32.xlu0 %v2579
        %v2581 = vpop.xlane.xlu0 %2580
        %v2582 = vsel %vm2387, %v2528, 0.0
        %2583 = vadd.xlane.f32.xlu0 %v2582
        %v2584 = vpop.xlane.xlu0 %2583
        %v2585 = vsel %vm2387, %v2529, 0.0
        %2586 = vadd.xlane.f32.xlu0 %v2585
        %v2587 = vpop.xlane.xlu0 %2586
        %v2588 = vsel %vm2387, %v2530, 0.0
        %2589 = vadd.xlane.f32.xlu0 %v2588
        %v2590 = vpop.xlane.xlu0 %2589
        %v2591 = vsel %vm2387, %v2531, 0.0
        %2592 = vadd.xlane.f32.xlu0 %v2591
        %v2593 = vpop.xlane.xlu0 %2592
        %v2594 = vsel %vm2387, %v2532, 0.0
        %2595 = vadd.xlane.f32.xlu0 %v2594
        %v2596 = vpop.xlane.xlu0 %2595
        %v2597 = vsel %vm2387, %v2533, 0.0
        %2598 = vadd.xlane.f32.xlu0 %v2597
        %v2599 = vpop.xlane.xlu0 %2598
        %v2600 = vsel %vm2387, %v2534, 0.0
        %2601 = vadd.xlane.f32.xlu0 %v2600
        %v2602 = vpop.xlane.xlu0 %2601
        %v2603 = vsel %vm2387, %v2535, 0.0
        %2604 = vadd.xlane.f32.xlu0 %v2603
        %v2605 = vpop.xlane.xlu0 %2604
        %v2606 = vsel %vm2387, %v2536, 0.0
        %2607 = vadd.xlane.f32.xlu0 %v2606
        %v2608 = vpop.xlane.xlu0 %2607
        %v2609 = vsel %vm2387, %v2537, 0.0
        %2610 = vadd.xlane.f32.xlu0 %v2609
        %v2611 = vpop.xlane.xlu0 %2610
        %v2612 = vsel %vm2387, %v2538, 0.0
        %2613 = vadd.xlane.f32.xlu0 %v2612
        %v2614 = vpop.xlane.xlu0 %2613
        %v2615 = vsel %vm2387, %v2539, 0.0
        %2616 = vadd.xlane.f32.xlu0 %v2615
        %v2617 = vpop.xlane.xlu0 %2616
        %v2618 = vsel %vm2387, %v2540, 0.0
        %2619 = vadd.xlane.f32.xlu0 %v2618
        %v2620 = vpop.xlane.xlu0 %2619
        %v2621 = vsel %vm2387, %v2541, 0.0
        %2622 = vadd.xlane.f32.xlu0 %v2621
        %v2623 = vpop.xlane.xlu0 %2622
        %v2624 = vsel %vm2387, %v2542, 0.0
        %2625 = vadd.xlane.f32.xlu0 %v2624
        %v2626 = vpop.xlane.xlu0 %2625
        %v2627 = vsel %vm2387, %v2543, 0.0
        %2628 = vadd.xlane.f32.xlu0 %v2627
        %v2629 = vpop.xlane.xlu0 %2628
        %v2630 = vsel %vm2387, %v2544, 0.0
        %2631 = vadd.xlane.f32.xlu0 %v2630
        %v2632 = vpop.xlane.xlu0 %2631
        %v2633 = vsel %vm2387, %v2545, 0.0
        %2634 = vadd.xlane.f32.xlu0 %v2633
        %v2635 = vpop.xlane.xlu0 %2634
        %v2636 = vsel %vm2387, %v2546, 0.0
        %2637 = vadd.xlane.f32.xlu0 %v2636
        %v2638 = vpop.xlane.xlu0 %2637
        %v2639 = vsel %vm2387, %v2547, 0.0
        %2640 = vadd.xlane.f32.xlu0 %v2639
        %v2641 = vpop.xlane.xlu0 %2640
        %v2642 = vsel %vm2387, %v2548, 0.0
        %2643 = vadd.xlane.f32.xlu0 %v2642
        %v2644 = vpop.xlane.xlu0 %2643
        %v2645 = vmul.f32 %v2551, %v2484
        %v2646 = vmul.f32 %v2554, %v2484
        %v2647 = vmul.f32 %v2557, %v2484
        %v2648 = vmul.f32 %v2560, %v2484
        %v2649 = vmul.f32 %v2563, %v2484
        %v2650 = vmul.f32 %v2566, %v2484
        %v2651 = vmul.f32 %v2569, %v2484
        %v2652 = vmul.f32 %v2572, %v2484
        %v2653 = vmul.f32 %v2575, %v2484
        %v2654 = vmul.f32 %v2578, %v2484
        %v2655 = vmul.f32 %v2581, %v2484
        %v2656 = vmul.f32 %v2584, %v2484
        %v2657 = vmul.f32 %v2587, %v2484
        %v2658 = vmul.f32 %v2590, %v2484
        %v2659 = vmul.f32 %v2593, %v2484
        %v2660 = vmul.f32 %v2596, %v2484
        %v2661 = vmul.f32 %v2599, %v2484
        %v2662 = vmul.f32 %v2602, %v2484
        %v2663 = vmul.f32 %v2605, %v2484
        %v2664 = vmul.f32 %v2608, %v2484
        %v2665 = vmul.f32 %v2611, %v2484
        %v2666 = vmul.f32 %v2614, %v2484
        %v2667 = vmul.f32 %v2617, %v2484
        %v2668 = vmul.f32 %v2620, %v2484
        %v2669 = vmul.f32 %v2623, %v2484
        %v2670 = vmul.f32 %v2626, %v2484
        %v2671 = vmul.f32 %v2629, %v2484
        %v2672 = vmul.f32 %v2632, %v2484
        %v2673 = vmul.f32 %v2635, %v2484
        %v2674 = vmul.f32 %v2638, %v2484
        %v2675 = vmul.f32 %v2641, %v2484
        %v2676 = vmul.f32 %v2644, %v2484
        %v2677 = vmul.f32 %v2485, %v2485
        %v2678 = vmul.f32 %v2486, %v2486
        %v2679 = vmul.f32 %v2487, %v2487
        %v2680 = vmul.f32 %v2488, %v2488
        %v2681 = vmul.f32 %v2489, %v2489
        %v2682 = vmul.f32 %v2490, %v2490
        %v2683 = vmul.f32 %v2491, %v2491
        %v2684 = vmul.f32 %v2492, %v2492
        %v2685 = vmul.f32 %v2493, %v2493
        %v2686 = vmul.f32 %v2494, %v2494
        %v2687 = vmul.f32 %v2495, %v2495
        %v2688 = vmul.f32 %v2496, %v2496
        %v2689 = vmul.f32 %v2497, %v2497
        %v2690 = vmul.f32 %v2498, %v2498
        %v2691 = vmul.f32 %v2499, %v2499
        %v2692 = vmul.f32 %v2500, %v2500
        %v2693 = vmul.f32 %v2501, %v2501
        %v2694 = vmul.f32 %v2502, %v2502
        %v2695 = vmul.f32 %v2503, %v2503
        %v2696 = vmul.f32 %v2504, %v2504
        %v2697 = vmul.f32 %v2505, %v2505
        %v2698 = vmul.f32 %v2506, %v2506
        %v2699 = vmul.f32 %v2507, %v2507
        %v2700 = vmul.f32 %v2508, %v2508
        %v2701 = vmul.f32 %v2509, %v2509
        %v2702 = vmul.f32 %v2510, %v2510
        %v2703 = vmul.f32 %v2511, %v2511
        %v2704 = vmul.f32 %v2512, %v2512
        %v2705 = vmul.f32 %v2513, %v2513
        %v2706 = vmul.f32 %v2514, %v2514
        %v2707 = vmul.f32 %v2515, %v2515
        %v2708 = vmul.f32 %v2516, %v2516
        %v2709 = vsub.f32 %v2645, %v2677
        %v2710 = vsub.f32 %v2646, %v2678
        %v2711 = vsub.f32 %v2647, %v2679
        %v2712 = vsub.f32 %v2648, %v2680
        %v2713 = vsub.f32 %v2649, %v2681
        %v2714 = vsub.f32 %v2650, %v2682
        %v2715 = vsub.f32 %v2651, %v2683
        %v2716 = vsub.f32 %v2652, %v2684
        %v2717 = vsub.f32 %v2653, %v2685
        %v2718 = vsub.f32 %v2654, %v2686
        %v2719 = vsub.f32 %v2655, %v2687
        %v2720 = vsub.f32 %v2656, %v2688
        %v2721 = vsub.f32 %v2657, %v2689
        %v2722 = vsub.f32 %v2658, %v2690
        %v2723 = vsub.f32 %v2659, %v2691
        %v2724 = vsub.f32 %v2660, %v2692
        %v2725 = vsub.f32 %v2661, %v2693
        %v2726 = vsub.f32 %v2662, %v2694
        %v2727 = vsub.f32 %v2663, %v2695
        %v2728 = vsub.f32 %v2664, %v2696
        %v2729 = vsub.f32 %v2665, %v2697
        %v2730 = vsub.f32 %v2666, %v2698
        %v2731 = vsub.f32 %v2667, %v2699
        %v2732 = vsub.f32 %v2668, %v2700
        %v2733 = vsub.f32 %v2669, %v2701
        %v2734 = vsub.f32 %v2670, %v2702
        %v2735 = vsub.f32 %v2671, %v2703
        %v2736 = vsub.f32 %v2672, %v2704
        %v2737 = vsub.f32 %v2673, %v2705
        %v2738 = vsub.f32 %v2674, %v2706
        %v2739 = vsub.f32 %v2675, %v2707
        %v2740 = vsub.f32 %v2676, %v2708
        %v2741 = vmax.f32 %v2709, 0.0
        %v2742 = vmax.f32 %v2710, 0.0
        %v2743 = vmax.f32 %v2711, 0.0
        %v2744 = vmax.f32 %v2712, 0.0
        %v2745 = vmax.f32 %v2713, 0.0
        %v2746 = vmax.f32 %v2714, 0.0
        %v2747 = vmax.f32 %v2715, 0.0
        %v2748 = vmax.f32 %v2716, 0.0
        %v2749 = vmax.f32 %v2717, 0.0
        %v2750 = vmax.f32 %v2718, 0.0
        %v2751 = vmax.f32 %v2719, 0.0
        %v2752 = vmax.f32 %v2720, 0.0
        %v2753 = vmax.f32 %v2721, 0.0
        %v2754 = vmax.f32 %v2722, 0.0
        %v2755 = vmax.f32 %v2723, 0.0
        %v2756 = vmax.f32 %v2724, 0.0
        %v2757 = vmax.f32 %v2725, 0.0
        %v2758 = vmax.f32 %v2726, 0.0
        %v2759 = vmax.f32 %v2727, 0.0
        %v2760 = vmax.f32 %v2728, 0.0
        %v2761 = vmax.f32 %v2729, 0.0
        %v2762 = vmax.f32 %v2730, 0.0
        %v2763 = vmax.f32 %v2731, 0.0
        %v2764 = vmax.f32 %v2732, 0.0
        %v2765 = vmax.f32 %v2733, 0.0
        %v2766 = vmax.f32 %v2734, 0.0
        %v2767 = vmax.f32 %v2735, 0.0
        %v2768 = vmax.f32 %v2736, 0.0
        %v2769 = vmax.f32 %v2737, 0.0
        %v2770 = vmax.f32 %v2738, 0.0
        %v2771 = vmax.f32 %v2739, 0.0
        %v2772 = vmax.f32 %v2740, 0.0
        %v2773 = vadd.f32 %v2741, 1e-05
        %v2774 = vadd.f32 %v2742, 1e-05
        %v2775 = vadd.f32 %v2743, 1e-05
        %v2776 = vadd.f32 %v2744, 1e-05
        %v2777 = vadd.f32 %v2745, 1e-05
        %v2778 = vadd.f32 %v2746, 1e-05
        %v2779 = vadd.f32 %v2747, 1e-05
        %v2780 = vadd.f32 %v2748, 1e-05
        %v2781 = vadd.f32 %v2749, 1e-05
        %v2782 = vadd.f32 %v2750, 1e-05
        %v2783 = vadd.f32 %v2751, 1e-05
        %v2784 = vadd.f32 %v2752, 1e-05
        %v2785 = vadd.f32 %v2753, 1e-05
        %v2786 = vadd.f32 %v2754, 1e-05
        %v2787 = vadd.f32 %v2755, 1e-05
        %v2788 = vadd.f32 %v2756, 1e-05
        %v2789 = vadd.f32 %v2757, 1e-05
        %v2790 = vadd.f32 %v2758, 1e-05
        %v2791 = vadd.f32 %v2759, 1e-05
        %v2792 = vadd.f32 %v2760, 1e-05
        %v2793 = vadd.f32 %v2761, 1e-05
        %v2794 = vadd.f32 %v2762, 1e-05
        %v2795 = vadd.f32 %v2763, 1e-05
        %v2796 = vadd.f32 %v2764, 1e-05
        %v2797 = vadd.f32 %v2765, 1e-05
        %v2798 = vadd.f32 %v2766, 1e-05
        %v2799 = vadd.f32 %v2767, 1e-05
        %v2800 = vadd.f32 %v2768, 1e-05
        %v2801 = vadd.f32 %v2769, 1e-05
        %v2802 = vadd.f32 %v2770, 1e-05
        %v2803 = vadd.f32 %v2771, 1e-05
        %v2804 = vadd.f32 %v2772, 1e-05
        %v2805 = vrsqrt.pop %v2773
        %v2806 = vrsqrt.pop %v2774
        %v2807 = vrsqrt.pop %v2775
        %v2808 = vrsqrt.pop %v2776
        %v2809 = vrsqrt.pop %v2777
        %v2810 = vrsqrt.pop %v2778
        %v2811 = vrsqrt.pop %v2779
        %v2812 = vrsqrt.pop %v2780
        %v2813 = vrsqrt.pop %v2781
        %v2814 = vrsqrt.pop %v2782
        %v2815 = vrsqrt.pop %v2783
        %v2816 = vrsqrt.pop %v2784
        %v2817 = vrsqrt.pop %v2785
        %v2818 = vrsqrt.pop %v2786
        %v2819 = vrsqrt.pop %v2787
        %v2820 = vrsqrt.pop %v2788
        %v2821 = vrsqrt.pop %v2789
        %v2822 = vrsqrt.pop %v2790
        %v2823 = vrsqrt.pop %v2791
        %v2824 = vrsqrt.pop %v2792
        %v2825 = vrsqrt.pop %v2793
        %v2826 = vrsqrt.pop %v2794
        %v2827 = vrsqrt.pop %v2795
        %v2828 = vrsqrt.pop %v2796
        %v2829 = vrsqrt.pop %v2797
        %v2830 = vrsqrt.pop %v2798
        %v2831 = vrsqrt.pop %v2799
        %v2832 = vrsqrt.pop %v2800
        %v2833 = vrsqrt.pop %v2801
        %v2834 = vrsqrt.pop %v2802
        %v2835 = vrsqrt.pop %v2803
        %v2836 = vrsqrt.pop %v2804
        %v2837 = vsub.f32 %v2259, %v2485
        %v2838 = vsub.f32 %v2262, %v2486
        %v2839 = vsub.f32 %v2267, %v2487
        %v2840 = vsub.f32 %v2270, %v2488
        %v2841 = vsub.f32 %v2275, %v2489
        %v2842 = vsub.f32 %v2278, %v2490
        %v2843 = vsub.f32 %v2283, %v2491
        %v2844 = vsub.f32 %v2286, %v2492
        %v2845 = vsub.f32 %v2291, %v2493
        %v2846 = vsub.f32 %v2294, %v2494
        %v2847 = vsub.f32 %v2299, %v2495
        %v2848 = vsub.f32 %v2302, %v2496
        %v2849 = vsub.f32 %v2307, %v2497
        %v2850 = vsub.f32 %v2310, %v2498
        %v2851 = vsub.f32 %v2315, %v2499
        %v2852 = vsub.f32 %v2318, %v2500
        %v2853 = vsub.f32 %v2323, %v2501
        %v2854 = vsub.f32 %v2326, %v2502
        %v2855 = vsub.f32 %v2331, %v2503
        %v2856 = vsub.f32 %v2334, %v2504
        %v2857 = vsub.f32 %v2339, %v2505
        %v2858 = vsub.f32 %v2342, %v2506
        %v2859 = vsub.f32 %v2347, %v2507
        %v2860 = vsub.f32 %v2350, %v2508
        %v2861 = vsub.f32 %v2355, %v2509
        %v2862 = vsub.f32 %v2358, %v2510
        %v2863 = vsub.f32 %v2363, %v2511
        %v2864 = vsub.f32 %v2366, %v2512
        %v2865 = vsub.f32 %v2371, %v2513
        %v2866 = vsub.f32 %v2374, %v2514
        %v2867 = vsub.f32 %v2379, %v2515
        %v2868 = vsub.f32 %v2382, %v2516
        %v2869 = vmul.f32 %v2837, %v2805
        %v2870 = vmul.f32 %v2838, %v2806
        %v2871 = vmul.f32 %v2839, %v2807
        %v2872 = vmul.f32 %v2840, %v2808
        %v2873 = vmul.f32 %v2841, %v2809
        %v2874 = vmul.f32 %v2842, %v2810
        %v2875 = vmul.f32 %v2843, %v2811
        %v2876 = vmul.f32 %v2844, %v2812
        %v2877 = vmul.f32 %v2845, %v2813
        %v2878 = vmul.f32 %v2846, %v2814
        %v2879 = vmul.f32 %v2847, %v2815
        %v2880 = vmul.f32 %v2848, %v2816
        %v2881 = vmul.f32 %v2849, %v2817
        %v2882 = vmul.f32 %v2850, %v2818
        %v2883 = vmul.f32 %v2851, %v2819
        %v2884 = vmul.f32 %v2852, %v2820
        %v2885 = vmul.f32 %v2853, %v2821
        %v2886 = vmul.f32 %v2854, %v2822
        %v2887 = vmul.f32 %v2855, %v2823
        %v2888 = vmul.f32 %v2856, %v2824
        %v2889 = vmul.f32 %v2857, %v2825
        %v2890 = vmul.f32 %v2858, %v2826
        %v2891 = vmul.f32 %v2859, %v2827
        %v2892 = vmul.f32 %v2860, %v2828
        %v2893 = vmul.f32 %v2861, %v2829
        %v2894 = vmul.f32 %v2862, %v2830
        %v2895 = vmul.f32 %v2863, %v2831
        %v2896 = vmul.f32 %v2864, %v2832
        %v2897 = vmul.f32 %v2865, %v2833
        %v2898 = vmul.f32 %v2866, %v2834
        %v2899 = vmul.f32 %v2867, %v2835
        %v2900 = vmul.f32 %v2868, %v2836
        %v2902 = vlaneseq
        %v2903 = vshrl.u32 %v2902, 7
        %v2904 = vsub.s32 0, %v2903
        %v2905 = vrot.slane %v2385, %v2904
        %v2907 = vmul.f32 %v2869, %v2905
        %v2908 = vmul.f32 %v2870, %v2905
        %v2909 = vmul.f32 %v2871, %v2905
        %v2910 = vmul.f32 %v2872, %v2905
        %v2911 = vmul.f32 %v2873, %v2905
        %v2912 = vmul.f32 %v2874, %v2905
        %v2913 = vmul.f32 %v2875, %v2905
        %v2914 = vmul.f32 %v2876, %v2905
        %v2915 = vmul.f32 %v2877, %v2905
        %v2916 = vmul.f32 %v2878, %v2905
        %v2917 = vmul.f32 %v2879, %v2905
        %v2918 = vmul.f32 %v2880, %v2905
        %v2919 = vmul.f32 %v2881, %v2905
        %v2920 = vmul.f32 %v2882, %v2905
        %v2921 = vmul.f32 %v2883, %v2905
        %v2922 = vmul.f32 %v2884, %v2905
        %v2923 = vmul.f32 %v2885, %v2905
        %v2924 = vmul.f32 %v2886, %v2905
        %v2925 = vmul.f32 %v2887, %v2905
        %v2926 = vmul.f32 %v2888, %v2905
        %v2927 = vmul.f32 %v2889, %v2905
        %v2928 = vmul.f32 %v2890, %v2905
        %v2929 = vmul.f32 %v2891, %v2905
        %v2930 = vmul.f32 %v2892, %v2905
        %v2931 = vmul.f32 %v2893, %v2905
        %v2932 = vmul.f32 %v2894, %v2905
        %v2933 = vmul.f32 %v2895, %v2905
        %v2934 = vmul.f32 %v2896, %v2905
        %v2935 = vmul.f32 %v2897, %v2905
        %v2936 = vmul.f32 %v2898, %v2905
        %v2937 = vmul.f32 %v2899, %v2905
        %v2938 = vmul.f32 %v2900, %v2905
        %v2940 = vlaneseq
        %v2941 = vshrl.u32 %v2940, 7
        %v2942 = vsub.s32 0, %v2941
        %v2943 = vrot.slane %v2386, %v2942
        %v2945 = vadd.f32 %v2907, %v2943
        %v2946 = vadd.f32 %v2908, %v2943
        %v2947 = vadd.f32 %v2909, %v2943
        %v2948 = vadd.f32 %v2910, %v2943
        %v2949 = vadd.f32 %v2911, %v2943
        %v2950 = vadd.f32 %v2912, %v2943
        %v2951 = vadd.f32 %v2913, %v2943
        %v2952 = vadd.f32 %v2914, %v2943
        %v2953 = vadd.f32 %v2915, %v2943
        %v2954 = vadd.f32 %v2916, %v2943
        %v2955 = vadd.f32 %v2917, %v2943
        %v2956 = vadd.f32 %v2918, %v2943
        %v2957 = vadd.f32 %v2919, %v2943
        %v2958 = vadd.f32 %v2920, %v2943
        %v2959 = vadd.f32 %v2921, %v2943
        %v2960 = vadd.f32 %v2922, %v2943
        %v2961 = vadd.f32 %v2923, %v2943
        %v2962 = vadd.f32 %v2924, %v2943
        %v2963 = vadd.f32 %v2925, %v2943
        %v2964 = vadd.f32 %v2926, %v2943
        %v2965 = vadd.f32 %v2927, %v2943
        %v2966 = vadd.f32 %v2928, %v2943
        %v2967 = vadd.f32 %v2929, %v2943
        %v2968 = vadd.f32 %v2930, %v2943
        %v2969 = vadd.f32 %v2931, %v2943
        %v2970 = vadd.f32 %v2932, %v2943
        %v2971 = vadd.f32 %v2933, %v2943
        %v2972 = vadd.f32 %v2934, %v2943
        %v2973 = vadd.f32 %v2935, %v2943
        %v2974 = vadd.f32 %v2936, %v2943
        %v2975 = vadd.f32 %v2937, %v2943
        %v2976 = vadd.f32 %v2938, %v2943
        %v2977 = vmax.f32 %v2945, 0.0
        %v2978 = vmax.f32 %v2946, 0.0
        %v2979 = vmax.f32 %v2947, 0.0
        %v2980 = vmax.f32 %v2948, 0.0
        %v2981 = vmax.f32 %v2949, 0.0
        %v2982 = vmax.f32 %v2950, 0.0
        %v2983 = vmax.f32 %v2951, 0.0
        %v2984 = vmax.f32 %v2952, 0.0
        %v2985 = vmax.f32 %v2953, 0.0
        %v2986 = vmax.f32 %v2954, 0.0
        %v2987 = vmax.f32 %v2955, 0.0
        %v2988 = vmax.f32 %v2956, 0.0
        %v2989 = vmax.f32 %v2957, 0.0
        %v2990 = vmax.f32 %v2958, 0.0
        %v2991 = vmax.f32 %v2959, 0.0
        %v2992 = vmax.f32 %v2960, 0.0
        %v2993 = vmax.f32 %v2961, 0.0
        %v2994 = vmax.f32 %v2962, 0.0
        %v2995 = vmax.f32 %v2963, 0.0
        %v2996 = vmax.f32 %v2964, 0.0
        %v2997 = vmax.f32 %v2965, 0.0
        %v2998 = vmax.f32 %v2966, 0.0
        %v2999 = vmax.f32 %v2967, 0.0
        %v3000 = vmax.f32 %v2968, 0.0
        %v3001 = vmax.f32 %v2969, 0.0
        %v3002 = vmax.f32 %v2970, 0.0
        %v3003 = vmax.f32 %v2971, 0.0
        %v3004 = vmax.f32 %v2972, 0.0
        %v3005 = vmax.f32 %v2973, 0.0
        %v3006 = vmax.f32 %v2974, 0.0
        %v3007 = vmax.f32 %v2975, 0.0
        %v3008 = vmax.f32 %v2976, 0.0
        %v3009 = vpack.c.bf16 %v2978, %v2977
        %v3010 = vpack.c.bf16 %v2980, %v2979
        %v3011 = vpack.c.bf16 %v2982, %v2981
        %v3012 = vpack.c.bf16 %v2984, %v2983
        %v3013 = vpack.c.bf16 %v2986, %v2985
        %v3014 = vpack.c.bf16 %v2988, %v2987
        %v3015 = vpack.c.bf16 %v2990, %v2989
        %v3016 = vpack.c.bf16 %v2992, %v2991
        %v3017 = vpack.c.bf16 %v2994, %v2993
        %v3018 = vpack.c.bf16 %v2996, %v2995
        %v3019 = vpack.c.bf16 %v2998, %v2997
        %v3020 = vpack.c.bf16 %v3000, %v2999
        %v3021 = vpack.c.bf16 %v3002, %v3001
        %v3022 = vpack.c.bf16 %v3004, %v3003
        %v3023 = vpack.c.bf16 %v3006, %v3005
        %v3024 = vpack.c.bf16 %v3008, %v3007
        %v3025 = vld [vmem:[%s13] sm:$0x1]
        %v3026 = vunpack.c.l.bf16 %v3009
        %v3027 = vunpack.c.h.bf16 %v3009
        %v3028 = vunpack.c.l.bf16 %v3010
        %v3029 = vunpack.c.h.bf16 %v3010
        %v3030 = vunpack.c.l.bf16 %v3011
        %v3031 = vunpack.c.h.bf16 %v3011
        %v3032 = vunpack.c.l.bf16 %v3012
        %v3033 = vunpack.c.h.bf16 %v3012
        %v3034 = vunpack.c.l.bf16 %v3013
        %v3035 = vunpack.c.h.bf16 %v3013
        %v3036 = vunpack.c.l.bf16 %v3014
        %v3037 = vunpack.c.h.bf16 %v3014
        %v3038 = vunpack.c.l.bf16 %v3015
        %v3039 = vunpack.c.h.bf16 %v3015
        %v3040 = vunpack.c.l.bf16 %v3016
        %v3041 = vunpack.c.h.bf16 %v3016
        %v3042 = vunpack.c.l.bf16 %v3017
        %v3043 = vunpack.c.h.bf16 %v3017
        %v3044 = vunpack.c.l.bf16 %v3018
        %v3045 = vunpack.c.h.bf16 %v3018
        %v3046 = vunpack.c.l.bf16 %v3019
        %v3047 = vunpack.c.h.bf16 %v3019
        %v3048 = vunpack.c.l.bf16 %v3020
        %v3049 = vunpack.c.h.bf16 %v3020
        %v3050 = vunpack.c.l.bf16 %v3021
        %v3051 = vunpack.c.h.bf16 %v3021
        %v3052 = vunpack.c.l.bf16 %v3022
        %v3053 = vunpack.c.h.bf16 %v3022
        %v3054 = vunpack.c.l.bf16 %v3023
        %v3055 = vunpack.c.h.bf16 %v3023
        %v3056 = vunpack.c.l.bf16 %v3024
        %v3057 = vunpack.c.h.bf16 %v3024
        %v3059 = vlaneseq
        %v3060 = vshrl.u32 %v3059, 7
        %v3061 = vsub.s32 0, %v3060
        %v3062 = vrot.slane %v3025, %v3061
        %v3064 = vmul.f32 %v3026, %v3062
        %v3065 = vmul.f32 %v3027, %v3062
        %v3066 = vmul.f32 %v3028, %v3062
        %v3067 = vmul.f32 %v3029, %v3062
        %v3068 = vmul.f32 %v3030, %v3062
        %v3069 = vmul.f32 %v3031, %v3062
        %v3070 = vmul.f32 %v3032, %v3062
        %v3071 = vmul.f32 %v3033, %v3062
        %v3072 = vmul.f32 %v3034, %v3062
        %v3073 = vmul.f32 %v3035, %v3062
        %v3074 = vmul.f32 %v3036, %v3062
        %v3075 = vmul.f32 %v3037, %v3062
        %v3076 = vmul.f32 %v3038, %v3062
        %v3077 = vmul.f32 %v3039, %v3062
        %v3078 = vmul.f32 %v3040, %v3062
        %v3079 = vmul.f32 %v3041, %v3062
        %v3080 = vmul.f32 %v3042, %v3062
        %v3081 = vmul.f32 %v3043, %v3062
        %v3082 = vmul.f32 %v3044, %v3062
        %v3083 = vmul.f32 %v3045, %v3062
        %v3084 = vmul.f32 %v3046, %v3062
        %v3085 = vmul.f32 %v3047, %v3062
        %v3086 = vmul.f32 %v3048, %v3062
        %v3087 = vmul.f32 %v3049, %v3062
        %v3088 = vmul.f32 %v3050, %v3062
        %v3089 = vmul.f32 %v3051, %v3062
        %v3090 = vmul.f32 %v3052, %v3062
        %v3091 = vmul.f32 %v3053, %v3062
        %v3092 = vmul.f32 %v3054, %v3062
        %v3093 = vmul.f32 %v3055, %v3062
        %v3094 = vmul.f32 %v3056, %v3062
        %v3095 = vmul.f32 %v3057, %v3062
        %v3096 = vsel %vm2387, %v3064, 0.0
        %3097 = vadd.xlane.f32.xlu0 %v3096
        %v3098 = vpop.xlane.xlu0 %3097
        %v3099 = vsel %vm2387, %v3065, 0.0
        %3100 = vadd.xlane.f32.xlu0 %v3099
        %v3101 = vpop.xlane.xlu0 %3100
        %v3102 = vsel %vm2387, %v3066, 0.0
        %3103 = vadd.xlane.f32.xlu0 %v3102
        %v3104 = vpop.xlane.xlu0 %3103
        %v3105 = vsel %vm2387, %v3067, 0.0
        %3106 = vadd.xlane.f32.xlu0 %v3105
        %v3107 = vpop.xlane.xlu0 %3106
        %v3108 = vsel %vm2387, %v3068, 0.0
        %3109 = vadd.xlane.f32.xlu0 %v3108
        %v3110 = vpop.xlane.xlu0 %3109
        %v3111 = vsel %vm2387, %v3069, 0.0
        %3112 = vadd.xlane.f32.xlu0 %v3111
        %v3113 = vpop.xlane.xlu0 %3112
        %v3114 = vsel %vm2387, %v3070, 0.0
        %3115 = vadd.xlane.f32.xlu0 %v3114
        %v3116 = vpop.xlane.xlu0 %3115
        %v3117 = vsel %vm2387, %v3071, 0.0
        %3118 = vadd.xlane.f32.xlu0 %v3117
        %v3119 = vpop.xlane.xlu0 %3118
        %v3120 = vsel %vm2387, %v3072, 0.0
        %3121 = vadd.xlane.f32.xlu0 %v3120
        %v3122 = vpop.xlane.xlu0 %3121
        %v3123 = vsel %vm2387, %v3073, 0.0
        %3124 = vadd.xlane.f32.xlu0 %v3123
        %v3125 = vpop.xlane.xlu0 %3124
        %v3126 = vsel %vm2387, %v3074, 0.0
        %3127 = vadd.xlane.f32.xlu0 %v3126
        %v3128 = vpop.xlane.xlu0 %3127
        %v3129 = vsel %vm2387, %v3075, 0.0
        %3130 = vadd.xlane.f32.xlu0 %v3129
        %v3131 = vpop.xlane.xlu0 %3130
        %v3132 = vsel %vm2387, %v3076, 0.0
        %3133 = vadd.xlane.f32.xlu0 %v3132
        %v3134 = vpop.xlane.xlu0 %3133
        %v3135 = vsel %vm2387, %v3077, 0.0
        %3136 = vadd.xlane.f32.xlu0 %v3135
        %v3137 = vpop.xlane.xlu0 %3136
        %v3138 = vsel %vm2387, %v3078, 0.0
        %3139 = vadd.xlane.f32.xlu0 %v3138
        %v3140 = vpop.xlane.xlu0 %3139
        %v3141 = vsel %vm2387, %v3079, 0.0
        %3142 = vadd.xlane.f32.xlu0 %v3141
        %v3143 = vpop.xlane.xlu0 %3142
        %v3144 = vsel %vm2387, %v3080, 0.0
        %3145 = vadd.xlane.f32.xlu0 %v3144
        %v3146 = vpop.xlane.xlu0 %3145
        %v3147 = vsel %vm2387, %v3081, 0.0
        %3148 = vadd.xlane.f32.xlu0 %v3147
        %v3149 = vpop.xlane.xlu0 %3148
        %v3150 = vsel %vm2387, %v3082, 0.0
        %3151 = vadd.xlane.f32.xlu0 %v3150
        %v3152 = vpop.xlane.xlu0 %3151
        %v3153 = vsel %vm2387, %v3083, 0.0
        %3154 = vadd.xlane.f32.xlu0 %v3153
        %v3155 = vpop.xlane.xlu0 %3154
        %v3156 = vsel %vm2387, %v3084, 0.0
        %3157 = vadd.xlane.f32.xlu0 %v3156
        %v3158 = vpop.xlane.xlu0 %3157
        %v3159 = vsel %vm2387, %v3085, 0.0
        %3160 = vadd.xlane.f32.xlu0 %v3159
        %v3161 = vpop.xlane.xlu0 %3160
        %v3162 = vsel %vm2387, %v3086, 0.0
        %3163 = vadd.xlane.f32.xlu0 %v3162
        %v3164 = vpop.xlane.xlu0 %3163
        %v3165 = vsel %vm2387, %v3087, 0.0
        %3166 = vadd.xlane.f32.xlu0 %v3165
        %v3167 = vpop.xlane.xlu0 %3166
        %v3168 = vsel %vm2387, %v3088, 0.0
        %3169 = vadd.xlane.f32.xlu0 %v3168
        %v3170 = vpop.xlane.xlu0 %3169
        %v3171 = vsel %vm2387, %v3089, 0.0
        %3172 = vadd.xlane.f32.xlu0 %v3171
        %v3173 = vpop.xlane.xlu0 %3172
        %v3174 = vsel %vm2387, %v3090, 0.0
        %3175 = vadd.xlane.f32.xlu0 %v3174
        %v3176 = vpop.xlane.xlu0 %3175
        %v3177 = vsel %vm2387, %v3091, 0.0
        %3178 = vadd.xlane.f32.xlu0 %v3177
        %v3179 = vpop.xlane.xlu0 %3178
        %v3180 = vsel %vm2387, %v3092, 0.0
        %3181 = vadd.xlane.f32.xlu0 %v3180
        %v3182 = vpop.xlane.xlu0 %3181
        %v3183 = vsel %vm2387, %v3093, 0.0
        %3184 = vadd.xlane.f32.xlu0 %v3183
        %v3185 = vpop.xlane.xlu0 %3184
        %v3186 = vsel %vm2387, %v3094, 0.0
        %3187 = vadd.xlane.f32.xlu0 %v3186
        %v3188 = vpop.xlane.xlu0 %3187
        %v3189 = vsel %vm2387, %v3095, 0.0
        %3190 = vadd.xlane.f32.xlu0 %v3189
        %v3191 = vpop.xlane.xlu0 %3190
        %v3192 = vld [vmem:[#allocation2] sm:$0x1]
        %3194 = vset.pattern.permute.xlu0 0
        %3195 = vperm.xlu0 %3194, %v3192
        %v3196 = vpop.permute.xlu0 %3195
        %v3198 = vlaneseq
        %v3199 = vshrl.u32 %v3198, 7
        %v3200 = vsub.s32 0, %v3199
        %v3201 = vrot.slane %v3196, %v3200
        %v3202 = vadd.f32 %v3098, %v3201
        %v3203 = vadd.f32 %v3101, %v3201
        %v3204 = vadd.f32 %v3104, %v3201
        %v3205 = vadd.f32 %v3107, %v3201
        %v3206 = vadd.f32 %v3110, %v3201
        %v3207 = vadd.f32 %v3113, %v3201
        %v3208 = vadd.f32 %v3116, %v3201
        %v3209 = vadd.f32 %v3119, %v3201
        %v3210 = vadd.f32 %v3122, %v3201
        %v3211 = vadd.f32 %v3125, %v3201
        %v3212 = vadd.f32 %v3128, %v3201
        %v3213 = vadd.f32 %v3131, %v3201
        %v3214 = vadd.f32 %v3134, %v3201
        %v3215 = vadd.f32 %v3137, %v3201
        %v3216 = vadd.f32 %v3140, %v3201
        %v3217 = vadd.f32 %v3143, %v3201
        %v3218 = vadd.f32 %v3146, %v3201
        %v3219 = vadd.f32 %v3149, %v3201
        %v3220 = vadd.f32 %v3152, %v3201
        %v3221 = vadd.f32 %v3155, %v3201
        %v3222 = vadd.f32 %v3158, %v3201
        %v3223 = vadd.f32 %v3161, %v3201
        %v3224 = vadd.f32 %v3164, %v3201
        %v3225 = vadd.f32 %v3167, %v3201
        %v3226 = vadd.f32 %v3170, %v3201
        %v3227 = vadd.f32 %v3173, %v3201
        %v3228 = vadd.f32 %v3176, %v3201
        %v3229 = vadd.f32 %v3179, %v3201
        %v3230 = vadd.f32 %v3182, %v3201
        %v3231 = vadd.f32 %v3185, %v3201
        %v3232 = vadd.f32 %v3188, %v3201
        %v3233 = vadd.f32 %v3191, %v3201
        %v3266 = vlaneseq
        %v3267 = vshrl.u32 %v3266, 7
        %v3268 = vsub.s32 0, %v3267
        %v3269 = vrot.slane %v3202, %v3268
        %v3270 = vlaneseq
        %v3271 = vshrl.u32 %v3270, 7
        %v3272 = vsub.s32 1, %v3271
        %v3273 = vrot.slane %v3202, %v3272
        %v3274 = vlaneseq
        %v3275 = vshrl.u32 %v3274, 7
        %v3276 = vsub.s32 2, %v3275
        %v3277 = vrot.slane %v3202, %v3276
        %v3278 = vlaneseq
        %v3279 = vshrl.u32 %v3278, 7
        %v3280 = vsub.s32 3, %v3279
        %v3281 = vrot.slane %v3202, %v3280
        %v3282 = vlaneseq
        %v3283 = vshrl.u32 %v3282, 7
        %v3284 = vsub.s32 4, %v3283
        %v3285 = vrot.slane %v3202, %v3284
        %v3286 = vlaneseq
        %v3287 = vshrl.u32 %v3286, 7
        %v3288 = vsub.s32 5, %v3287
        %v3289 = vrot.slane %v3202, %v3288
        %v3290 = vlaneseq
        %v3291 = vshrl.u32 %v3290, 7
        %v3292 = vsub.s32 6, %v3291
        %v3293 = vrot.slane %v3202, %v3292
        %v3294 = vlaneseq
        %v3295 = vshrl.u32 %v3294, 7
        %v3296 = vsub.s32 7, %v3295
        %v3297 = vrot.slane %v3202, %v3296
        %v3298 = vlaneseq
        %v3299 = vshrl.u32 %v3298, 7
        %v3300 = vsub.s32 0, %v3299
        %v3301 = vrot.slane %v3203, %v3300
        %v3302 = vlaneseq
        %v3303 = vshrl.u32 %v3302, 7
        %v3304 = vsub.s32 1, %v3303
        %v3305 = vrot.slane %v3203, %v3304
        %v3306 = vlaneseq
        %v3307 = vshrl.u32 %v3306, 7
        %v3308 = vsub.s32 2, %v3307
        %v3309 = vrot.slane %v3203, %v3308
        %v3310 = vlaneseq
        %v3311 = vshrl.u32 %v3310, 7
        %v3312 = vsub.s32 3, %v3311
        %v3313 = vrot.slane %v3203, %v3312
        %v3314 = vlaneseq
        %v3315 = vshrl.u32 %v3314, 7
        %v3316 = vsub.s32 4, %v3315
        %v3317 = vrot.slane %v3203, %v3316
        %v3318 = vlaneseq
        %v3319 = vshrl.u32 %v3318, 7
        %v3320 = vsub.s32 5, %v3319
        %v3321 = vrot.slane %v3203, %v3320
        %v3322 = vlaneseq
        %v3323 = vshrl.u32 %v3322, 7
        %v3324 = vsub.s32 6, %v3323
        %v3325 = vrot.slane %v3203, %v3324
        %v3326 = vlaneseq
        %v3327 = vshrl.u32 %v3326, 7
        %v3328 = vsub.s32 7, %v3327
        %v3329 = vrot.slane %v3203, %v3328
        %v3330 = vlaneseq
        %v3331 = vshrl.u32 %v3330, 7
        %v3332 = vsub.s32 0, %v3331
        %v3333 = vrot.slane %v3204, %v3332
        %v3334 = vlaneseq
        %v3335 = vshrl.u32 %v3334, 7
        %v3336 = vsub.s32 1, %v3335
        %v3337 = vrot.slane %v3204, %v3336
        %v3338 = vlaneseq
        %v3339 = vshrl.u32 %v3338, 7
        %v3340 = vsub.s32 2, %v3339
        %v3341 = vrot.slane %v3204, %v3340
        %v3342 = vlaneseq
        %v3343 = vshrl.u32 %v3342, 7
        %v3344 = vsub.s32 3, %v3343
        %v3345 = vrot.slane %v3204, %v3344
        %v3346 = vlaneseq
        %v3347 = vshrl.u32 %v3346, 7
        %v3348 = vsub.s32 4, %v3347
        %v3349 = vrot.slane %v3204, %v3348
        %v3350 = vlaneseq
        %v3351 = vshrl.u32 %v3350, 7
        %v3352 = vsub.s32 5, %v3351
        %v3353 = vrot.slane %v3204, %v3352
        %v3354 = vlaneseq
        %v3355 = vshrl.u32 %v3354, 7
        %v3356 = vsub.s32 6, %v3355
        %v3357 = vrot.slane %v3204, %v3356
        %v3358 = vlaneseq
        %v3359 = vshrl.u32 %v3358, 7
        %v3360 = vsub.s32 7, %v3359
        %v3361 = vrot.slane %v3204, %v3360
        %v3362 = vlaneseq
        %v3363 = vshrl.u32 %v3362, 7
        %v3364 = vsub.s32 0, %v3363
        %v3365 = vrot.slane %v3205, %v3364
        %v3366 = vlaneseq
        %v3367 = vshrl.u32 %v3366, 7
        %v3368 = vsub.s32 1, %v3367
        %v3369 = vrot.slane %v3205, %v3368
        %v3370 = vlaneseq
        %v3371 = vshrl.u32 %v3370, 7
        %v3372 = vsub.s32 2, %v3371
        %v3373 = vrot.slane %v3205, %v3372
        %v3374 = vlaneseq
        %v3375 = vshrl.u32 %v3374, 7
        %v3376 = vsub.s32 3, %v3375
        %v3377 = vrot.slane %v3205, %v3376
        %v3378 = vlaneseq
        %v3379 = vshrl.u32 %v3378, 7
        %v3380 = vsub.s32 4, %v3379
        %v3381 = vrot.slane %v3205, %v3380
        %v3382 = vlaneseq
        %v3383 = vshrl.u32 %v3382, 7
        %v3384 = vsub.s32 5, %v3383
        %v3385 = vrot.slane %v3205, %v3384
        %v3386 = vlaneseq
        %v3387 = vshrl.u32 %v3386, 7
        %v3388 = vsub.s32 6, %v3387
        %v3389 = vrot.slane %v3205, %v3388
        %v3390 = vlaneseq
        %v3391 = vshrl.u32 %v3390, 7
        %v3392 = vsub.s32 7, %v3391
        %v3393 = vrot.slane %v3205, %v3392
        %v3394 = vlaneseq
        %v3395 = vshrl.u32 %v3394, 7
        %v3396 = vsub.s32 0, %v3395
        %v3397 = vrot.slane %v3206, %v3396
        %v3398 = vlaneseq
        %v3399 = vshrl.u32 %v3398, 7
        %v3400 = vsub.s32 1, %v3399
        %v3401 = vrot.slane %v3206, %v3400
        %v3402 = vlaneseq
        %v3403 = vshrl.u32 %v3402, 7
        %v3404 = vsub.s32 2, %v3403
        %v3405 = vrot.slane %v3206, %v3404
        %v3406 = vlaneseq
        %v3407 = vshrl.u32 %v3406, 7
        %v3408 = vsub.s32 3, %v3407
        %v3409 = vrot.slane %v3206, %v3408
        %v3410 = vlaneseq
        %v3411 = vshrl.u32 %v3410, 7
        %v3412 = vsub.s32 4, %v3411
        %v3413 = vrot.slane %v3206, %v3412
        %v3414 = vlaneseq
        %v3415 = vshrl.u32 %v3414, 7
        %v3416 = vsub.s32 5, %v3415
        %v3417 = vrot.slane %v3206, %v3416
        %v3418 = vlaneseq
        %v3419 = vshrl.u32 %v3418, 7
        %v3420 = vsub.s32 6, %v3419
        %v3421 = vrot.slane %v3206, %v3420
        %v3422 = vlaneseq
        %v3423 = vshrl.u32 %v3422, 7
        %v3424 = vsub.s32 7, %v3423
        %v3425 = vrot.slane %v3206, %v3424
        %v3426 = vlaneseq
        %v3427 = vshrl.u32 %v3426, 7
        %v3428 = vsub.s32 0, %v3427
        %v3429 = vrot.slane %v3207, %v3428
        %v3430 = vlaneseq
        %v3431 = vshrl.u32 %v3430, 7
        %v3432 = vsub.s32 1, %v3431
        %v3433 = vrot.slane %v3207, %v3432
        %v3434 = vlaneseq
        %v3435 = vshrl.u32 %v3434, 7
        %v3436 = vsub.s32 2, %v3435
        %v3437 = vrot.slane %v3207, %v3436
        %v3438 = vlaneseq
        %v3439 = vshrl.u32 %v3438, 7
        %v3440 = vsub.s32 3, %v3439
        %v3441 = vrot.slane %v3207, %v3440
        %v3442 = vlaneseq
        %v3443 = vshrl.u32 %v3442, 7
        %v3444 = vsub.s32 4, %v3443
        %v3445 = vrot.slane %v3207, %v3444
        %v3446 = vlaneseq
        %v3447 = vshrl.u32 %v3446, 7
        %v3448 = vsub.s32 5, %v3447
        %v3449 = vrot.slane %v3207, %v3448
        %v3450 = vlaneseq
        %v3451 = vshrl.u32 %v3450, 7
        %v3452 = vsub.s32 6, %v3451
        %v3453 = vrot.slane %v3207, %v3452
        %v3454 = vlaneseq
        %v3455 = vshrl.u32 %v3454, 7
        %v3456 = vsub.s32 7, %v3455
        %v3457 = vrot.slane %v3207, %v3456
        %v3458 = vlaneseq
        %v3459 = vshrl.u32 %v3458, 7
        %v3460 = vsub.s32 0, %v3459
        %v3461 = vrot.slane %v3208, %v3460
        %v3462 = vlaneseq
        %v3463 = vshrl.u32 %v3462, 7
        %v3464 = vsub.s32 1, %v3463
        %v3465 = vrot.slane %v3208, %v3464
        %v3466 = vlaneseq
        %v3467 = vshrl.u32 %v3466, 7
        %v3468 = vsub.s32 2, %v3467
        %v3469 = vrot.slane %v3208, %v3468
        %v3470 = vlaneseq
        %v3471 = vshrl.u32 %v3470, 7
        %v3472 = vsub.s32 3, %v3471
        %v3473 = vrot.slane %v3208, %v3472
        %v3474 = vlaneseq
        %v3475 = vshrl.u32 %v3474, 7
        %v3476 = vsub.s32 4, %v3475
        %v3477 = vrot.slane %v3208, %v3476
        %v3478 = vlaneseq
        %v3479 = vshrl.u32 %v3478, 7
        %v3480 = vsub.s32 5, %v3479
        %v3481 = vrot.slane %v3208, %v3480
        %v3482 = vlaneseq
        %v3483 = vshrl.u32 %v3482, 7
        %v3484 = vsub.s32 6, %v3483
        %v3485 = vrot.slane %v3208, %v3484
        %v3486 = vlaneseq
        %v3487 = vshrl.u32 %v3486, 7
        %v3488 = vsub.s32 7, %v3487
        %v3489 = vrot.slane %v3208, %v3488
        %v3490 = vlaneseq
        %v3491 = vshrl.u32 %v3490, 7
        %v3492 = vsub.s32 0, %v3491
        %v3493 = vrot.slane %v3209, %v3492
        %v3494 = vlaneseq
        %v3495 = vshrl.u32 %v3494, 7
        %v3496 = vsub.s32 1, %v3495
        %v3497 = vrot.slane %v3209, %v3496
        %v3498 = vlaneseq
        %v3499 = vshrl.u32 %v3498, 7
        %v3500 = vsub.s32 2, %v3499
        %v3501 = vrot.slane %v3209, %v3500
        %v3502 = vlaneseq
        %v3503 = vshrl.u32 %v3502, 7
        %v3504 = vsub.s32 3, %v3503
        %v3505 = vrot.slane %v3209, %v3504
        %v3506 = vlaneseq
        %v3507 = vshrl.u32 %v3506, 7
        %v3508 = vsub.s32 4, %v3507
        %v3509 = vrot.slane %v3209, %v3508
        %v3510 = vlaneseq
        %v3511 = vshrl.u32 %v3510, 7
        %v3512 = vsub.s32 5, %v3511
        %v3513 = vrot.slane %v3209, %v3512
        %v3514 = vlaneseq
        %v3515 = vshrl.u32 %v3514, 7
        %v3516 = vsub.s32 6, %v3515
        %v3517 = vrot.slane %v3209, %v3516
        %v3518 = vlaneseq
        %v3519 = vshrl.u32 %v3518, 7
        %v3520 = vsub.s32 7, %v3519
        %v3521 = vrot.slane %v3209, %v3520
        %v3522 = vlaneseq
        %v3523 = vshrl.u32 %v3522, 7
        %v3524 = vsub.s32 0, %v3523
        %v3525 = vrot.slane %v3210, %v3524
        %v3526 = vlaneseq
        %v3527 = vshrl.u32 %v3526, 7
        %v3528 = vsub.s32 1, %v3527
        %v3529 = vrot.slane %v3210, %v3528
        %v3530 = vlaneseq
        %v3531 = vshrl.u32 %v3530, 7
        %v3532 = vsub.s32 2, %v3531
        %v3533 = vrot.slane %v3210, %v3532
        %v3534 = vlaneseq
        %v3535 = vshrl.u32 %v3534, 7
        %v3536 = vsub.s32 3, %v3535
        %v3537 = vrot.slane %v3210, %v3536
        %v3538 = vlaneseq
        %v3539 = vshrl.u32 %v3538, 7
        %v3540 = vsub.s32 4, %v3539
        %v3541 = vrot.slane %v3210, %v3540
        %v3542 = vlaneseq
        %v3543 = vshrl.u32 %v3542, 7
        %v3544 = vsub.s32 5, %v3543
        %v3545 = vrot.slane %v3210, %v3544
        %v3546 = vlaneseq
        %v3547 = vshrl.u32 %v3546, 7
        %v3548 = vsub.s32 6, %v3547
        %v3549 = vrot.slane %v3210, %v3548
        %v3550 = vlaneseq
        %v3551 = vshrl.u32 %v3550, 7
        %v3552 = vsub.s32 7, %v3551
        %v3553 = vrot.slane %v3210, %v3552
        %v3554 = vlaneseq
        %v3555 = vshrl.u32 %v3554, 7
        %v3556 = vsub.s32 0, %v3555
        %v3557 = vrot.slane %v3211, %v3556
        %v3558 = vlaneseq
        %v3559 = vshrl.u32 %v3558, 7
        %v3560 = vsub.s32 1, %v3559
        %v3561 = vrot.slane %v3211, %v3560
        %v3562 = vlaneseq
        %v3563 = vshrl.u32 %v3562, 7
        %v3564 = vsub.s32 2, %v3563
        %v3565 = vrot.slane %v3211, %v3564
        %v3566 = vlaneseq
        %v3567 = vshrl.u32 %v3566, 7
        %v3568 = vsub.s32 3, %v3567
        %v3569 = vrot.slane %v3211, %v3568
        %v3570 = vlaneseq
        %v3571 = vshrl.u32 %v3570, 7
        %v3572 = vsub.s32 4, %v3571
        %v3573 = vrot.slane %v3211, %v3572
        %v3574 = vlaneseq
        %v3575 = vshrl.u32 %v3574, 7
        %v3576 = vsub.s32 5, %v3575
        %v3577 = vrot.slane %v3211, %v3576
        %v3578 = vlaneseq
        %v3579 = vshrl.u32 %v3578, 7
        %v3580 = vsub.s32 6, %v3579
        %v3581 = vrot.slane %v3211, %v3580
        %v3582 = vlaneseq
        %v3583 = vshrl.u32 %v3582, 7
        %v3584 = vsub.s32 7, %v3583
        %v3585 = vrot.slane %v3211, %v3584
        %v3586 = vlaneseq
        %v3587 = vshrl.u32 %v3586, 7
        %v3588 = vsub.s32 0, %v3587
        %v3589 = vrot.slane %v3212, %v3588
        %v3590 = vlaneseq
        %v3591 = vshrl.u32 %v3590, 7
        %v3592 = vsub.s32 1, %v3591
        %v3593 = vrot.slane %v3212, %v3592
        %v3594 = vlaneseq
        %v3595 = vshrl.u32 %v3594, 7
        %v3596 = vsub.s32 2, %v3595
        %v3597 = vrot.slane %v3212, %v3596
        %v3598 = vlaneseq
        %v3599 = vshrl.u32 %v3598, 7
        %v3600 = vsub.s32 3, %v3599
        %v3601 = vrot.slane %v3212, %v3600
        %v3602 = vlaneseq
        %v3603 = vshrl.u32 %v3602, 7
        %v3604 = vsub.s32 4, %v3603
        %v3605 = vrot.slane %v3212, %v3604
        %v3606 = vlaneseq
        %v3607 = vshrl.u32 %v3606, 7
        %v3608 = vsub.s32 5, %v3607
        %v3609 = vrot.slane %v3212, %v3608
        %v3610 = vlaneseq
        %v3611 = vshrl.u32 %v3610, 7
        %v3612 = vsub.s32 6, %v3611
        %v3613 = vrot.slane %v3212, %v3612
        %v3614 = vlaneseq
        %v3615 = vshrl.u32 %v3614, 7
        %v3616 = vsub.s32 7, %v3615
        %v3617 = vrot.slane %v3212, %v3616
        %v3618 = vlaneseq
        %v3619 = vshrl.u32 %v3618, 7
        %v3620 = vsub.s32 0, %v3619
        %v3621 = vrot.slane %v3213, %v3620
        %v3622 = vlaneseq
        %v3623 = vshrl.u32 %v3622, 7
        %v3624 = vsub.s32 1, %v3623
        %v3625 = vrot.slane %v3213, %v3624
        %v3626 = vlaneseq
        %v3627 = vshrl.u32 %v3626, 7
        %v3628 = vsub.s32 2, %v3627
        %v3629 = vrot.slane %v3213, %v3628
        %v3630 = vlaneseq
        %v3631 = vshrl.u32 %v3630, 7
        %v3632 = vsub.s32 3, %v3631
        %v3633 = vrot.slane %v3213, %v3632
        %v3634 = vlaneseq
        %v3635 = vshrl.u32 %v3634, 7
        %v3636 = vsub.s32 4, %v3635
        %v3637 = vrot.slane %v3213, %v3636
        %v3638 = vlaneseq
        %v3639 = vshrl.u32 %v3638, 7
        %v3640 = vsub.s32 5, %v3639
        %v3641 = vrot.slane %v3213, %v3640
        %v3642 = vlaneseq
        %v3643 = vshrl.u32 %v3642, 7
        %v3644 = vsub.s32 6, %v3643
        %v3645 = vrot.slane %v3213, %v3644
        %v3646 = vlaneseq
        %v3647 = vshrl.u32 %v3646, 7
        %v3648 = vsub.s32 7, %v3647
        %v3649 = vrot.slane %v3213, %v3648
        %v3650 = vlaneseq
        %v3651 = vshrl.u32 %v3650, 7
        %v3652 = vsub.s32 0, %v3651
        %v3653 = vrot.slane %v3214, %v3652
        %v3654 = vlaneseq
        %v3655 = vshrl.u32 %v3654, 7
        %v3656 = vsub.s32 1, %v3655
        %v3657 = vrot.slane %v3214, %v3656
        %v3658 = vlaneseq
        %v3659 = vshrl.u32 %v3658, 7
        %v3660 = vsub.s32 2, %v3659
        %v3661 = vrot.slane %v3214, %v3660
        %v3662 = vlaneseq
        %v3663 = vshrl.u32 %v3662, 7
        %v3664 = vsub.s32 3, %v3663
        %v3665 = vrot.slane %v3214, %v3664
        %v3666 = vlaneseq
        %v3667 = vshrl.u32 %v3666, 7
        %v3668 = vsub.s32 4, %v3667
        %v3669 = vrot.slane %v3214, %v3668
        %v3670 = vlaneseq
        %v3671 = vshrl.u32 %v3670, 7
        %v3672 = vsub.s32 5, %v3671
        %v3673 = vrot.slane %v3214, %v3672
        %v3674 = vlaneseq
        %v3675 = vshrl.u32 %v3674, 7
        %v3676 = vsub.s32 6, %v3675
        %v3677 = vrot.slane %v3214, %v3676
        %v3678 = vlaneseq
        %v3679 = vshrl.u32 %v3678, 7
        %v3680 = vsub.s32 7, %v3679
        %v3681 = vrot.slane %v3214, %v3680
        %v3682 = vlaneseq
        %v3683 = vshrl.u32 %v3682, 7
        %v3684 = vsub.s32 0, %v3683
        %v3685 = vrot.slane %v3215, %v3684
        %v3686 = vlaneseq
        %v3687 = vshrl.u32 %v3686, 7
        %v3688 = vsub.s32 1, %v3687
        %v3689 = vrot.slane %v3215, %v3688
        %v3690 = vlaneseq
        %v3691 = vshrl.u32 %v3690, 7
        %v3692 = vsub.s32 2, %v3691
        %v3693 = vrot.slane %v3215, %v3692
        %v3694 = vlaneseq
        %v3695 = vshrl.u32 %v3694, 7
        %v3696 = vsub.s32 3, %v3695
        %v3697 = vrot.slane %v3215, %v3696
        %v3698 = vlaneseq
        %v3699 = vshrl.u32 %v3698, 7
        %v3700 = vsub.s32 4, %v3699
        %v3701 = vrot.slane %v3215, %v3700
        %v3702 = vlaneseq
        %v3703 = vshrl.u32 %v3702, 7
        %v3704 = vsub.s32 5, %v3703
        %v3705 = vrot.slane %v3215, %v3704
        %v3706 = vlaneseq
        %v3707 = vshrl.u32 %v3706, 7
        %v3708 = vsub.s32 6, %v3707
        %v3709 = vrot.slane %v3215, %v3708
        %v3710 = vlaneseq
        %v3711 = vshrl.u32 %v3710, 7
        %v3712 = vsub.s32 7, %v3711
        %v3713 = vrot.slane %v3215, %v3712
        %v3714 = vlaneseq
        %v3715 = vshrl.u32 %v3714, 7
        %v3716 = vsub.s32 0, %v3715
        %v3717 = vrot.slane %v3216, %v3716
        %v3718 = vlaneseq
        %v3719 = vshrl.u32 %v3718, 7
        %v3720 = vsub.s32 1, %v3719
        %v3721 = vrot.slane %v3216, %v3720
        %v3722 = vlaneseq
        %v3723 = vshrl.u32 %v3722, 7
        %v3724 = vsub.s32 2, %v3723
        %v3725 = vrot.slane %v3216, %v3724
        %v3726 = vlaneseq
        %v3727 = vshrl.u32 %v3726, 7
        %v3728 = vsub.s32 3, %v3727
        %v3729 = vrot.slane %v3216, %v3728
        %v3730 = vlaneseq
        %v3731 = vshrl.u32 %v3730, 7
        %v3732 = vsub.s32 4, %v3731
        %v3733 = vrot.slane %v3216, %v3732
        %v3734 = vlaneseq
        %v3735 = vshrl.u32 %v3734, 7
        %v3736 = vsub.s32 5, %v3735
        %v3737 = vrot.slane %v3216, %v3736
        %v3738 = vlaneseq
        %v3739 = vshrl.u32 %v3738, 7
        %v3740 = vsub.s32 6, %v3739
        %v3741 = vrot.slane %v3216, %v3740
        %v3742 = vlaneseq
        %v3743 = vshrl.u32 %v3742, 7
        %v3744 = vsub.s32 7, %v3743
        %v3745 = vrot.slane %v3216, %v3744
        %v3746 = vlaneseq
        %v3747 = vshrl.u32 %v3746, 7
        %v3748 = vsub.s32 0, %v3747
        %v3749 = vrot.slane %v3217, %v3748
        %v3750 = vlaneseq
        %v3751 = vshrl.u32 %v3750, 7
        %v3752 = vsub.s32 1, %v3751
        %v3753 = vrot.slane %v3217, %v3752
        %v3754 = vlaneseq
        %v3755 = vshrl.u32 %v3754, 7
        %v3756 = vsub.s32 2, %v3755
        %v3757 = vrot.slane %v3217, %v3756
        %v3758 = vlaneseq
        %v3759 = vshrl.u32 %v3758, 7
        %v3760 = vsub.s32 3, %v3759
        %v3761 = vrot.slane %v3217, %v3760
        %v3762 = vlaneseq
        %v3763 = vshrl.u32 %v3762, 7
        %v3764 = vsub.s32 4, %v3763
        %v3765 = vrot.slane %v3217, %v3764
        %v3766 = vlaneseq
        %v3767 = vshrl.u32 %v3766, 7
        %v3768 = vsub.s32 5, %v3767
        %v3769 = vrot.slane %v3217, %v3768
        %v3770 = vlaneseq
        %v3771 = vshrl.u32 %v3770, 7
        %v3772 = vsub.s32 6, %v3771
        %v3773 = vrot.slane %v3217, %v3772
        %v3774 = vlaneseq
        %v3775 = vshrl.u32 %v3774, 7
        %v3776 = vsub.s32 7, %v3775
        %v3777 = vrot.slane %v3217, %v3776
        %v3778 = vlaneseq
        %v3779 = vshrl.u32 %v3778, 7
        %v3780 = vsub.s32 0, %v3779
        %v3781 = vrot.slane %v3218, %v3780
        %v3782 = vlaneseq
        %v3783 = vshrl.u32 %v3782, 7
        %v3784 = vsub.s32 1, %v3783
        %v3785 = vrot.slane %v3218, %v3784
        %v3786 = vlaneseq
        %v3787 = vshrl.u32 %v3786, 7
        %v3788 = vsub.s32 2, %v3787
        %v3789 = vrot.slane %v3218, %v3788
        %v3790 = vlaneseq
        %v3791 = vshrl.u32 %v3790, 7
        %v3792 = vsub.s32 3, %v3791
        %v3793 = vrot.slane %v3218, %v3792
        %v3794 = vlaneseq
        %v3795 = vshrl.u32 %v3794, 7
        %v3796 = vsub.s32 4, %v3795
        %v3797 = vrot.slane %v3218, %v3796
        %v3798 = vlaneseq
        %v3799 = vshrl.u32 %v3798, 7
        %v3800 = vsub.s32 5, %v3799
        %v3801 = vrot.slane %v3218, %v3800
        %v3802 = vlaneseq
        %v3803 = vshrl.u32 %v3802, 7
        %v3804 = vsub.s32 6, %v3803
        %v3805 = vrot.slane %v3218, %v3804
        %v3806 = vlaneseq
        %v3807 = vshrl.u32 %v3806, 7
        %v3808 = vsub.s32 7, %v3807
        %v3809 = vrot.slane %v3218, %v3808
        %v3810 = vlaneseq
        %v3811 = vshrl.u32 %v3810, 7
        %v3812 = vsub.s32 0, %v3811
        %v3813 = vrot.slane %v3219, %v3812
        %v3814 = vlaneseq
        %v3815 = vshrl.u32 %v3814, 7
        %v3816 = vsub.s32 1, %v3815
        %v3817 = vrot.slane %v3219, %v3816
        %v3818 = vlaneseq
        %v3819 = vshrl.u32 %v3818, 7
        %v3820 = vsub.s32 2, %v3819
        %v3821 = vrot.slane %v3219, %v3820
        %v3822 = vlaneseq
        %v3823 = vshrl.u32 %v3822, 7
        %v3824 = vsub.s32 3, %v3823
        %v3825 = vrot.slane %v3219, %v3824
        %v3826 = vlaneseq
        %v3827 = vshrl.u32 %v3826, 7
        %v3828 = vsub.s32 4, %v3827
        %v3829 = vrot.slane %v3219, %v3828
        %v3830 = vlaneseq
        %v3831 = vshrl.u32 %v3830, 7
        %v3832 = vsub.s32 5, %v3831
        %v3833 = vrot.slane %v3219, %v3832
        %v3834 = vlaneseq
        %v3835 = vshrl.u32 %v3834, 7
        %v3836 = vsub.s32 6, %v3835
        %v3837 = vrot.slane %v3219, %v3836
        %v3838 = vlaneseq
        %v3839 = vshrl.u32 %v3838, 7
        %v3840 = vsub.s32 7, %v3839
        %v3841 = vrot.slane %v3219, %v3840
        %v3842 = vlaneseq
        %v3843 = vshrl.u32 %v3842, 7
        %v3844 = vsub.s32 0, %v3843
        %v3845 = vrot.slane %v3220, %v3844
        %v3846 = vlaneseq
        %v3847 = vshrl.u32 %v3846, 7
        %v3848 = vsub.s32 1, %v3847
        %v3849 = vrot.slane %v3220, %v3848
        %v3850 = vlaneseq
        %v3851 = vshrl.u32 %v3850, 7
        %v3852 = vsub.s32 2, %v3851
        %v3853 = vrot.slane %v3220, %v3852
        %v3854 = vlaneseq
        %v3855 = vshrl.u32 %v3854, 7
        %v3856 = vsub.s32 3, %v3855
        %v3857 = vrot.slane %v3220, %v3856
        %v3858 = vlaneseq
        %v3859 = vshrl.u32 %v3858, 7
        %v3860 = vsub.s32 4, %v3859
        %v3861 = vrot.slane %v3220, %v3860
        %v3862 = vlaneseq
        %v3863 = vshrl.u32 %v3862, 7
        %v3864 = vsub.s32 5, %v3863
        %v3865 = vrot.slane %v3220, %v3864
        %v3866 = vlaneseq
        %v3867 = vshrl.u32 %v3866, 7
        %v3868 = vsub.s32 6, %v3867
        %v3869 = vrot.slane %v3220, %v3868
        %v3870 = vlaneseq
        %v3871 = vshrl.u32 %v3870, 7
        %v3872 = vsub.s32 7, %v3871
        %v3873 = vrot.slane %v3220, %v3872
        %v3874 = vlaneseq
        %v3875 = vshrl.u32 %v3874, 7
        %v3876 = vsub.s32 0, %v3875
        %v3877 = vrot.slane %v3221, %v3876
        %v3878 = vlaneseq
        %v3879 = vshrl.u32 %v3878, 7
        %v3880 = vsub.s32 1, %v3879
        %v3881 = vrot.slane %v3221, %v3880
        %v3882 = vlaneseq
        %v3883 = vshrl.u32 %v3882, 7
        %v3884 = vsub.s32 2, %v3883
        %v3885 = vrot.slane %v3221, %v3884
        %v3886 = vlaneseq
        %v3887 = vshrl.u32 %v3886, 7
        %v3888 = vsub.s32 3, %v3887
        %v3889 = vrot.slane %v3221, %v3888
        %v3890 = vlaneseq
        %v3891 = vshrl.u32 %v3890, 7
        %v3892 = vsub.s32 4, %v3891
        %v3893 = vrot.slane %v3221, %v3892
        %v3894 = vlaneseq
        %v3895 = vshrl.u32 %v3894, 7
        %v3896 = vsub.s32 5, %v3895
        %v3897 = vrot.slane %v3221, %v3896
        %v3898 = vlaneseq
        %v3899 = vshrl.u32 %v3898, 7
        %v3900 = vsub.s32 6, %v3899
        %v3901 = vrot.slane %v3221, %v3900
        %v3902 = vlaneseq
        %v3903 = vshrl.u32 %v3902, 7
        %v3904 = vsub.s32 7, %v3903
        %v3905 = vrot.slane %v3221, %v3904
        %v3906 = vlaneseq
        %v3907 = vshrl.u32 %v3906, 7
        %v3908 = vsub.s32 0, %v3907
        %v3909 = vrot.slane %v3222, %v3908
        %v3910 = vlaneseq
        %v3911 = vshrl.u32 %v3910, 7
        %v3912 = vsub.s32 1, %v3911
        %v3913 = vrot.slane %v3222, %v3912
        %v3914 = vlaneseq
        %v3915 = vshrl.u32 %v3914, 7
        %v3916 = vsub.s32 2, %v3915
        %v3917 = vrot.slane %v3222, %v3916
        %v3918 = vlaneseq
        %v3919 = vshrl.u32 %v3918, 7
        %v3920 = vsub.s32 3, %v3919
        %v3921 = vrot.slane %v3222, %v3920
        %v3922 = vlaneseq
        %v3923 = vshrl.u32 %v3922, 7
        %v3924 = vsub.s32 4, %v3923
        %v3925 = vrot.slane %v3222, %v3924
        %v3926 = vlaneseq
        %v3927 = vshrl.u32 %v3926, 7
        %v3928 = vsub.s32 5, %v3927
        %v3929 = vrot.slane %v3222, %v3928
        %v3930 = vlaneseq
        %v3931 = vshrl.u32 %v3930, 7
        %v3932 = vsub.s32 6, %v3931
        %v3933 = vrot.slane %v3222, %v3932
        %v3934 = vlaneseq
        %v3935 = vshrl.u32 %v3934, 7
        %v3936 = vsub.s32 7, %v3935
        %v3937 = vrot.slane %v3222, %v3936
        %v3938 = vlaneseq
        %v3939 = vshrl.u32 %v3938, 7
        %v3940 = vsub.s32 0, %v3939
        %v3941 = vrot.slane %v3223, %v3940
        %v3942 = vlaneseq
        %v3943 = vshrl.u32 %v3942, 7
        %v3944 = vsub.s32 1, %v3943
        %v3945 = vrot.slane %v3223, %v3944
        %v3946 = vlaneseq
        %v3947 = vshrl.u32 %v3946, 7
        %v3948 = vsub.s32 2, %v3947
        %v3949 = vrot.slane %v3223, %v3948
        %v3950 = vlaneseq
        %v3951 = vshrl.u32 %v3950, 7
        %v3952 = vsub.s32 3, %v3951
        %v3953 = vrot.slane %v3223, %v3952
        %v3954 = vlaneseq
        %v3955 = vshrl.u32 %v3954, 7
        %v3956 = vsub.s32 4, %v3955
        %v3957 = vrot.slane %v3223, %v3956
        %v3958 = vlaneseq
        %v3959 = vshrl.u32 %v3958, 7
        %v3960 = vsub.s32 5, %v3959
        %v3961 = vrot.slane %v3223, %v3960
        %v3962 = vlaneseq
        %v3963 = vshrl.u32 %v3962, 7
        %v3964 = vsub.s32 6, %v3963
        %v3965 = vrot.slane %v3223, %v3964
        %v3966 = vlaneseq
        %v3967 = vshrl.u32 %v3966, 7
        %v3968 = vsub.s32 7, %v3967
        %v3969 = vrot.slane %v3223, %v3968
        %v3970 = vlaneseq
        %v3971 = vshrl.u32 %v3970, 7
        %v3972 = vsub.s32 0, %v3971
        %v3973 = vrot.slane %v3224, %v3972
        %v3974 = vlaneseq
        %v3975 = vshrl.u32 %v3974, 7
        %v3976 = vsub.s32 1, %v3975
        %v3977 = vrot.slane %v3224, %v3976
        %v3978 = vlaneseq
        %v3979 = vshrl.u32 %v3978, 7
        %v3980 = vsub.s32 2, %v3979
        %v3981 = vrot.slane %v3224, %v3980
        %v3982 = vlaneseq
        %v3983 = vshrl.u32 %v3982, 7
        %v3984 = vsub.s32 3, %v3983
        %v3985 = vrot.slane %v3224, %v3984
        %v3986 = vlaneseq
        %v3987 = vshrl.u32 %v3986, 7
        %v3988 = vsub.s32 4, %v3987
        %v3989 = vrot.slane %v3224, %v3988
        %v3990 = vlaneseq
        %v3991 = vshrl.u32 %v3990, 7
        %v3992 = vsub.s32 5, %v3991
        %v3993 = vrot.slane %v3224, %v3992
        %v3994 = vlaneseq
        %v3995 = vshrl.u32 %v3994, 7
        %v3996 = vsub.s32 6, %v3995
        %v3997 = vrot.slane %v3224, %v3996
        %v3998 = vlaneseq
        %v3999 = vshrl.u32 %v3998, 7
        %v4000 = vsub.s32 7, %v3999
        %v4001 = vrot.slane %v3224, %v4000
        %v4002 = vlaneseq
        %v4003 = vshrl.u32 %v4002, 7
        %v4004 = vsub.s32 0, %v4003
        %v4005 = vrot.slane %v3225, %v4004
        %v4006 = vlaneseq
        %v4007 = vshrl.u32 %v4006, 7
        %v4008 = vsub.s32 1, %v4007
        %v4009 = vrot.slane %v3225, %v4008
        %v4010 = vlaneseq
        %v4011 = vshrl.u32 %v4010, 7
        %v4012 = vsub.s32 2, %v4011
        %v4013 = vrot.slane %v3225, %v4012
        %v4014 = vlaneseq
        %v4015 = vshrl.u32 %v4014, 7
        %v4016 = vsub.s32 3, %v4015
        %v4017 = vrot.slane %v3225, %v4016
        %v4018 = vlaneseq
        %v4019 = vshrl.u32 %v4018, 7
        %v4020 = vsub.s32 4, %v4019
        %v4021 = vrot.slane %v3225, %v4020
        %v4022 = vlaneseq
        %v4023 = vshrl.u32 %v4022, 7
        %v4024 = vsub.s32 5, %v4023
        %v4025 = vrot.slane %v3225, %v4024
        %v4026 = vlaneseq
        %v4027 = vshrl.u32 %v4026, 7
        %v4028 = vsub.s32 6, %v4027
        %v4029 = vrot.slane %v3225, %v4028
        %v4030 = vlaneseq
        %v4031 = vshrl.u32 %v4030, 7
        %v4032 = vsub.s32 7, %v4031
        %v4033 = vrot.slane %v3225, %v4032
        %v4034 = vlaneseq
        %v4035 = vshrl.u32 %v4034, 7
        %v4036 = vsub.s32 0, %v4035
        %v4037 = vrot.slane %v3226, %v4036
        %v4038 = vlaneseq
        %v4039 = vshrl.u32 %v4038, 7
        %v4040 = vsub.s32 1, %v4039
        %v4041 = vrot.slane %v3226, %v4040
        %v4042 = vlaneseq
        %v4043 = vshrl.u32 %v4042, 7
        %v4044 = vsub.s32 2, %v4043
        %v4045 = vrot.slane %v3226, %v4044
        %v4046 = vlaneseq
        %v4047 = vshrl.u32 %v4046, 7
        %v4048 = vsub.s32 3, %v4047
        %v4049 = vrot.slane %v3226, %v4048
        %v4050 = vlaneseq
        %v4051 = vshrl.u32 %v4050, 7
        %v4052 = vsub.s32 4, %v4051
        %v4053 = vrot.slane %v3226, %v4052
        %v4054 = vlaneseq
        %v4055 = vshrl.u32 %v4054, 7
        %v4056 = vsub.s32 5, %v4055
        %v4057 = vrot.slane %v3226, %v4056
        %v4058 = vlaneseq
        %v4059 = vshrl.u32 %v4058, 7
        %v4060 = vsub.s32 6, %v4059
        %v4061 = vrot.slane %v3226, %v4060
        %v4062 = vlaneseq
        %v4063 = vshrl.u32 %v4062, 7
        %v4064 = vsub.s32 7, %v4063
        %v4065 = vrot.slane %v3226, %v4064
        %v4066 = vlaneseq
        %v4067 = vshrl.u32 %v4066, 7
        %v4068 = vsub.s32 0, %v4067
        %v4069 = vrot.slane %v3227, %v4068
        %v4070 = vlaneseq
        %v4071 = vshrl.u32 %v4070, 7
        %v4072 = vsub.s32 1, %v4071
        %v4073 = vrot.slane %v3227, %v4072
        %v4074 = vlaneseq
        %v4075 = vshrl.u32 %v4074, 7
        %v4076 = vsub.s32 2, %v4075
        %v4077 = vrot.slane %v3227, %v4076
        %v4078 = vlaneseq
        %v4079 = vshrl.u32 %v4078, 7
        %v4080 = vsub.s32 3, %v4079
        %v4081 = vrot.slane %v3227, %v4080
        %v4082 = vlaneseq
        %v4083 = vshrl.u32 %v4082, 7
        %v4084 = vsub.s32 4, %v4083
        %v4085 = vrot.slane %v3227, %v4084
        %v4086 = vlaneseq
        %v4087 = vshrl.u32 %v4086, 7
        %v4088 = vsub.s32 5, %v4087
        %v4089 = vrot.slane %v3227, %v4088
        %v4090 = vlaneseq
        %v4091 = vshrl.u32 %v4090, 7
        %v4092 = vsub.s32 6, %v4091
        %v4093 = vrot.slane %v3227, %v4092
        %v4094 = vlaneseq
        %v4095 = vshrl.u32 %v4094, 7
        %v4096 = vsub.s32 7, %v4095
        %v4097 = vrot.slane %v3227, %v4096
        %v4098 = vlaneseq
        %v4099 = vshrl.u32 %v4098, 7
        %v4100 = vsub.s32 0, %v4099
        %v4101 = vrot.slane %v3228, %v4100
        %v4102 = vlaneseq
        %v4103 = vshrl.u32 %v4102, 7
        %v4104 = vsub.s32 1, %v4103
        %v4105 = vrot.slane %v3228, %v4104
        %v4106 = vlaneseq
        %v4107 = vshrl.u32 %v4106, 7
        %v4108 = vsub.s32 2, %v4107
        %v4109 = vrot.slane %v3228, %v4108
        %v4110 = vlaneseq
        %v4111 = vshrl.u32 %v4110, 7
        %v4112 = vsub.s32 3, %v4111
        %v4113 = vrot.slane %v3228, %v4112
        %v4114 = vlaneseq
        %v4115 = vshrl.u32 %v4114, 7
        %v4116 = vsub.s32 4, %v4115
        %v4117 = vrot.slane %v3228, %v4116
        %v4118 = vlaneseq
        %v4119 = vshrl.u32 %v4118, 7
        %v4120 = vsub.s32 5, %v4119
        %v4121 = vrot.slane %v3228, %v4120
        %v4122 = vlaneseq
        %v4123 = vshrl.u32 %v4122, 7
        %v4124 = vsub.s32 6, %v4123
        %v4125 = vrot.slane %v3228, %v4124
        %v4126 = vlaneseq
        %v4127 = vshrl.u32 %v4126, 7
        %v4128 = vsub.s32 7, %v4127
        %v4129 = vrot.slane %v3228, %v4128
        %v4130 = vlaneseq
        %v4131 = vshrl.u32 %v4130, 7
        %v4132 = vsub.s32 0, %v4131
        %v4133 = vrot.slane %v3229, %v4132
        %v4134 = vlaneseq
        %v4135 = vshrl.u32 %v4134, 7
        %v4136 = vsub.s32 1, %v4135
        %v4137 = vrot.slane %v3229, %v4136
        %v4138 = vlaneseq
        %v4139 = vshrl.u32 %v4138, 7
        %v4140 = vsub.s32 2, %v4139
        %v4141 = vrot.slane %v3229, %v4140
        %v4142 = vlaneseq
        %v4143 = vshrl.u32 %v4142, 7
        %v4144 = vsub.s32 3, %v4143
        %v4145 = vrot.slane %v3229, %v4144
        %v4146 = vlaneseq
        %v4147 = vshrl.u32 %v4146, 7
        %v4148 = vsub.s32 4, %v4147
        %v4149 = vrot.slane %v3229, %v4148
        %v4150 = vlaneseq
        %v4151 = vshrl.u32 %v4150, 7
        %v4152 = vsub.s32 5, %v4151
        %v4153 = vrot.slane %v3229, %v4152
        %v4154 = vlaneseq
        %v4155 = vshrl.u32 %v4154, 7
        %v4156 = vsub.s32 6, %v4155
        %v4157 = vrot.slane %v3229, %v4156
        %v4158 = vlaneseq
        %v4159 = vshrl.u32 %v4158, 7
        %v4160 = vsub.s32 7, %v4159
        %v4161 = vrot.slane %v3229, %v4160
        %v4162 = vlaneseq
        %v4163 = vshrl.u32 %v4162, 7
        %v4164 = vsub.s32 0, %v4163
        %v4165 = vrot.slane %v3230, %v4164
        %v4166 = vlaneseq
        %v4167 = vshrl.u32 %v4166, 7
        %v4168 = vsub.s32 1, %v4167
        %v4169 = vrot.slane %v3230, %v4168
        %v4170 = vlaneseq
        %v4171 = vshrl.u32 %v4170, 7
        %v4172 = vsub.s32 2, %v4171
        %v4173 = vrot.slane %v3230, %v4172
        %v4174 = vlaneseq
        %v4175 = vshrl.u32 %v4174, 7
        %v4176 = vsub.s32 3, %v4175
        %v4177 = vrot.slane %v3230, %v4176
        %v4178 = vlaneseq
        %v4179 = vshrl.u32 %v4178, 7
        %v4180 = vsub.s32 4, %v4179
        %v4181 = vrot.slane %v3230, %v4180
        %v4182 = vlaneseq
        %v4183 = vshrl.u32 %v4182, 7
        %v4184 = vsub.s32 5, %v4183
        %v4185 = vrot.slane %v3230, %v4184
        %v4186 = vlaneseq
        %v4187 = vshrl.u32 %v4186, 7
        %v4188 = vsub.s32 6, %v4187
        %v4189 = vrot.slane %v3230, %v4188
        %v4190 = vlaneseq
        %v4191 = vshrl.u32 %v4190, 7
        %v4192 = vsub.s32 7, %v4191
        %v4193 = vrot.slane %v3230, %v4192
        %v4194 = vlaneseq
        %v4195 = vshrl.u32 %v4194, 7
        %v4196 = vsub.s32 0, %v4195
        %v4197 = vrot.slane %v3231, %v4196
        %v4198 = vlaneseq
        %v4199 = vshrl.u32 %v4198, 7
        %v4200 = vsub.s32 1, %v4199
        %v4201 = vrot.slane %v3231, %v4200
        %v4202 = vlaneseq
        %v4203 = vshrl.u32 %v4202, 7
        %v4204 = vsub.s32 2, %v4203
        %v4205 = vrot.slane %v3231, %v4204
        %v4206 = vlaneseq
        %v4207 = vshrl.u32 %v4206, 7
        %v4208 = vsub.s32 3, %v4207
        %v4209 = vrot.slane %v3231, %v4208
        %v4210 = vlaneseq
        %v4211 = vshrl.u32 %v4210, 7
        %v4212 = vsub.s32 4, %v4211
        %v4213 = vrot.slane %v3231, %v4212
        %v4214 = vlaneseq
        %v4215 = vshrl.u32 %v4214, 7
        %v4216 = vsub.s32 5, %v4215
        %v4217 = vrot.slane %v3231, %v4216
        %v4218 = vlaneseq
        %v4219 = vshrl.u32 %v4218, 7
        %v4220 = vsub.s32 6, %v4219
        %v4221 = vrot.slane %v3231, %v4220
        %v4222 = vlaneseq
        %v4223 = vshrl.u32 %v4222, 7
        %v4224 = vsub.s32 7, %v4223
        %v4225 = vrot.slane %v3231, %v4224
        %v4226 = vlaneseq
        %v4227 = vshrl.u32 %v4226, 7
        %v4228 = vsub.s32 0, %v4227
        %v4229 = vrot.slane %v3232, %v4228
        %v4230 = vlaneseq
        %v4231 = vshrl.u32 %v4230, 7
        %v4232 = vsub.s32 1, %v4231
        %v4233 = vrot.slane %v3232, %v4232
        %v4234 = vlaneseq
        %v4235 = vshrl.u32 %v4234, 7
        %v4236 = vsub.s32 2, %v4235
        %v4237 = vrot.slane %v3232, %v4236
        %v4238 = vlaneseq
        %v4239 = vshrl.u32 %v4238, 7
        %v4240 = vsub.s32 3, %v4239
        %v4241 = vrot.slane %v3232, %v4240
        %v4242 = vlaneseq
        %v4243 = vshrl.u32 %v4242, 7
        %v4244 = vsub.s32 4, %v4243
        %v4245 = vrot.slane %v3232, %v4244
        %v4246 = vlaneseq
        %v4247 = vshrl.u32 %v4246, 7
        %v4248 = vsub.s32 5, %v4247
        %v4249 = vrot.slane %v3232, %v4248
        %v4250 = vlaneseq
        %v4251 = vshrl.u32 %v4250, 7
        %v4252 = vsub.s32 6, %v4251
        %v4253 = vrot.slane %v3232, %v4252
        %v4254 = vlaneseq
        %v4255 = vshrl.u32 %v4254, 7
        %v4256 = vsub.s32 7, %v4255
        %v4257 = vrot.slane %v3232, %v4256
        %v4258 = vlaneseq
        %v4259 = vshrl.u32 %v4258, 7
        %v4260 = vsub.s32 0, %v4259
        %v4261 = vrot.slane %v3233, %v4260
        %v4262 = vlaneseq
        %v4263 = vshrl.u32 %v4262, 7
        %v4264 = vsub.s32 1, %v4263
        %v4265 = vrot.slane %v3233, %v4264
        %v4266 = vlaneseq
        %v4267 = vshrl.u32 %v4266, 7
        %v4268 = vsub.s32 2, %v4267
        %v4269 = vrot.slane %v3233, %v4268
        %v4270 = vlaneseq
        %v4271 = vshrl.u32 %v4270, 7
        %v4272 = vsub.s32 3, %v4271
        %v4273 = vrot.slane %v3233, %v4272
        %v4274 = vlaneseq
        %v4275 = vshrl.u32 %v4274, 7
        %v4276 = vsub.s32 4, %v4275
        %v4277 = vrot.slane %v3233, %v4276
        %v4278 = vlaneseq
        %v4279 = vshrl.u32 %v4278, 7
        %v4280 = vsub.s32 5, %v4279
        %v4281 = vrot.slane %v3233, %v4280
        %v4282 = vlaneseq
        %v4283 = vshrl.u32 %v4282, 7
        %v4284 = vsub.s32 6, %v4283
        %v4285 = vrot.slane %v3233, %v4284
        %v4286 = vlaneseq
        %v4287 = vshrl.u32 %v4286, 7
        %v4288 = vsub.s32 7, %v4287
        %v4289 = vrot.slane %v3233, %v4288
        %v4290 = vcombine.low %v3269, %v3273
        %v4291 = vcombine.low %v3277, %v3281
        %v4292 = vcombine.low %v3285, %v3289
        %v4293 = vcombine.low %v3293, %v3297
        %v4295 = vunpack.c.l.s4 1966171168
        %v4296 = vunpack.c.0.s8 %v4295
        %v4297 = vlaneseq
        %v4298 = vshrl.u32 %v4297, 7
        %v4299 = vsub.s32 %v4296, %v4298
        %v4300 = vrot.slane %v4290, %v4299
        %v4302 = vunpack.c.l.s4 1966171168
        %v4303 = vunpack.c.0.s8 %v4302
        %v4304 = vlaneseq
        %v4305 = vshrl.u32 %v4304, 7
        %v4306 = vsub.s32 %v4303, %v4305
        %v4307 = vrot.slane %v4291, %v4306
        %v4309 = vunpack.c.l.s4 1966171168
        %v4310 = vunpack.c.0.s8 %v4309
        %v4311 = vlaneseq
        %v4312 = vshrl.u32 %v4311, 7
        %v4313 = vsub.s32 %v4310, %v4312
        %v4314 = vrot.slane %v4292, %v4313
        %v4316 = vunpack.c.l.s4 1966171168
        %v4317 = vunpack.c.0.s8 %v4316
        %v4318 = vlaneseq
        %v4319 = vshrl.u32 %v4318, 7
        %v4320 = vsub.s32 %v4317, %v4319
        %v4321 = vrot.slane %v4293, %v4320
        %v4322 = vcombine.low %v4300, %v4307
        %v4323 = vcombine.low %v4314, %v4321
        %v4325 = vunpack.c.l.s4 1966171168
        %v4326 = vunpack.c.0.s8 %v4325
        %v4327 = vlaneseq
        %v4328 = vshrl.u32 %v4327, 7
        %v4329 = vsub.s32 %v4326, %v4328
        %v4330 = vrot.slane %v4322, %v4329
        %v4332 = vunpack.c.l.s4 1966171168
        %v4333 = vunpack.c.0.s8 %v4332
        %v4334 = vlaneseq
        %v4335 = vshrl.u32 %v4334, 7
        %v4336 = vsub.s32 %v4333, %v4335
        %v4337 = vrot.slane %v4323, %v4336
        %v4338 = vcombine.low %v4330, %v4337
        %v4339 = vcombine.low %v3301, %v3305
        %v4340 = vcombine.low %v3309, %v3313
        %v4341 = vcombine.low %v3317, %v3321
        %v4342 = vcombine.low %v3325, %v3329
        %v4344 = vunpack.c.l.s4 1966171168
        %v4345 = vunpack.c.0.s8 %v4344
        %v4346 = vlaneseq
        %v4347 = vshrl.u32 %v4346, 7
        %v4348 = vsub.s32 %v4345, %v4347
        %v4349 = vrot.slane %v4339, %v4348
        %v4351 = vunpack.c.l.s4 1966171168
        %v4352 = vunpack.c.0.s8 %v4351
        %v4353 = vlaneseq
        %v4354 = vshrl.u32 %v4353, 7
        %v4355 = vsub.s32 %v4352, %v4354
        %v4356 = vrot.slane %v4340, %v4355
        %v4358 = vunpack.c.l.s4 1966171168
        %v4359 = vunpack.c.0.s8 %v4358
        %v4360 = vlaneseq
        %v4361 = vshrl.u32 %v4360, 7
        %v4362 = vsub.s32 %v4359, %v4361
        %v4363 = vrot.slane %v4341, %v4362
        %v4365 = vunpack.c.l.s4 1966171168
        %v4366 = vunpack.c.0.s8 %v4365
        %v4367 = vlaneseq
        %v4368 = vshrl.u32 %v4367, 7
        %v4369 = vsub.s32 %v4366, %v4368
        %v4370 = vrot.slane %v4342, %v4369
        %v4371 = vcombine.low %v4349, %v4356
        %v4372 = vcombine.low %v4363, %v4370
        %v4374 = vunpack.c.l.s4 1966171168
        %v4375 = vunpack.c.0.s8 %v4374
        %v4376 = vlaneseq
        %v4377 = vshrl.u32 %v4376, 7
        %v4378 = vsub.s32 %v4375, %v4377
        %v4379 = vrot.slane %v4371, %v4378
        %v4381 = vunpack.c.l.s4 1966171168
        %v4382 = vunpack.c.0.s8 %v4381
        %v4383 = vlaneseq
        %v4384 = vshrl.u32 %v4383, 7
        %v4385 = vsub.s32 %v4382, %v4384
        %v4386 = vrot.slane %v4372, %v4385
        %v4387 = vcombine.low %v4379, %v4386
        %v4388 = vcombine.low %v3333, %v3337
        %v4389 = vcombine.low %v3341, %v3345
        %v4390 = vcombine.low %v3349, %v3353
        %v4391 = vcombine.low %v3357, %v3361
        %v4393 = vunpack.c.l.s4 1966171168
        %v4394 = vunpack.c.0.s8 %v4393
        %v4395 = vlaneseq
        %v4396 = vshrl.u32 %v4395, 7
        %v4397 = vsub.s32 %v4394, %v4396
        %v4398 = vrot.slane %v4388, %v4397
        %v4400 = vunpack.c.l.s4 1966171168
        %v4401 = vunpack.c.0.s8 %v4400
        %v4402 = vlaneseq
        %v4403 = vshrl.u32 %v4402, 7
        %v4404 = vsub.s32 %v4401, %v4403
        %v4405 = vrot.slane %v4389, %v4404
        %v4407 = vunpack.c.l.s4 1966171168
        %v4408 = vunpack.c.0.s8 %v4407
        %v4409 = vlaneseq
        %v4410 = vshrl.u32 %v4409, 7
        %v4411 = vsub.s32 %v4408, %v4410
        %v4412 = vrot.slane %v4390, %v4411
        %v4414 = vunpack.c.l.s4 1966171168
        %v4415 = vunpack.c.0.s8 %v4414
        %v4416 = vlaneseq
        %v4417 = vshrl.u32 %v4416, 7
        %v4418 = vsub.s32 %v4415, %v4417
        %v4419 = vrot.slane %v4391, %v4418
        %v4420 = vcombine.low %v4398, %v4405
        %v4421 = vcombine.low %v4412, %v4419
        %v4423 = vunpack.c.l.s4 1966171168
        %v4424 = vunpack.c.0.s8 %v4423
        %v4425 = vlaneseq
        %v4426 = vshrl.u32 %v4425, 7
        %v4427 = vsub.s32 %v4424, %v4426
        %v4428 = vrot.slane %v4420, %v4427
        %v4430 = vunpack.c.l.s4 1966171168
        %v4431 = vunpack.c.0.s8 %v4430
        %v4432 = vlaneseq
        %v4433 = vshrl.u32 %v4432, 7
        %v4434 = vsub.s32 %v4431, %v4433
        %v4435 = vrot.slane %v4421, %v4434
        %v4436 = vcombine.low %v4428, %v4435
        %v4437 = vcombine.low %v3365, %v3369
        %v4438 = vcombine.low %v3373, %v3377
        %v4439 = vcombine.low %v3381, %v3385
        %v4440 = vcombine.low %v3389, %v3393
        %v4442 = vunpack.c.l.s4 1966171168
        %v4443 = vunpack.c.0.s8 %v4442
        %v4444 = vlaneseq
        %v4445 = vshrl.u32 %v4444, 7
        %v4446 = vsub.s32 %v4443, %v4445
        %v4447 = vrot.slane %v4437, %v4446
        %v4449 = vunpack.c.l.s4 1966171168
        %v4450 = vunpack.c.0.s8 %v4449
        %v4451 = vlaneseq
        %v4452 = vshrl.u32 %v4451, 7
        %v4453 = vsub.s32 %v4450, %v4452
        %v4454 = vrot.slane %v4438, %v4453
        %v4456 = vunpack.c.l.s4 1966171168
        %v4457 = vunpack.c.0.s8 %v4456
        %v4458 = vlaneseq
        %v4459 = vshrl.u32 %v4458, 7
        %v4460 = vsub.s32 %v4457, %v4459
        %v4461 = vrot.slane %v4439, %v4460
        %v4463 = vunpack.c.l.s4 1966171168
        %v4464 = vunpack.c.0.s8 %v4463
        %v4465 = vlaneseq
        %v4466 = vshrl.u32 %v4465, 7
        %v4467 = vsub.s32 %v4464, %v4466
        %v4468 = vrot.slane %v4440, %v4467
        %v4469 = vcombine.low %v4447, %v4454
        %v4470 = vcombine.low %v4461, %v4468
        %v4472 = vunpack.c.l.s4 1966171168
        %v4473 = vunpack.c.0.s8 %v4472
        %v4474 = vlaneseq
        %v4475 = vshrl.u32 %v4474, 7
        %v4476 = vsub.s32 %v4473, %v4475
        %v4477 = vrot.slane %v4469, %v4476
        %v4479 = vunpack.c.l.s4 1966171168
        %v4480 = vunpack.c.0.s8 %v4479
        %v4481 = vlaneseq
        %v4482 = vshrl.u32 %v4481, 7
        %v4483 = vsub.s32 %v4480, %v4482
        %v4484 = vrot.slane %v4470, %v4483
        %v4485 = vcombine.low %v4477, %v4484
        %v4486 = vcombine.low %v3397, %v3401
        %v4487 = vcombine.low %v3405, %v3409
        %v4488 = vcombine.low %v3413, %v3417
        %v4489 = vcombine.low %v3421, %v3425
        %v4491 = vunpack.c.l.s4 1966171168
        %v4492 = vunpack.c.0.s8 %v4491
        %v4493 = vlaneseq
        %v4494 = vshrl.u32 %v4493, 7
        %v4495 = vsub.s32 %v4492, %v4494
        %v4496 = vrot.slane %v4486, %v4495
        %v4498 = vunpack.c.l.s4 1966171168
        %v4499 = vunpack.c.0.s8 %v4498
        %v4500 = vlaneseq
        %v4501 = vshrl.u32 %v4500, 7
        %v4502 = vsub.s32 %v4499, %v4501
        %v4503 = vrot.slane %v4487, %v4502
        %v4505 = vunpack.c.l.s4 1966171168
        %v4506 = vunpack.c.0.s8 %v4505
        %v4507 = vlaneseq
        %v4508 = vshrl.u32 %v4507, 7
        %v4509 = vsub.s32 %v4506, %v4508
        %v4510 = vrot.slane %v4488, %v4509
        %v4512 = vunpack.c.l.s4 1966171168
        %v4513 = vunpack.c.0.s8 %v4512
        %v4514 = vlaneseq
        %v4515 = vshrl.u32 %v4514, 7
        %v4516 = vsub.s32 %v4513, %v4515
        %v4517 = vrot.slane %v4489, %v4516
        %v4518 = vcombine.low %v4496, %v4503
        %v4519 = vcombine.low %v4510, %v4517
        %v4521 = vunpack.c.l.s4 1966171168
        %v4522 = vunpack.c.0.s8 %v4521
        %v4523 = vlaneseq
        %v4524 = vshrl.u32 %v4523, 7
        %v4525 = vsub.s32 %v4522, %v4524
        %v4526 = vrot.slane %v4518, %v4525
        %v4528 = vunpack.c.l.s4 1966171168
        %v4529 = vunpack.c.0.s8 %v4528
        %v4530 = vlaneseq
        %v4531 = vshrl.u32 %v4530, 7
        %v4532 = vsub.s32 %v4529, %v4531
        %v4533 = vrot.slane %v4519, %v4532
        %v4534 = vcombine.low %v4526, %v4533
        %v4535 = vcombine.low %v3429, %v3433
        %v4536 = vcombine.low %v3437, %v3441
        %v4537 = vcombine.low %v3445, %v3449
        %v4538 = vcombine.low %v3453, %v3457
        %v4540 = vunpack.c.l.s4 1966171168
        %v4541 = vunpack.c.0.s8 %v4540
        %v4542 = vlaneseq
        %v4543 = vshrl.u32 %v4542, 7
        %v4544 = vsub.s32 %v4541, %v4543
        %v4545 = vrot.slane %v4535, %v4544
        %v4547 = vunpack.c.l.s4 1966171168
        %v4548 = vunpack.c.0.s8 %v4547
        %v4549 = vlaneseq
        %v4550 = vshrl.u32 %v4549, 7
        %v4551 = vsub.s32 %v4548, %v4550
        %v4552 = vrot.slane %v4536, %v4551
        %v4554 = vunpack.c.l.s4 1966171168
        %v4555 = vunpack.c.0.s8 %v4554
        %v4556 = vlaneseq
        %v4557 = vshrl.u32 %v4556, 7
        %v4558 = vsub.s32 %v4555, %v4557
        %v4559 = vrot.slane %v4537, %v4558
        %v4561 = vunpack.c.l.s4 1966171168
        %v4562 = vunpack.c.0.s8 %v4561
        %v4563 = vlaneseq
        %v4564 = vshrl.u32 %v4563, 7
        %v4565 = vsub.s32 %v4562, %v4564
        %v4566 = vrot.slane %v4538, %v4565
        %v4567 = vcombine.low %v4545, %v4552
        %v4568 = vcombine.low %v4559, %v4566
        %v4570 = vunpack.c.l.s4 1966171168
        %v4571 = vunpack.c.0.s8 %v4570
        %v4572 = vlaneseq
        %v4573 = vshrl.u32 %v4572, 7
        %v4574 = vsub.s32 %v4571, %v4573
        %v4575 = vrot.slane %v4567, %v4574
        %v4577 = vunpack.c.l.s4 1966171168
        %v4578 = vunpack.c.0.s8 %v4577
        %v4579 = vlaneseq
        %v4580 = vshrl.u32 %v4579, 7
        %v4581 = vsub.s32 %v4578, %v4580
        %v4582 = vrot.slane %v4568, %v4581
        %v4583 = vcombine.low %v4575, %v4582
        %v4584 = vcombine.low %v3461, %v3465
        %v4585 = vcombine.low %v3469, %v3473
        %v4586 = vcombine.low %v3477, %v3481
        %v4587 = vcombine.low %v3485, %v3489
        %v4589 = vunpack.c.l.s4 1966171168
        %v4590 = vunpack.c.0.s8 %v4589
        %v4591 = vlaneseq
        %v4592 = vshrl.u32 %v4591, 7
        %v4593 = vsub.s32 %v4590, %v4592
        %v4594 = vrot.slane %v4584, %v4593
        %v4596 = vunpack.c.l.s4 1966171168
        %v4597 = vunpack.c.0.s8 %v4596
        %v4598 = vlaneseq
        %v4599 = vshrl.u32 %v4598, 7
        %v4600 = vsub.s32 %v4597, %v4599
        %v4601 = vrot.slane %v4585, %v4600
        %v4603 = vunpack.c.l.s4 1966171168
        %v4604 = vunpack.c.0.s8 %v4603
        %v4605 = vlaneseq
        %v4606 = vshrl.u32 %v4605, 7
        %v4607 = vsub.s32 %v4604, %v4606
        %v4608 = vrot.slane %v4586, %v4607
        %v4610 = vunpack.c.l.s4 1966171168
        %v4611 = vunpack.c.0.s8 %v4610
        %v4612 = vlaneseq
        %v4613 = vshrl.u32 %v4612, 7
        %v4614 = vsub.s32 %v4611, %v4613
        %v4615 = vrot.slane %v4587, %v4614
        %v4616 = vcombine.low %v4594, %v4601
        %v4617 = vcombine.low %v4608, %v4615
        %v4619 = vunpack.c.l.s4 1966171168
        %v4620 = vunpack.c.0.s8 %v4619
        %v4621 = vlaneseq
        %v4622 = vshrl.u32 %v4621, 7
        %v4623 = vsub.s32 %v4620, %v4622
        %v4624 = vrot.slane %v4616, %v4623
        %v4626 = vunpack.c.l.s4 1966171168
        %v4627 = vunpack.c.0.s8 %v4626
        %v4628 = vlaneseq
        %v4629 = vshrl.u32 %v4628, 7
        %v4630 = vsub.s32 %v4627, %v4629
        %v4631 = vrot.slane %v4617, %v4630
        %v4632 = vcombine.low %v4624, %v4631
        %v4633 = vcombine.low %v3493, %v3497
        %v4634 = vcombine.low %v3501, %v3505
        %v4635 = vcombine.low %v3509, %v3513
        %v4636 = vcombine.low %v3517, %v3521
        %v4638 = vunpack.c.l.s4 1966171168
        %v4639 = vunpack.c.0.s8 %v4638
        %v4640 = vlaneseq
        %v4641 = vshrl.u32 %v4640, 7
        %v4642 = vsub.s32 %v4639, %v4641
        %v4643 = vrot.slane %v4633, %v4642
        %v4645 = vunpack.c.l.s4 1966171168
        %v4646 = vunpack.c.0.s8 %v4645
        %v4647 = vlaneseq
        %v4648 = vshrl.u32 %v4647, 7
        %v4649 = vsub.s32 %v4646, %v4648
        %v4650 = vrot.slane %v4634, %v4649
        %v4652 = vunpack.c.l.s4 1966171168
        %v4653 = vunpack.c.0.s8 %v4652
        %v4654 = vlaneseq
        %v4655 = vshrl.u32 %v4654, 7
        %v4656 = vsub.s32 %v4653, %v4655
        %v4657 = vrot.slane %v4635, %v4656
        %v4659 = vunpack.c.l.s4 1966171168
        %v4660 = vunpack.c.0.s8 %v4659
        %v4661 = vlaneseq
        %v4662 = vshrl.u32 %v4661, 7
        %v4663 = vsub.s32 %v4660, %v4662
        %v4664 = vrot.slane %v4636, %v4663
        %v4665 = vcombine.low %v4643, %v4650
        %v4666 = vcombine.low %v4657, %v4664
        %v4668 = vunpack.c.l.s4 1966171168
        %v4669 = vunpack.c.0.s8 %v4668
        %v4670 = vlaneseq
        %v4671 = vshrl.u32 %v4670, 7
        %v4672 = vsub.s32 %v4669, %v4671
        %v4673 = vrot.slane %v4665, %v4672
        %v4675 = vunpack.c.l.s4 1966171168
        %v4676 = vunpack.c.0.s8 %v4675
        %v4677 = vlaneseq
        %v4678 = vshrl.u32 %v4677, 7
        %v4679 = vsub.s32 %v4676, %v4678
        %v4680 = vrot.slane %v4666, %v4679
        %v4681 = vcombine.low %v4673, %v4680
        %v4682 = vcombine.low %v3525, %v3529
        %v4683 = vcombine.low %v3533, %v3537
        %v4684 = vcombine.low %v3541, %v3545
        %v4685 = vcombine.low %v3549, %v3553
        %v4687 = vunpack.c.l.s4 1966171168
        %v4688 = vunpack.c.0.s8 %v4687
        %v4689 = vlaneseq
        %v4690 = vshrl.u32 %v4689, 7
        %v4691 = vsub.s32 %v4688, %v4690
        %v4692 = vrot.slane %v4682, %v4691
        %v4694 = vunpack.c.l.s4 1966171168
        %v4695 = vunpack.c.0.s8 %v4694
        %v4696 = vlaneseq
        %v4697 = vshrl.u32 %v4696, 7
        %v4698 = vsub.s32 %v4695, %v4697
        %v4699 = vrot.slane %v4683, %v4698
        %v4701 = vunpack.c.l.s4 1966171168
        %v4702 = vunpack.c.0.s8 %v4701
        %v4703 = vlaneseq
        %v4704 = vshrl.u32 %v4703, 7
        %v4705 = vsub.s32 %v4702, %v4704
        %v4706 = vrot.slane %v4684, %v4705
        %v4708 = vunpack.c.l.s4 1966171168
        %v4709 = vunpack.c.0.s8 %v4708
        %v4710 = vlaneseq
        %v4711 = vshrl.u32 %v4710, 7
        %v4712 = vsub.s32 %v4709, %v4711
        %v4713 = vrot.slane %v4685, %v4712
        %v4714 = vcombine.low %v4692, %v4699
        %v4715 = vcombine.low %v4706, %v4713
        %v4717 = vunpack.c.l.s4 1966171168
        %v4718 = vunpack.c.0.s8 %v4717
        %v4719 = vlaneseq
        %v4720 = vshrl.u32 %v4719, 7
        %v4721 = vsub.s32 %v4718, %v4720
        %v4722 = vrot.slane %v4714, %v4721
        %v4724 = vunpack.c.l.s4 1966171168
        %v4725 = vunpack.c.0.s8 %v4724
        %v4726 = vlaneseq
        %v4727 = vshrl.u32 %v4726, 7
        %v4728 = vsub.s32 %v4725, %v4727
        %v4729 = vrot.slane %v4715, %v4728
        %v4730 = vcombine.low %v4722, %v4729
        %v4731 = vcombine.low %v3557, %v3561
        %v4732 = vcombine.low %v3565, %v3569
        %v4733 = vcombine.low %v3573, %v3577
        %v4734 = vcombine.low %v3581, %v3585
        %v4736 = vunpack.c.l.s4 1966171168
        %v4737 = vunpack.c.0.s8 %v4736
        %v4738 = vlaneseq
        %v4739 = vshrl.u32 %v4738, 7
        %v4740 = vsub.s32 %v4737, %v4739
        %v4741 = vrot.slane %v4731, %v4740
        %v4743 = vunpack.c.l.s4 1966171168
        %v4744 = vunpack.c.0.s8 %v4743
        %v4745 = vlaneseq
        %v4746 = vshrl.u32 %v4745, 7
        %v4747 = vsub.s32 %v4744, %v4746
        %v4748 = vrot.slane %v4732, %v4747
        %v4750 = vunpack.c.l.s4 1966171168
        %v4751 = vunpack.c.0.s8 %v4750
        %v4752 = vlaneseq
        %v4753 = vshrl.u32 %v4752, 7
        %v4754 = vsub.s32 %v4751, %v4753
        %v4755 = vrot.slane %v4733, %v4754
        %v4757 = vunpack.c.l.s4 1966171168
        %v4758 = vunpack.c.0.s8 %v4757
        %v4759 = vlaneseq
        %v4760 = vshrl.u32 %v4759, 7
        %v4761 = vsub.s32 %v4758, %v4760
        %v4762 = vrot.slane %v4734, %v4761
        %v4763 = vcombine.low %v4741, %v4748
        %v4764 = vcombine.low %v4755, %v4762
        %v4766 = vunpack.c.l.s4 1966171168
        %v4767 = vunpack.c.0.s8 %v4766
        %v4768 = vlaneseq
        %v4769 = vshrl.u32 %v4768, 7
        %v4770 = vsub.s32 %v4767, %v4769
        %v4771 = vrot.slane %v4763, %v4770
        %v4773 = vunpack.c.l.s4 1966171168
        %v4774 = vunpack.c.0.s8 %v4773
        %v4775 = vlaneseq
        %v4776 = vshrl.u32 %v4775, 7
        %v4777 = vsub.s32 %v4774, %v4776
        %v4778 = vrot.slane %v4764, %v4777
        %v4779 = vcombine.low %v4771, %v4778
        %v4780 = vcombine.low %v3589, %v3593
        %v4781 = vcombine.low %v3597, %v3601
        %v4782 = vcombine.low %v3605, %v3609
        %v4783 = vcombine.low %v3613, %v3617
        %v4785 = vunpack.c.l.s4 1966171168
        %v4786 = vunpack.c.0.s8 %v4785
        %v4787 = vlaneseq
        %v4788 = vshrl.u32 %v4787, 7
        %v4789 = vsub.s32 %v4786, %v4788
        %v4790 = vrot.slane %v4780, %v4789
        %v4792 = vunpack.c.l.s4 1966171168
        %v4793 = vunpack.c.0.s8 %v4792
        %v4794 = vlaneseq
        %v4795 = vshrl.u32 %v4794, 7
        %v4796 = vsub.s32 %v4793, %v4795
        %v4797 = vrot.slane %v4781, %v4796
        %v4799 = vunpack.c.l.s4 1966171168
        %v4800 = vunpack.c.0.s8 %v4799
        %v4801 = vlaneseq
        %v4802 = vshrl.u32 %v4801, 7
        %v4803 = vsub.s32 %v4800, %v4802
        %v4804 = vrot.slane %v4782, %v4803
        %v4806 = vunpack.c.l.s4 1966171168
        %v4807 = vunpack.c.0.s8 %v4806
        %v4808 = vlaneseq
        %v4809 = vshrl.u32 %v4808, 7
        %v4810 = vsub.s32 %v4807, %v4809
        %v4811 = vrot.slane %v4783, %v4810
        %v4812 = vcombine.low %v4790, %v4797
        %v4813 = vcombine.low %v4804, %v4811
        %v4815 = vunpack.c.l.s4 1966171168
        %v4816 = vunpack.c.0.s8 %v4815
        %v4817 = vlaneseq
        %v4818 = vshrl.u32 %v4817, 7
        %v4819 = vsub.s32 %v4816, %v4818
        %v4820 = vrot.slane %v4812, %v4819
        %v4822 = vunpack.c.l.s4 1966171168
        %v4823 = vunpack.c.0.s8 %v4822
        %v4824 = vlaneseq
        %v4825 = vshrl.u32 %v4824, 7
        %v4826 = vsub.s32 %v4823, %v4825
        %v4827 = vrot.slane %v4813, %v4826
        %v4828 = vcombine.low %v4820, %v4827
        %v4829 = vcombine.low %v3621, %v3625
        %v4830 = vcombine.low %v3629, %v3633
        %v4831 = vcombine.low %v3637, %v3641
        %v4832 = vcombine.low %v3645, %v3649
        %v4834 = vunpack.c.l.s4 1966171168
        %v4835 = vunpack.c.0.s8 %v4834
        %v4836 = vlaneseq
        %v4837 = vshrl.u32 %v4836, 7
        %v4838 = vsub.s32 %v4835, %v4837
        %v4839 = vrot.slane %v4829, %v4838
        %v4841 = vunpack.c.l.s4 1966171168
        %v4842 = vunpack.c.0.s8 %v4841
        %v4843 = vlaneseq
        %v4844 = vshrl.u32 %v4843, 7
        %v4845 = vsub.s32 %v4842, %v4844
        %v4846 = vrot.slane %v4830, %v4845
        %v4848 = vunpack.c.l.s4 1966171168
        %v4849 = vunpack.c.0.s8 %v4848
        %v4850 = vlaneseq
        %v4851 = vshrl.u32 %v4850, 7
        %v4852 = vsub.s32 %v4849, %v4851
        %v4853 = vrot.slane %v4831, %v4852
        %v4855 = vunpack.c.l.s4 1966171168
        %v4856 = vunpack.c.0.s8 %v4855
        %v4857 = vlaneseq
        %v4858 = vshrl.u32 %v4857, 7
        %v4859 = vsub.s32 %v4856, %v4858
        %v4860 = vrot.slane %v4832, %v4859
        %v4861 = vcombine.low %v4839, %v4846
        %v4862 = vcombine.low %v4853, %v4860
        %v4864 = vunpack.c.l.s4 1966171168
        %v4865 = vunpack.c.0.s8 %v4864
        %v4866 = vlaneseq
        %v4867 = vshrl.u32 %v4866, 7
        %v4868 = vsub.s32 %v4865, %v4867
        %v4869 = vrot.slane %v4861, %v4868
        %v4871 = vunpack.c.l.s4 1966171168
        %v4872 = vunpack.c.0.s8 %v4871
        %v4873 = vlaneseq
        %v4874 = vshrl.u32 %v4873, 7
        %v4875 = vsub.s32 %v4872, %v4874
        %v4876 = vrot.slane %v4862, %v4875
        %v4877 = vcombine.low %v4869, %v4876
        %v4878 = vcombine.low %v3653, %v3657
        %v4879 = vcombine.low %v3661, %v3665
        %v4880 = vcombine.low %v3669, %v3673
        %v4881 = vcombine.low %v3677, %v3681
        %v4883 = vunpack.c.l.s4 1966171168
        %v4884 = vunpack.c.0.s8 %v4883
        %v4885 = vlaneseq
        %v4886 = vshrl.u32 %v4885, 7
        %v4887 = vsub.s32 %v4884, %v4886
        %v4888 = vrot.slane %v4878, %v4887
        %v4890 = vunpack.c.l.s4 1966171168
        %v4891 = vunpack.c.0.s8 %v4890
        %v4892 = vlaneseq
        %v4893 = vshrl.u32 %v4892, 7
        %v4894 = vsub.s32 %v4891, %v4893
        %v4895 = vrot.slane %v4879, %v4894
        %v4897 = vunpack.c.l.s4 1966171168
        %v4898 = vunpack.c.0.s8 %v4897
        %v4899 = vlaneseq
        %v4900 = vshrl.u32 %v4899, 7
        %v4901 = vsub.s32 %v4898, %v4900
        %v4902 = vrot.slane %v4880, %v4901
        %v4904 = vunpack.c.l.s4 1966171168
        %v4905 = vunpack.c.0.s8 %v4904
        %v4906 = vlaneseq
        %v4907 = vshrl.u32 %v4906, 7
        %v4908 = vsub.s32 %v4905, %v4907
        %v4909 = vrot.slane %v4881, %v4908
        %v4910 = vcombine.low %v4888, %v4895
        %v4911 = vcombine.low %v4902, %v4909
        %v4913 = vunpack.c.l.s4 1966171168
        %v4914 = vunpack.c.0.s8 %v4913
        %v4915 = vlaneseq
        %v4916 = vshrl.u32 %v4915, 7
        %v4917 = vsub.s32 %v4914, %v4916
        %v4918 = vrot.slane %v4910, %v4917
        %v4920 = vunpack.c.l.s4 1966171168
        %v4921 = vunpack.c.0.s8 %v4920
        %v4922 = vlaneseq
        %v4923 = vshrl.u32 %v4922, 7
        %v4924 = vsub.s32 %v4921, %v4923
        %v4925 = vrot.slane %v4911, %v4924
        %v4926 = vcombine.low %v4918, %v4925
        %v4927 = vcombine.low %v3685, %v3689
        %v4928 = vcombine.low %v3693, %v3697
        %v4929 = vcombine.low %v3701, %v3705
        %v4930 = vcombine.low %v3709, %v3713
        %v4932 = vunpack.c.l.s4 1966171168
        %v4933 = vunpack.c.0.s8 %v4932
        %v4934 = vlaneseq
        %v4935 = vshrl.u32 %v4934, 7
        %v4936 = vsub.s32 %v4933, %v4935
        %v4937 = vrot.slane %v4927, %v4936
        %v4939 = vunpack.c.l.s4 1966171168
        %v4940 = vunpack.c.0.s8 %v4939
        %v4941 = vlaneseq
        %v4942 = vshrl.u32 %v4941, 7
        %v4943 = vsub.s32 %v4940, %v4942
        %v4944 = vrot.slane %v4928, %v4943
        %v4946 = vunpack.c.l.s4 1966171168
        %v4947 = vunpack.c.0.s8 %v4946
        %v4948 = vlaneseq
        %v4949 = vshrl.u32 %v4948, 7
        %v4950 = vsub.s32 %v4947, %v4949
        %v4951 = vrot.slane %v4929, %v4950
        %v4953 = vunpack.c.l.s4 1966171168
        %v4954 = vunpack.c.0.s8 %v4953
        %v4955 = vlaneseq
        %v4956 = vshrl.u32 %v4955, 7
        %v4957 = vsub.s32 %v4954, %v4956
        %v4958 = vrot.slane %v4930, %v4957
        %v4959 = vcombine.low %v4937, %v4944
        %v4960 = vcombine.low %v4951, %v4958
        %v4962 = vunpack.c.l.s4 1966171168
        %v4963 = vunpack.c.0.s8 %v4962
        %v4964 = vlaneseq
        %v4965 = vshrl.u32 %v4964, 7
        %v4966 = vsub.s32 %v4963, %v4965
        %v4967 = vrot.slane %v4959, %v4966
        %v4969 = vunpack.c.l.s4 1966171168
        %v4970 = vunpack.c.0.s8 %v4969
        %v4971 = vlaneseq
        %v4972 = vshrl.u32 %v4971, 7
        %v4973 = vsub.s32 %v4970, %v4972
        %v4974 = vrot.slane %v4960, %v4973
        %v4975 = vcombine.low %v4967, %v4974
        %v4976 = vcombine.low %v3717, %v3721
        %v4977 = vcombine.low %v3725, %v3729
        %v4978 = vcombine.low %v3733, %v3737
        %v4979 = vcombine.low %v3741, %v3745
        %v4981 = vunpack.c.l.s4 1966171168
        %v4982 = vunpack.c.0.s8 %v4981
        %v4983 = vlaneseq
        %v4984 = vshrl.u32 %v4983, 7
        %v4985 = vsub.s32 %v4982, %v4984
        %v4986 = vrot.slane %v4976, %v4985
        %v4988 = vunpack.c.l.s4 1966171168
        %v4989 = vunpack.c.0.s8 %v4988
        %v4990 = vlaneseq
        %v4991 = vshrl.u32 %v4990, 7
        %v4992 = vsub.s32 %v4989, %v4991
        %v4993 = vrot.slane %v4977, %v4992
        %v4995 = vunpack.c.l.s4 1966171168
        %v4996 = vunpack.c.0.s8 %v4995
        %v4997 = vlaneseq
        %v4998 = vshrl.u32 %v4997, 7
        %v4999 = vsub.s32 %v4996, %v4998
        %v5000 = vrot.slane %v4978, %v4999
        %v5002 = vunpack.c.l.s4 1966171168
        %v5003 = vunpack.c.0.s8 %v5002
        %v5004 = vlaneseq
        %v5005 = vshrl.u32 %v5004, 7
        %v5006 = vsub.s32 %v5003, %v5005
        %v5007 = vrot.slane %v4979, %v5006
        %v5008 = vcombine.low %v4986, %v4993
        %v5009 = vcombine.low %v5000, %v5007
        %v5011 = vunpack.c.l.s4 1966171168
        %v5012 = vunpack.c.0.s8 %v5011
        %v5013 = vlaneseq
        %v5014 = vshrl.u32 %v5013, 7
        %v5015 = vsub.s32 %v5012, %v5014
        %v5016 = vrot.slane %v5008, %v5015
        %v5018 = vunpack.c.l.s4 1966171168
        %v5019 = vunpack.c.0.s8 %v5018
        %v5020 = vlaneseq
        %v5021 = vshrl.u32 %v5020, 7
        %v5022 = vsub.s32 %v5019, %v5021
        %v5023 = vrot.slane %v5009, %v5022
        %v5024 = vcombine.low %v5016, %v5023
        %v5025 = vcombine.low %v3749, %v3753
        %v5026 = vcombine.low %v3757, %v3761
        %v5027 = vcombine.low %v3765, %v3769
        %v5028 = vcombine.low %v3773, %v3777
        %v5030 = vunpack.c.l.s4 1966171168
        %v5031 = vunpack.c.0.s8 %v5030
        %v5032 = vlaneseq
        %v5033 = vshrl.u32 %v5032, 7
        %v5034 = vsub.s32 %v5031, %v5033
        %v5035 = vrot.slane %v5025, %v5034
        %v5037 = vunpack.c.l.s4 1966171168
        %v5038 = vunpack.c.0.s8 %v5037
        %v5039 = vlaneseq
        %v5040 = vshrl.u32 %v5039, 7
        %v5041 = vsub.s32 %v5038, %v5040
        %v5042 = vrot.slane %v5026, %v5041
        %v5044 = vunpack.c.l.s4 1966171168
        %v5045 = vunpack.c.0.s8 %v5044
        %v5046 = vlaneseq
        %v5047 = vshrl.u32 %v5046, 7
        %v5048 = vsub.s32 %v5045, %v5047
        %v5049 = vrot.slane %v5027, %v5048
        %v5051 = vunpack.c.l.s4 1966171168
        %v5052 = vunpack.c.0.s8 %v5051
        %v5053 = vlaneseq
        %v5054 = vshrl.u32 %v5053, 7
        %v5055 = vsub.s32 %v5052, %v5054
        %v5056 = vrot.slane %v5028, %v5055
        %v5057 = vcombine.low %v5035, %v5042
        %v5058 = vcombine.low %v5049, %v5056
        %v5060 = vunpack.c.l.s4 1966171168
        %v5061 = vunpack.c.0.s8 %v5060
        %v5062 = vlaneseq
        %v5063 = vshrl.u32 %v5062, 7
        %v5064 = vsub.s32 %v5061, %v5063
        %v5065 = vrot.slane %v5057, %v5064
        %v5067 = vunpack.c.l.s4 1966171168
        %v5068 = vunpack.c.0.s8 %v5067
        %v5069 = vlaneseq
        %v5070 = vshrl.u32 %v5069, 7
        %v5071 = vsub.s32 %v5068, %v5070
        %v5072 = vrot.slane %v5058, %v5071
        %v5073 = vcombine.low %v5065, %v5072
        %v5074 = vcombine.low %v3781, %v3785
        %v5075 = vcombine.low %v3789, %v3793
        %v5076 = vcombine.low %v3797, %v3801
        %v5077 = vcombine.low %v3805, %v3809
        %v5079 = vunpack.c.l.s4 1966171168
        %v5080 = vunpack.c.0.s8 %v5079
        %v5081 = vlaneseq
        %v5082 = vshrl.u32 %v5081, 7
        %v5083 = vsub.s32 %v5080, %v5082
        %v5084 = vrot.slane %v5074, %v5083
        %v5086 = vunpack.c.l.s4 1966171168
        %v5087 = vunpack.c.0.s8 %v5086
        %v5088 = vlaneseq
        %v5089 = vshrl.u32 %v5088, 7
        %v5090 = vsub.s32 %v5087, %v5089
        %v5091 = vrot.slane %v5075, %v5090
        %v5093 = vunpack.c.l.s4 1966171168
        %v5094 = vunpack.c.0.s8 %v5093
        %v5095 = vlaneseq
        %v5096 = vshrl.u32 %v5095, 7
        %v5097 = vsub.s32 %v5094, %v5096
        %v5098 = vrot.slane %v5076, %v5097
        %v5100 = vunpack.c.l.s4 1966171168
        %v5101 = vunpack.c.0.s8 %v5100
        %v5102 = vlaneseq
        %v5103 = vshrl.u32 %v5102, 7
        %v5104 = vsub.s32 %v5101, %v5103
        %v5105 = vrot.slane %v5077, %v5104
        %v5106 = vcombine.low %v5084, %v5091
        %v5107 = vcombine.low %v5098, %v5105
        %v5109 = vunpack.c.l.s4 1966171168
        %v5110 = vunpack.c.0.s8 %v5109
        %v5111 = vlaneseq
        %v5112 = vshrl.u32 %v5111, 7
        %v5113 = vsub.s32 %v5110, %v5112
        %v5114 = vrot.slane %v5106, %v5113
        %v5116 = vunpack.c.l.s4 1966171168
        %v5117 = vunpack.c.0.s8 %v5116
        %v5118 = vlaneseq
        %v5119 = vshrl.u32 %v5118, 7
        %v5120 = vsub.s32 %v5117, %v5119
        %v5121 = vrot.slane %v5107, %v5120
        %v5122 = vcombine.low %v5114, %v5121
        %v5123 = vcombine.low %v3813, %v3817
        %v5124 = vcombine.low %v3821, %v3825
        %v5125 = vcombine.low %v3829, %v3833
        %v5126 = vcombine.low %v3837, %v3841
        %v5128 = vunpack.c.l.s4 1966171168
        %v5129 = vunpack.c.0.s8 %v5128
        %v5130 = vlaneseq
        %v5131 = vshrl.u32 %v5130, 7
        %v5132 = vsub.s32 %v5129, %v5131
        %v5133 = vrot.slane %v5123, %v5132
        %v5135 = vunpack.c.l.s4 1966171168
        %v5136 = vunpack.c.0.s8 %v5135
        %v5137 = vlaneseq
        %v5138 = vshrl.u32 %v5137, 7
        %v5139 = vsub.s32 %v5136, %v5138
        %v5140 = vrot.slane %v5124, %v5139
        %v5142 = vunpack.c.l.s4 1966171168
        %v5143 = vunpack.c.0.s8 %v5142
        %v5144 = vlaneseq
        %v5145 = vshrl.u32 %v5144, 7
        %v5146 = vsub.s32 %v5143, %v5145
        %v5147 = vrot.slane %v5125, %v5146
        %v5149 = vunpack.c.l.s4 1966171168
        %v5150 = vunpack.c.0.s8 %v5149
        %v5151 = vlaneseq
        %v5152 = vshrl.u32 %v5151, 7
        %v5153 = vsub.s32 %v5150, %v5152
        %v5154 = vrot.slane %v5126, %v5153
        %v5155 = vcombine.low %v5133, %v5140
        %v5156 = vcombine.low %v5147, %v5154
        %v5158 = vunpack.c.l.s4 1966171168
        %v5159 = vunpack.c.0.s8 %v5158
        %v5160 = vlaneseq
        %v5161 = vshrl.u32 %v5160, 7
        %v5162 = vsub.s32 %v5159, %v5161
        %v5163 = vrot.slane %v5155, %v5162
        %v5165 = vunpack.c.l.s4 1966171168
        %v5166 = vunpack.c.0.s8 %v5165
        %v5167 = vlaneseq
        %v5168 = vshrl.u32 %v5167, 7
        %v5169 = vsub.s32 %v5166, %v5168
        %v5170 = vrot.slane %v5156, %v5169
        %v5171 = vcombine.low %v5163, %v5170
        %v5172 = vcombine.low %v3845, %v3849
        %v5173 = vcombine.low %v3853, %v3857
        %v5174 = vcombine.low %v3861, %v3865
        %v5175 = vcombine.low %v3869, %v3873
        %v5177 = vunpack.c.l.s4 1966171168
        %v5178 = vunpack.c.0.s8 %v5177
        %v5179 = vlaneseq
        %v5180 = vshrl.u32 %v5179, 7
        %v5181 = vsub.s32 %v5178, %v5180
        %v5182 = vrot.slane %v5172, %v5181
        %v5184 = vunpack.c.l.s4 1966171168
        %v5185 = vunpack.c.0.s8 %v5184
        %v5186 = vlaneseq
        %v5187 = vshrl.u32 %v5186, 7
        %v5188 = vsub.s32 %v5185, %v5187
        %v5189 = vrot.slane %v5173, %v5188
        %v5191 = vunpack.c.l.s4 1966171168
        %v5192 = vunpack.c.0.s8 %v5191
        %v5193 = vlaneseq
        %v5194 = vshrl.u32 %v5193, 7
        %v5195 = vsub.s32 %v5192, %v5194
        %v5196 = vrot.slane %v5174, %v5195
        %v5198 = vunpack.c.l.s4 1966171168
        %v5199 = vunpack.c.0.s8 %v5198
        %v5200 = vlaneseq
        %v5201 = vshrl.u32 %v5200, 7
        %v5202 = vsub.s32 %v5199, %v5201
        %v5203 = vrot.slane %v5175, %v5202
        %v5204 = vcombine.low %v5182, %v5189
        %v5205 = vcombine.low %v5196, %v5203
        %v5207 = vunpack.c.l.s4 1966171168
        %v5208 = vunpack.c.0.s8 %v5207
        %v5209 = vlaneseq
        %v5210 = vshrl.u32 %v5209, 7
        %v5211 = vsub.s32 %v5208, %v5210
        %v5212 = vrot.slane %v5204, %v5211
        %v5214 = vunpack.c.l.s4 1966171168
        %v5215 = vunpack.c.0.s8 %v5214
        %v5216 = vlaneseq
        %v5217 = vshrl.u32 %v5216, 7
        %v5218 = vsub.s32 %v5215, %v5217
        %v5219 = vrot.slane %v5205, %v5218
        %v5220 = vcombine.low %v5212, %v5219
        %v5221 = vcombine.low %v3877, %v3881
        %v5222 = vcombine.low %v3885, %v3889
        %v5223 = vcombine.low %v3893, %v3897
        %v5224 = vcombine.low %v3901, %v3905
        %v5226 = vunpack.c.l.s4 1966171168
        %v5227 = vunpack.c.0.s8 %v5226
        %v5228 = vlaneseq
        %v5229 = vshrl.u32 %v5228, 7
        %v5230 = vsub.s32 %v5227, %v5229
        %v5231 = vrot.slane %v5221, %v5230
        %v5233 = vunpack.c.l.s4 1966171168
        %v5234 = vunpack.c.0.s8 %v5233
        %v5235 = vlaneseq
        %v5236 = vshrl.u32 %v5235, 7
        %v5237 = vsub.s32 %v5234, %v5236
        %v5238 = vrot.slane %v5222, %v5237
        %v5240 = vunpack.c.l.s4 1966171168
        %v5241 = vunpack.c.0.s8 %v5240
        %v5242 = vlaneseq
        %v5243 = vshrl.u32 %v5242, 7
        %v5244 = vsub.s32 %v5241, %v5243
        %v5245 = vrot.slane %v5223, %v5244
        %v5247 = vunpack.c.l.s4 1966171168
        %v5248 = vunpack.c.0.s8 %v5247
        %v5249 = vlaneseq
        %v5250 = vshrl.u32 %v5249, 7
        %v5251 = vsub.s32 %v5248, %v5250
        %v5252 = vrot.slane %v5224, %v5251
        %v5253 = vcombine.low %v5231, %v5238
        %v5254 = vcombine.low %v5245, %v5252
        %v5256 = vunpack.c.l.s4 1966171168
        %v5257 = vunpack.c.0.s8 %v5256
        %v5258 = vlaneseq
        %v5259 = vshrl.u32 %v5258, 7
        %v5260 = vsub.s32 %v5257, %v5259
        %v5261 = vrot.slane %v5253, %v5260
        %v5263 = vunpack.c.l.s4 1966171168
        %v5264 = vunpack.c.0.s8 %v5263
        %v5265 = vlaneseq
        %v5266 = vshrl.u32 %v5265, 7
        %v5267 = vsub.s32 %v5264, %v5266
        %v5268 = vrot.slane %v5254, %v5267
        %v5269 = vcombine.low %v5261, %v5268
        %v5270 = vcombine.low %v3909, %v3913
        %v5271 = vcombine.low %v3917, %v3921
        %v5272 = vcombine.low %v3925, %v3929
        %v5273 = vcombine.low %v3933, %v3937
        %v5275 = vunpack.c.l.s4 1966171168
        %v5276 = vunpack.c.0.s8 %v5275
        %v5277 = vlaneseq
        %v5278 = vshrl.u32 %v5277, 7
        %v5279 = vsub.s32 %v5276, %v5278
        %v5280 = vrot.slane %v5270, %v5279
        %v5282 = vunpack.c.l.s4 1966171168
        %v5283 = vunpack.c.0.s8 %v5282
        %v5284 = vlaneseq
        %v5285 = vshrl.u32 %v5284, 7
        %v5286 = vsub.s32 %v5283, %v5285
        %v5287 = vrot.slane %v5271, %v5286
        %v5289 = vunpack.c.l.s4 1966171168
        %v5290 = vunpack.c.0.s8 %v5289
        %v5291 = vlaneseq
        %v5292 = vshrl.u32 %v5291, 7
        %v5293 = vsub.s32 %v5290, %v5292
        %v5294 = vrot.slane %v5272, %v5293
        %v5296 = vunpack.c.l.s4 1966171168
        %v5297 = vunpack.c.0.s8 %v5296
        %v5298 = vlaneseq
        %v5299 = vshrl.u32 %v5298, 7
        %v5300 = vsub.s32 %v5297, %v5299
        %v5301 = vrot.slane %v5273, %v5300
        %v5302 = vcombine.low %v5280, %v5287
        %v5303 = vcombine.low %v5294, %v5301
        %v5305 = vunpack.c.l.s4 1966171168
        %v5306 = vunpack.c.0.s8 %v5305
        %v5307 = vlaneseq
        %v5308 = vshrl.u32 %v5307, 7
        %v5309 = vsub.s32 %v5306, %v5308
        %v5310 = vrot.slane %v5302, %v5309
        %v5312 = vunpack.c.l.s4 1966171168
        %v5313 = vunpack.c.0.s8 %v5312
        %v5314 = vlaneseq
        %v5315 = vshrl.u32 %v5314, 7
        %v5316 = vsub.s32 %v5313, %v5315
        %v5317 = vrot.slane %v5303, %v5316
        %v5318 = vcombine.low %v5310, %v5317
        %v5319 = vcombine.low %v3941, %v3945
        %v5320 = vcombine.low %v3949, %v3953
        %v5321 = vcombine.low %v3957, %v3961
        %v5322 = vcombine.low %v3965, %v3969
        %v5324 = vunpack.c.l.s4 1966171168
        %v5325 = vunpack.c.0.s8 %v5324
        %v5326 = vlaneseq
        %v5327 = vshrl.u32 %v5326, 7
        %v5328 = vsub.s32 %v5325, %v5327
        %v5329 = vrot.slane %v5319, %v5328
        %v5331 = vunpack.c.l.s4 1966171168
        %v5332 = vunpack.c.0.s8 %v5331
        %v5333 = vlaneseq
        %v5334 = vshrl.u32 %v5333, 7
        %v5335 = vsub.s32 %v5332, %v5334
        %v5336 = vrot.slane %v5320, %v5335
        %v5338 = vunpack.c.l.s4 1966171168
        %v5339 = vunpack.c.0.s8 %v5338
        %v5340 = vlaneseq
        %v5341 = vshrl.u32 %v5340, 7
        %v5342 = vsub.s32 %v5339, %v5341
        %v5343 = vrot.slane %v5321, %v5342
        %v5345 = vunpack.c.l.s4 1966171168
        %v5346 = vunpack.c.0.s8 %v5345
        %v5347 = vlaneseq
        %v5348 = vshrl.u32 %v5347, 7
        %v5349 = vsub.s32 %v5346, %v5348
        %v5350 = vrot.slane %v5322, %v5349
        %v5351 = vcombine.low %v5329, %v5336
        %v5352 = vcombine.low %v5343, %v5350
        %v5354 = vunpack.c.l.s4 1966171168
        %v5355 = vunpack.c.0.s8 %v5354
        %v5356 = vlaneseq
        %v5357 = vshrl.u32 %v5356, 7
        %v5358 = vsub.s32 %v5355, %v5357
        %v5359 = vrot.slane %v5351, %v5358
        %v5361 = vunpack.c.l.s4 1966171168
        %v5362 = vunpack.c.0.s8 %v5361
        %v5363 = vlaneseq
        %v5364 = vshrl.u32 %v5363, 7
        %v5365 = vsub.s32 %v5362, %v5364
        %v5366 = vrot.slane %v5352, %v5365
        %v5367 = vcombine.low %v5359, %v5366
        %v5368 = vcombine.low %v3973, %v3977
        %v5369 = vcombine.low %v3981, %v3985
        %v5370 = vcombine.low %v3989, %v3993
        %v5371 = vcombine.low %v3997, %v4001
        %v5373 = vunpack.c.l.s4 1966171168
        %v5374 = vunpack.c.0.s8 %v5373
        %v5375 = vlaneseq
        %v5376 = vshrl.u32 %v5375, 7
        %v5377 = vsub.s32 %v5374, %v5376
        %v5378 = vrot.slane %v5368, %v5377
        %v5380 = vunpack.c.l.s4 1966171168
        %v5381 = vunpack.c.0.s8 %v5380
        %v5382 = vlaneseq
        %v5383 = vshrl.u32 %v5382, 7
        %v5384 = vsub.s32 %v5381, %v5383
        %v5385 = vrot.slane %v5369, %v5384
        %v5387 = vunpack.c.l.s4 1966171168
        %v5388 = vunpack.c.0.s8 %v5387
        %v5389 = vlaneseq
        %v5390 = vshrl.u32 %v5389, 7
        %v5391 = vsub.s32 %v5388, %v5390
        %v5392 = vrot.slane %v5370, %v5391
        %v5394 = vunpack.c.l.s4 1966171168
        %v5395 = vunpack.c.0.s8 %v5394
        %v5396 = vlaneseq
        %v5397 = vshrl.u32 %v5396, 7
        %v5398 = vsub.s32 %v5395, %v5397
        %v5399 = vrot.slane %v5371, %v5398
        %v5400 = vcombine.low %v5378, %v5385
        %v5401 = vcombine.low %v5392, %v5399
        %v5403 = vunpack.c.l.s4 1966171168
        %v5404 = vunpack.c.0.s8 %v5403
        %v5405 = vlaneseq
        %v5406 = vshrl.u32 %v5405, 7
        %v5407 = vsub.s32 %v5404, %v5406
        %v5408 = vrot.slane %v5400, %v5407
        %v5410 = vunpack.c.l.s4 1966171168
        %v5411 = vunpack.c.0.s8 %v5410
        %v5412 = vlaneseq
        %v5413 = vshrl.u32 %v5412, 7
        %v5414 = vsub.s32 %v5411, %v5413
        %v5415 = vrot.slane %v5401, %v5414
        %v5416 = vcombine.low %v5408, %v5415
        %v5417 = vcombine.low %v4005, %v4009
        %v5418 = vcombine.low %v4013, %v4017
        %v5419 = vcombine.low %v4021, %v4025
        %v5420 = vcombine.low %v4029, %v4033
        %v5422 = vunpack.c.l.s4 1966171168
        %v5423 = vunpack.c.0.s8 %v5422
        %v5424 = vlaneseq
        %v5425 = vshrl.u32 %v5424, 7
        %v5426 = vsub.s32 %v5423, %v5425
        %v5427 = vrot.slane %v5417, %v5426
        %v5429 = vunpack.c.l.s4 1966171168
        %v5430 = vunpack.c.0.s8 %v5429
        %v5431 = vlaneseq
        %v5432 = vshrl.u32 %v5431, 7
        %v5433 = vsub.s32 %v5430, %v5432
        %v5434 = vrot.slane %v5418, %v5433
        %v5436 = vunpack.c.l.s4 1966171168
        %v5437 = vunpack.c.0.s8 %v5436
        %v5438 = vlaneseq
        %v5439 = vshrl.u32 %v5438, 7
        %v5440 = vsub.s32 %v5437, %v5439
        %v5441 = vrot.slane %v5419, %v5440
        %v5443 = vunpack.c.l.s4 1966171168
        %v5444 = vunpack.c.0.s8 %v5443
        %v5445 = vlaneseq
        %v5446 = vshrl.u32 %v5445, 7
        %v5447 = vsub.s32 %v5444, %v5446
        %v5448 = vrot.slane %v5420, %v5447
        %v5449 = vcombine.low %v5427, %v5434
        %v5450 = vcombine.low %v5441, %v5448
        %v5452 = vunpack.c.l.s4 1966171168
        %v5453 = vunpack.c.0.s8 %v5452
        %v5454 = vlaneseq
        %v5455 = vshrl.u32 %v5454, 7
        %v5456 = vsub.s32 %v5453, %v5455
        %v5457 = vrot.slane %v5449, %v5456
        %v5459 = vunpack.c.l.s4 1966171168
        %v5460 = vunpack.c.0.s8 %v5459
        %v5461 = vlaneseq
        %v5462 = vshrl.u32 %v5461, 7
        %v5463 = vsub.s32 %v5460, %v5462
        %v5464 = vrot.slane %v5450, %v5463
        %v5465 = vcombine.low %v5457, %v5464
        %v5466 = vcombine.low %v4037, %v4041
        %v5467 = vcombine.low %v4045, %v4049
        %v5468 = vcombine.low %v4053, %v4057
        %v5469 = vcombine.low %v4061, %v4065
        %v5471 = vunpack.c.l.s4 1966171168
        %v5472 = vunpack.c.0.s8 %v5471
        %v5473 = vlaneseq
        %v5474 = vshrl.u32 %v5473, 7
        %v5475 = vsub.s32 %v5472, %v5474
        %v5476 = vrot.slane %v5466, %v5475
        %v5478 = vunpack.c.l.s4 1966171168
        %v5479 = vunpack.c.0.s8 %v5478
        %v5480 = vlaneseq
        %v5481 = vshrl.u32 %v5480, 7
        %v5482 = vsub.s32 %v5479, %v5481
        %v5483 = vrot.slane %v5467, %v5482
        %v5485 = vunpack.c.l.s4 1966171168
        %v5486 = vunpack.c.0.s8 %v5485
        %v5487 = vlaneseq
        %v5488 = vshrl.u32 %v5487, 7
        %v5489 = vsub.s32 %v5486, %v5488
        %v5490 = vrot.slane %v5468, %v5489
        %v5492 = vunpack.c.l.s4 1966171168
        %v5493 = vunpack.c.0.s8 %v5492
        %v5494 = vlaneseq
        %v5495 = vshrl.u32 %v5494, 7
        %v5496 = vsub.s32 %v5493, %v5495
        %v5497 = vrot.slane %v5469, %v5496
        %v5498 = vcombine.low %v5476, %v5483
        %v5499 = vcombine.low %v5490, %v5497
        %v5501 = vunpack.c.l.s4 1966171168
        %v5502 = vunpack.c.0.s8 %v5501
        %v5503 = vlaneseq
        %v5504 = vshrl.u32 %v5503, 7
        %v5505 = vsub.s32 %v5502, %v5504
        %v5506 = vrot.slane %v5498, %v5505
        %v5508 = vunpack.c.l.s4 1966171168
        %v5509 = vunpack.c.0.s8 %v5508
        %v5510 = vlaneseq
        %v5511 = vshrl.u32 %v5510, 7
        %v5512 = vsub.s32 %v5509, %v5511
        %v5513 = vrot.slane %v5499, %v5512
        %v5514 = vcombine.low %v5506, %v5513
        %v5515 = vcombine.low %v4069, %v4073
        %v5516 = vcombine.low %v4077, %v4081
        %v5517 = vcombine.low %v4085, %v4089
        %v5518 = vcombine.low %v4093, %v4097
        %v5520 = vunpack.c.l.s4 1966171168
        %v5521 = vunpack.c.0.s8 %v5520
        %v5522 = vlaneseq
        %v5523 = vshrl.u32 %v5522, 7
        %v5524 = vsub.s32 %v5521, %v5523
        %v5525 = vrot.slane %v5515, %v5524
        %v5527 = vunpack.c.l.s4 1966171168
        %v5528 = vunpack.c.0.s8 %v5527
        %v5529 = vlaneseq
        %v5530 = vshrl.u32 %v5529, 7
        %v5531 = vsub.s32 %v5528, %v5530
        %v5532 = vrot.slane %v5516, %v5531
        %v5534 = vunpack.c.l.s4 1966171168
        %v5535 = vunpack.c.0.s8 %v5534
        %v5536 = vlaneseq
        %v5537 = vshrl.u32 %v5536, 7
        %v5538 = vsub.s32 %v5535, %v5537
        %v5539 = vrot.slane %v5517, %v5538
        %v5541 = vunpack.c.l.s4 1966171168
        %v5542 = vunpack.c.0.s8 %v5541
        %v5543 = vlaneseq
        %v5544 = vshrl.u32 %v5543, 7
        %v5545 = vsub.s32 %v5542, %v5544
        %v5546 = vrot.slane %v5518, %v5545
        %v5547 = vcombine.low %v5525, %v5532
        %v5548 = vcombine.low %v5539, %v5546
        %v5550 = vunpack.c.l.s4 1966171168
        %v5551 = vunpack.c.0.s8 %v5550
        %v5552 = vlaneseq
        %v5553 = vshrl.u32 %v5552, 7
        %v5554 = vsub.s32 %v5551, %v5553
        %v5555 = vrot.slane %v5547, %v5554
        %v5557 = vunpack.c.l.s4 1966171168
        %v5558 = vunpack.c.0.s8 %v5557
        %v5559 = vlaneseq
        %v5560 = vshrl.u32 %v5559, 7
        %v5561 = vsub.s32 %v5558, %v5560
        %v5562 = vrot.slane %v5548, %v5561
        %v5563 = vcombine.low %v5555, %v5562
        %v5564 = vcombine.low %v4101, %v4105
        %v5565 = vcombine.low %v4109, %v4113
        %v5566 = vcombine.low %v4117, %v4121
        %v5567 = vcombine.low %v4125, %v4129
        %v5569 = vunpack.c.l.s4 1966171168
        %v5570 = vunpack.c.0.s8 %v5569
        %v5571 = vlaneseq
        %v5572 = vshrl.u32 %v5571, 7
        %v5573 = vsub.s32 %v5570, %v5572
        %v5574 = vrot.slane %v5564, %v5573
        %v5576 = vunpack.c.l.s4 1966171168
        %v5577 = vunpack.c.0.s8 %v5576
        %v5578 = vlaneseq
        %v5579 = vshrl.u32 %v5578, 7
        %v5580 = vsub.s32 %v5577, %v5579
        %v5581 = vrot.slane %v5565, %v5580
        %v5583 = vunpack.c.l.s4 1966171168
        %v5584 = vunpack.c.0.s8 %v5583
        %v5585 = vlaneseq
        %v5586 = vshrl.u32 %v5585, 7
        %v5587 = vsub.s32 %v5584, %v5586
        %v5588 = vrot.slane %v5566, %v5587
        %v5590 = vunpack.c.l.s4 1966171168
        %v5591 = vunpack.c.0.s8 %v5590
        %v5592 = vlaneseq
        %v5593 = vshrl.u32 %v5592, 7
        %v5594 = vsub.s32 %v5591, %v5593
        %v5595 = vrot.slane %v5567, %v5594
        %v5596 = vcombine.low %v5574, %v5581
        %v5597 = vcombine.low %v5588, %v5595
        %v5599 = vunpack.c.l.s4 1966171168
        %v5600 = vunpack.c.0.s8 %v5599
        %v5601 = vlaneseq
        %v5602 = vshrl.u32 %v5601, 7
        %v5603 = vsub.s32 %v5600, %v5602
        %v5604 = vrot.slane %v5596, %v5603
        %v5606 = vunpack.c.l.s4 1966171168
        %v5607 = vunpack.c.0.s8 %v5606
        %v5608 = vlaneseq
        %v5609 = vshrl.u32 %v5608, 7
        %v5610 = vsub.s32 %v5607, %v5609
        %v5611 = vrot.slane %v5597, %v5610
        %v5612 = vcombine.low %v5604, %v5611
        %v5613 = vcombine.low %v4133, %v4137
        %v5614 = vcombine.low %v4141, %v4145
        %v5615 = vcombine.low %v4149, %v4153
        %v5616 = vcombine.low %v4157, %v4161
        %v5618 = vunpack.c.l.s4 1966171168
        %v5619 = vunpack.c.0.s8 %v5618
        %v5620 = vlaneseq
        %v5621 = vshrl.u32 %v5620, 7
        %v5622 = vsub.s32 %v5619, %v5621
        %v5623 = vrot.slane %v5613, %v5622
        %v5625 = vunpack.c.l.s4 1966171168
        %v5626 = vunpack.c.0.s8 %v5625
        %v5627 = vlaneseq
        %v5628 = vshrl.u32 %v5627, 7
        %v5629 = vsub.s32 %v5626, %v5628
        %v5630 = vrot.slane %v5614, %v5629
        %v5632 = vunpack.c.l.s4 1966171168
        %v5633 = vunpack.c.0.s8 %v5632
        %v5634 = vlaneseq
        %v5635 = vshrl.u32 %v5634, 7
        %v5636 = vsub.s32 %v5633, %v5635
        %v5637 = vrot.slane %v5615, %v5636
        %v5639 = vunpack.c.l.s4 1966171168
        %v5640 = vunpack.c.0.s8 %v5639
        %v5641 = vlaneseq
        %v5642 = vshrl.u32 %v5641, 7
        %v5643 = vsub.s32 %v5640, %v5642
        %v5644 = vrot.slane %v5616, %v5643
        %v5645 = vcombine.low %v5623, %v5630
        %v5646 = vcombine.low %v5637, %v5644
        %v5648 = vunpack.c.l.s4 1966171168
        %v5649 = vunpack.c.0.s8 %v5648
        %v5650 = vlaneseq
        %v5651 = vshrl.u32 %v5650, 7
        %v5652 = vsub.s32 %v5649, %v5651
        %v5653 = vrot.slane %v5645, %v5652
        %v5655 = vunpack.c.l.s4 1966171168
        %v5656 = vunpack.c.0.s8 %v5655
        %v5657 = vlaneseq
        %v5658 = vshrl.u32 %v5657, 7
        %v5659 = vsub.s32 %v5656, %v5658
        %v5660 = vrot.slane %v5646, %v5659
        %v5661 = vcombine.low %v5653, %v5660
        %v5662 = vcombine.low %v4165, %v4169
        %v5663 = vcombine.low %v4173, %v4177
        %v5664 = vcombine.low %v4181, %v4185
        %v5665 = vcombine.low %v4189, %v4193
        %v5667 = vunpack.c.l.s4 1966171168
        %v5668 = vunpack.c.0.s8 %v5667
        %v5669 = vlaneseq
        %v5670 = vshrl.u32 %v5669, 7
        %v5671 = vsub.s32 %v5668, %v5670
        %v5672 = vrot.slane %v5662, %v5671
        %v5674 = vunpack.c.l.s4 1966171168
        %v5675 = vunpack.c.0.s8 %v5674
        %v5676 = vlaneseq
        %v5677 = vshrl.u32 %v5676, 7
        %v5678 = vsub.s32 %v5675, %v5677
        %v5679 = vrot.slane %v5663, %v5678
        %v5681 = vunpack.c.l.s4 1966171168
        %v5682 = vunpack.c.0.s8 %v5681
        %v5683 = vlaneseq
        %v5684 = vshrl.u32 %v5683, 7
        %v5685 = vsub.s32 %v5682, %v5684
        %v5686 = vrot.slane %v5664, %v5685
        %v5688 = vunpack.c.l.s4 1966171168
        %v5689 = vunpack.c.0.s8 %v5688
        %v5690 = vlaneseq
        %v5691 = vshrl.u32 %v5690, 7
        %v5692 = vsub.s32 %v5689, %v5691
        %v5693 = vrot.slane %v5665, %v5692
        %v5694 = vcombine.low %v5672, %v5679
        %v5695 = vcombine.low %v5686, %v5693
        %v5697 = vunpack.c.l.s4 1966171168
        %v5698 = vunpack.c.0.s8 %v5697
        %v5699 = vlaneseq
        %v5700 = vshrl.u32 %v5699, 7
        %v5701 = vsub.s32 %v5698, %v5700
        %v5702 = vrot.slane %v5694, %v5701
        %v5704 = vunpack.c.l.s4 1966171168
        %v5705 = vunpack.c.0.s8 %v5704
        %v5706 = vlaneseq
        %v5707 = vshrl.u32 %v5706, 7
        %v5708 = vsub.s32 %v5705, %v5707
        %v5709 = vrot.slane %v5695, %v5708
        %v5710 = vcombine.low %v5702, %v5709
        %v5711 = vcombine.low %v4197, %v4201
        %v5712 = vcombine.low %v4205, %v4209
        %v5713 = vcombine.low %v4213, %v4217
        %v5714 = vcombine.low %v4221, %v4225
        %v5716 = vunpack.c.l.s4 1966171168
        %v5717 = vunpack.c.0.s8 %v5716
        %v5718 = vlaneseq
        %v5719 = vshrl.u32 %v5718, 7
        %v5720 = vsub.s32 %v5717, %v5719
        %v5721 = vrot.slane %v5711, %v5720
        %v5723 = vunpack.c.l.s4 1966171168
        %v5724 = vunpack.c.0.s8 %v5723
        %v5725 = vlaneseq
        %v5726 = vshrl.u32 %v5725, 7
        %v5727 = vsub.s32 %v5724, %v5726
        %v5728 = vrot.slane %v5712, %v5727
        %v5730 = vunpack.c.l.s4 1966171168
        %v5731 = vunpack.c.0.s8 %v5730
        %v5732 = vlaneseq
        %v5733 = vshrl.u32 %v5732, 7
        %v5734 = vsub.s32 %v5731, %v5733
        %v5735 = vrot.slane %v5713, %v5734
        %v5737 = vunpack.c.l.s4 1966171168
        %v5738 = vunpack.c.0.s8 %v5737
        %v5739 = vlaneseq
        %v5740 = vshrl.u32 %v5739, 7
        %v5741 = vsub.s32 %v5738, %v5740
        %v5742 = vrot.slane %v5714, %v5741
        %v5743 = vcombine.low %v5721, %v5728
        %v5744 = vcombine.low %v5735, %v5742
        %v5746 = vunpack.c.l.s4 1966171168
        %v5747 = vunpack.c.0.s8 %v5746
        %v5748 = vlaneseq
        %v5749 = vshrl.u32 %v5748, 7
        %v5750 = vsub.s32 %v5747, %v5749
        %v5751 = vrot.slane %v5743, %v5750
        %v5753 = vunpack.c.l.s4 1966171168
        %v5754 = vunpack.c.0.s8 %v5753
        %v5755 = vlaneseq
        %v5756 = vshrl.u32 %v5755, 7
        %v5757 = vsub.s32 %v5754, %v5756
        %v5758 = vrot.slane %v5744, %v5757
        %v5759 = vcombine.low %v5751, %v5758
        %v5760 = vcombine.low %v4229, %v4233
        %v5761 = vcombine.low %v4237, %v4241
        %v5762 = vcombine.low %v4245, %v4249
        %v5763 = vcombine.low %v4253, %v4257
        %v5765 = vunpack.c.l.s4 1966171168
        %v5766 = vunpack.c.0.s8 %v5765
        %v5767 = vlaneseq
        %v5768 = vshrl.u32 %v5767, 7
        %v5769 = vsub.s32 %v5766, %v5768
        %v5770 = vrot.slane %v5760, %v5769
        %v5772 = vunpack.c.l.s4 1966171168
        %v5773 = vunpack.c.0.s8 %v5772
        %v5774 = vlaneseq
        %v5775 = vshrl.u32 %v5774, 7
        %v5776 = vsub.s32 %v5773, %v5775
        %v5777 = vrot.slane %v5761, %v5776
        %v5779 = vunpack.c.l.s4 1966171168
        %v5780 = vunpack.c.0.s8 %v5779
        %v5781 = vlaneseq
        %v5782 = vshrl.u32 %v5781, 7
        %v5783 = vsub.s32 %v5780, %v5782
        %v5784 = vrot.slane %v5762, %v5783
        %v5786 = vunpack.c.l.s4 1966171168
        %v5787 = vunpack.c.0.s8 %v5786
        %v5788 = vlaneseq
        %v5789 = vshrl.u32 %v5788, 7
        %v5790 = vsub.s32 %v5787, %v5789
        %v5791 = vrot.slane %v5763, %v5790
        %v5792 = vcombine.low %v5770, %v5777
        %v5793 = vcombine.low %v5784, %v5791
        %v5795 = vunpack.c.l.s4 1966171168
        %v5796 = vunpack.c.0.s8 %v5795
        %v5797 = vlaneseq
        %v5798 = vshrl.u32 %v5797, 7
        %v5799 = vsub.s32 %v5796, %v5798
        %v5800 = vrot.slane %v5792, %v5799
        %v5802 = vunpack.c.l.s4 1966171168
        %v5803 = vunpack.c.0.s8 %v5802
        %v5804 = vlaneseq
        %v5805 = vshrl.u32 %v5804, 7
        %v5806 = vsub.s32 %v5803, %v5805
        %v5807 = vrot.slane %v5793, %v5806
        %v5808 = vcombine.low %v5800, %v5807
        %v5809 = vcombine.low %v4261, %v4265
        %v5810 = vcombine.low %v4269, %v4273
        %v5811 = vcombine.low %v4277, %v4281
        %v5812 = vcombine.low %v4285, %v4289
        %v5814 = vunpack.c.l.s4 1966171168
        %v5815 = vunpack.c.0.s8 %v5814
        %v5816 = vlaneseq
        %v5817 = vshrl.u32 %v5816, 7
        %v5818 = vsub.s32 %v5815, %v5817
        %v5819 = vrot.slane %v5809, %v5818
        %v5821 = vunpack.c.l.s4 1966171168
        %v5822 = vunpack.c.0.s8 %v5821
        %v5823 = vlaneseq
        %v5824 = vshrl.u32 %v5823, 7
        %v5825 = vsub.s32 %v5822, %v5824
        %v5826 = vrot.slane %v5810, %v5825
        %v5828 = vunpack.c.l.s4 1966171168
        %v5829 = vunpack.c.0.s8 %v5828
        %v5830 = vlaneseq
        %v5831 = vshrl.u32 %v5830, 7
        %v5832 = vsub.s32 %v5829, %v5831
        %v5833 = vrot.slane %v5811, %v5832
        %v5835 = vunpack.c.l.s4 1966171168
        %v5836 = vunpack.c.0.s8 %v5835
        %v5837 = vlaneseq
        %v5838 = vshrl.u32 %v5837, 7
        %v5839 = vsub.s32 %v5836, %v5838
        %v5840 = vrot.slane %v5812, %v5839
        %v5841 = vcombine.low %v5819, %v5826
        %v5842 = vcombine.low %v5833, %v5840
        %v5844 = vunpack.c.l.s4 1966171168
        %v5845 = vunpack.c.0.s8 %v5844
        %v5846 = vlaneseq
        %v5847 = vshrl.u32 %v5846, 7
        %v5848 = vsub.s32 %v5845, %v5847
        %v5849 = vrot.slane %v5841, %v5848
        %v5851 = vunpack.c.l.s4 1966171168
        %v5852 = vunpack.c.0.s8 %v5851
        %v5853 = vlaneseq
        %v5854 = vshrl.u32 %v5853, 7
        %v5855 = vsub.s32 %v5852, %v5854
        %v5856 = vrot.slane %v5842, %v5855
        %v5857 = vcombine.low %v5849, %v5856
        %5858 = vset.pattern.permute.xlu0 0
        %5859 = vperm.xlu0 %5858, %v4338
        %v5860 = vpop.permute.xlu0 %5859
        %5861 = vset.pattern.permute.xlu0 0
        %5862 = vperm.xlu0 %5861, %v4387
        %v5863 = vpop.permute.xlu0 %5862
        %5864 = vset.pattern.permute.xlu0 0
        %5865 = vperm.xlu0 %5864, %v4436
        %v5866 = vpop.permute.xlu0 %5865
        %5867 = vset.pattern.permute.xlu0 0
        %5868 = vperm.xlu0 %5867, %v4485
        %v5869 = vpop.permute.xlu0 %5868
        %5870 = vset.pattern.permute.xlu0 0
        %5871 = vperm.xlu0 %5870, %v4534
        %v5872 = vpop.permute.xlu0 %5871
        %5873 = vset.pattern.permute.xlu0 0
        %5874 = vperm.xlu0 %5873, %v4583
        %v5875 = vpop.permute.xlu0 %5874
        %5876 = vset.pattern.permute.xlu0 0
        %5877 = vperm.xlu0 %5876, %v4632
        %v5878 = vpop.permute.xlu0 %5877
        %5879 = vset.pattern.permute.xlu0 0
        %5880 = vperm.xlu0 %5879, %v4681
        %v5881 = vpop.permute.xlu0 %5880
        %5882 = vset.pattern.permute.xlu0 0
        %5883 = vperm.xlu0 %5882, %v4730
        %v5884 = vpop.permute.xlu0 %5883
        %5885 = vset.pattern.permute.xlu0 0
        %5886 = vperm.xlu0 %5885, %v4779
        %v5887 = vpop.permute.xlu0 %5886
        %5888 = vset.pattern.permute.xlu0 0
        %5889 = vperm.xlu0 %5888, %v4828
        %v5890 = vpop.permute.xlu0 %5889
        %5891 = vset.pattern.permute.xlu0 0
        %5892 = vperm.xlu0 %5891, %v4877
        %v5893 = vpop.permute.xlu0 %5892
        %5894 = vset.pattern.permute.xlu0 0
        %5895 = vperm.xlu0 %5894, %v4926
        %v5896 = vpop.permute.xlu0 %5895
        %5897 = vset.pattern.permute.xlu0 0
        %5898 = vperm.xlu0 %5897, %v4975
        %v5899 = vpop.permute.xlu0 %5898
        %5900 = vset.pattern.permute.xlu0 0
        %5901 = vperm.xlu0 %5900, %v5024
        %v5902 = vpop.permute.xlu0 %5901
        %5903 = vset.pattern.permute.xlu0 0
        %5904 = vperm.xlu0 %5903, %v5073
        %v5905 = vpop.permute.xlu0 %5904
        %5906 = vset.pattern.permute.xlu0 0
        %5907 = vperm.xlu0 %5906, %v5122
        %v5908 = vpop.permute.xlu0 %5907
        %5909 = vset.pattern.permute.xlu0 0
        %5910 = vperm.xlu0 %5909, %v5171
        %v5911 = vpop.permute.xlu0 %5910
        %5912 = vset.pattern.permute.xlu0 0
        %5913 = vperm.xlu0 %5912, %v5220
        %v5914 = vpop.permute.xlu0 %5913
        %5915 = vset.pattern.permute.xlu0 0
        %5916 = vperm.xlu0 %5915, %v5269
        %v5917 = vpop.permute.xlu0 %5916
        %5918 = vset.pattern.permute.xlu0 0
        %5919 = vperm.xlu0 %5918, %v5318
        %v5920 = vpop.permute.xlu0 %5919
        %5921 = vset.pattern.permute.xlu0 0
        %5922 = vperm.xlu0 %5921, %v5367
        %v5923 = vpop.permute.xlu0 %5922
        %5924 = vset.pattern.permute.xlu0 0
        %5925 = vperm.xlu0 %5924, %v5416
        %v5926 = vpop.permute.xlu0 %5925
        %5927 = vset.pattern.permute.xlu0 0
        %5928 = vperm.xlu0 %5927, %v5465
        %v5929 = vpop.permute.xlu0 %5928
        %5930 = vset.pattern.permute.xlu0 0
        %5931 = vperm.xlu0 %5930, %v5514
        %v5932 = vpop.permute.xlu0 %5931
        %5933 = vset.pattern.permute.xlu0 0
        %5934 = vperm.xlu0 %5933, %v5563
        %v5935 = vpop.permute.xlu0 %5934
        %5936 = vset.pattern.permute.xlu0 0
        %5937 = vperm.xlu0 %5936, %v5612
        %v5938 = vpop.permute.xlu0 %5937
        %5939 = vset.pattern.permute.xlu0 0
        %5940 = vperm.xlu0 %5939, %v5661
        %v5941 = vpop.permute.xlu0 %5940
        %5942 = vset.pattern.permute.xlu0 0
        %5943 = vperm.xlu0 %5942, %v5710
        %v5944 = vpop.permute.xlu0 %5943
        %5945 = vset.pattern.permute.xlu0 0
        %5946 = vperm.xlu0 %5945, %v5759
        %v5947 = vpop.permute.xlu0 %5946
        %5948 = vset.pattern.permute.xlu0 0
        %5949 = vperm.xlu0 %5948, %v5808
        %v5950 = vpop.permute.xlu0 %5949
        %5951 = vset.pattern.permute.xlu0 0
        %5952 = vperm.xlu0 %5951, %v5857
        %v5953 = vpop.permute.xlu0 %5952
        %v5954 = vlaneseq
        %v5955 = vand.u32 %v5954, 127
        %v5956 = vlaneseq
        %v5957 = vshrl.u32 %v5956, 7
        %v5958 = vsub.s32 %v5955, %v5957
        %v5959 = vrot.slane %v5860, %v5958
        %v5960 = vadd.s32 %v5955, 4294967288
        %v5961 = vlaneseq
        %v5962 = vshrl.u32 %v5961, 7
        %v5963 = vsub.s32 %v5960, %v5962
        %v5964 = vrot.slane %v5863, %v5963
        %vm5965 = vcmask 130112
        %v5966 = vsel %vm5965, %v5964, %v5959
        %v5967 = vadd.s32 %v5955, 4294967280
        %v5968 = vlaneseq
        %v5969 = vshrl.u32 %v5968, 7
        %v5970 = vsub.s32 %v5967, %v5969
        %v5971 = vrot.slane %v5866, %v5970
        %vm5972 = vcmask 195712
        %v5973 = vsel %vm5972, %v5971, %v5966
        %v5974 = vadd.s32 %v5955, 4294967272
        %v5975 = vlaneseq
        %v5976 = vshrl.u32 %v5975, 7
        %v5977 = vsub.s32 %v5974, %v5976
        %v5978 = vrot.slane %v5869, %v5977
        %vm5979 = vcmask 261312
        %v5980 = vsel %vm5979, %v5978, %v5973
        %v5981 = vadd.s32 %v5955, 4294967264
        %v5982 = vlaneseq
        %v5983 = vshrl.u32 %v5982, 7
        %v5984 = vsub.s32 %v5981, %v5983
        %v5985 = vrot.slane %v5872, %v5984
        %vm5986 = vcmask 326912
        %v5987 = vsel %vm5986, %v5985, %v5980
        %v5988 = vadd.s32 %v5955, 4294967256
        %v5989 = vlaneseq
        %v5990 = vshrl.u32 %v5989, 7
        %v5991 = vsub.s32 %v5988, %v5990
        %v5992 = vrot.slane %v5875, %v5991
        %vm5993 = vcmask 392512
        %v5994 = vsel %vm5993, %v5992, %v5987
        %v5995 = vadd.s32 %v5955, 4294967248
        %v5996 = vlaneseq
        %v5997 = vshrl.u32 %v5996, 7
        %v5998 = vsub.s32 %v5995, %v5997
        %v5999 = vrot.slane %v5878, %v5998
        %vm6000 = vcmask 458112
        %v6001 = vsel %vm6000, %v5999, %v5994
        %v6002 = vadd.s32 %v5955, 4294967240
        %v6003 = vlaneseq
        %v6004 = vshrl.u32 %v6003, 7
        %v6005 = vsub.s32 %v6002, %v6004
        %v6006 = vrot.slane %v5881, %v6005
        %vm6007 = vcmask 523712
        %v6008 = vsel %vm6007, %v6006, %v6001
        %v6009 = vadd.s32 %v5955, 4294967232
        %v6010 = vlaneseq
        %v6011 = vshrl.u32 %v6010, 7
        %v6012 = vsub.s32 %v6009, %v6011
        %v6013 = vrot.slane %v5884, %v6012
        %vm6014 = vcmask 589312
        %v6015 = vsel %vm6014, %v6013, %v6008
        %v6016 = vadd.s32 %v5955, 4294967224
        %v6017 = vlaneseq
        %v6018 = vshrl.u32 %v6017, 7
        %v6019 = vsub.s32 %v6016, %v6018
        %v6020 = vrot.slane %v5887, %v6019
        %vm6021 = vcmask 654912
        %v6022 = vsel %vm6021, %v6020, %v6015
        %v6023 = vadd.s32 %v5955, 4294967216
        %v6024 = vlaneseq
        %v6025 = vshrl.u32 %v6024, 7
        %v6026 = vsub.s32 %v6023, %v6025
        %v6027 = vrot.slane %v5890, %v6026
        %vm6028 = vcmask 720512
        %v6029 = vsel %vm6028, %v6027, %v6022
        %v6030 = vadd.s32 %v5955, 4294967208
        %v6031 = vlaneseq
        %v6032 = vshrl.u32 %v6031, 7
        %v6033 = vsub.s32 %v6030, %v6032
        %v6034 = vrot.slane %v5893, %v6033
        %vm6035 = vcmask 786112
        %v6036 = vsel %vm6035, %v6034, %v6029
        %v6037 = vadd.s32 %v5955, 4294967200
        %v6038 = vlaneseq
        %v6039 = vshrl.u32 %v6038, 7
        %v6040 = vsub.s32 %v6037, %v6039
        %v6041 = vrot.slane %v5896, %v6040
        %vm6042 = vcmask 851712
        %v6043 = vsel %vm6042, %v6041, %v6036
        %v6044 = vadd.s32 %v5955, 4294967192
        %v6045 = vlaneseq
        %v6046 = vshrl.u32 %v6045, 7
        %v6047 = vsub.s32 %v6044, %v6046
        %v6048 = vrot.slane %v5899, %v6047
        %vm6049 = vcmask 917312
        %v6050 = vsel %vm6049, %v6048, %v6043
        %v6051 = vadd.s32 %v5955, 4294967184
        %v6052 = vlaneseq
        %v6053 = vshrl.u32 %v6052, 7
        %v6054 = vsub.s32 %v6051, %v6053
        %v6055 = vrot.slane %v5902, %v6054
        %vm6056 = vcmask 982912
        %v6057 = vsel %vm6056, %v6055, %v6050
        %v6058 = vadd.s32 %v5955, 4294967176
        %v6059 = vlaneseq
        %v6060 = vshrl.u32 %v6059, 7
        %v6061 = vsub.s32 %v6058, %v6060
        %v6062 = vrot.slane %v5905, %v6061
        %vm6063 = vcmask 1048512
        %v6064 = vsel %vm6063, %v6062, %v6057
        %v6065 = vlaneseq
        %v6066 = vshrl.u32 %v6065, 7
        %v6067 = vsub.s32 %v5955, %v6066
        %v6068 = vrot.slane %v5908, %v6067
        %v6069 = vlaneseq
        %v6070 = vshrl.u32 %v6069, 7
        %v6071 = vsub.s32 %v5960, %v6070
        %v6072 = vrot.slane %v5911, %v6071
        %v6073 = vsel %vm5965, %v6072, %v6068
        %v6074 = vlaneseq
        %v6075 = vshrl.u32 %v6074, 7
        %v6076 = vsub.s32 %v5967, %v6075
        %v6077 = vrot.slane %v5914, %v6076
        %v6078 = vsel %vm5972, %v6077, %v6073
        %v6079 = vlaneseq
        %v6080 = vshrl.u32 %v6079, 7
        %v6081 = vsub.s32 %v5974, %v6080
        %v6082 = vrot.slane %v5917, %v6081
        %v6083 = vsel %vm5979, %v6082, %v6078
        %v6084 = vlaneseq
        %v6085 = vshrl.u32 %v6084, 7
        %v6086 = vsub.s32 %v5981, %v6085
        %v6087 = vrot.slane %v5920, %v6086
        %v6088 = vsel %vm5986, %v6087, %v6083
        %v6089 = vlaneseq
        %v6090 = vshrl.u32 %v6089, 7
        %v6091 = vsub.s32 %v5988, %v6090
        %v6092 = vrot.slane %v5923, %v6091
        %v6093 = vsel %vm5993, %v6092, %v6088
        %v6094 = vlaneseq
        %v6095 = vshrl.u32 %v6094, 7
        %v6096 = vsub.s32 %v5995, %v6095
        %v6097 = vrot.slane %v5926, %v6096
        %v6098 = vsel %vm6000, %v6097, %v6093
        %v6099 = vlaneseq
        %v6100 = vshrl.u32 %v6099, 7
        %v6101 = vsub.s32 %v6002, %v6100
        %v6102 = vrot.slane %v5929, %v6101
        %v6103 = vsel %vm6007, %v6102, %v6098
        %v6104 = vlaneseq
        %v6105 = vshrl.u32 %v6104, 7
        %v6106 = vsub.s32 %v6009, %v6105
        %v6107 = vrot.slane %v5932, %v6106
        %v6108 = vsel %vm6014, %v6107, %v6103
        %v6109 = vlaneseq
        %v6110 = vshrl.u32 %v6109, 7
        %v6111 = vsub.s32 %v6016, %v6110
        %v6112 = vrot.slane %v5935, %v6111
        %v6113 = vsel %vm6021, %v6112, %v6108
        %v6114 = vlaneseq
        %v6115 = vshrl.u32 %v6114, 7
        %v6116 = vsub.s32 %v6023, %v6115
        %v6117 = vrot.slane %v5938, %v6116
        %v6118 = vsel %vm6028, %v6117, %v6113
        %v6119 = vlaneseq
        %v6120 = vshrl.u32 %v6119, 7
        %v6121 = vsub.s32 %v6030, %v6120
        %v6122 = vrot.slane %v5941, %v6121
        %v6123 = vsel %vm6035, %v6122, %v6118
        %v6124 = vlaneseq
        %v6125 = vshrl.u32 %v6124, 7
        %v6126 = vsub.s32 %v6037, %v6125
        %v6127 = vrot.slane %v5944, %v6126
        %v6128 = vsel %vm6042, %v6127, %v6123
        %v6129 = vlaneseq
        %v6130 = vshrl.u32 %v6129, 7
        %v6131 = vsub.s32 %v6044, %v6130
        %v6132 = vrot.slane %v5947, %v6131
        %v6133 = vsel %vm6049, %v6132, %v6128
        %v6134 = vlaneseq
        %v6135 = vshrl.u32 %v6134, 7
        %v6136 = vsub.s32 %v6051, %v6135
        %v6137 = vrot.slane %v5950, %v6136
        %v6138 = vsel %vm6056, %v6137, %v6133
        %v6139 = vlaneseq
        %v6140 = vshrl.u32 %v6139, 7
        %v6141 = vsub.s32 %v6058, %v6140
        %v6142 = vrot.slane %v5953, %v6141
        %v6143 = vsel %vm6063, %v6142, %v6138
        %v6144 = vcombine.low %v6064, %v6143
        %v6146 = vunpack.c.l.s4 1966171168
        %v6147 = vunpack.c.0.s8 %v6146
        %v6148 = vlaneseq
        %v6149 = vshrl.u32 %v6148, 7
        %v6150 = vsub.s32 %v6147, %v6149
        %v6151 = vrot.slane %v6144, %v6150
        %v6153 = vunpack.c.l.s4 1966171168
        %v6154 = vunpack.c.0.s8 %v6153
        %v6155 = vlaneseq
        %v6156 = vshrl.u32 %v6155, 7
        %v6157 = vsub.s32 %v6154, %v6156
        %v6158 = vrot.slane %v6151, %v6157
        %v6160 = vlaneseq
        %vm6161 = vcmp.ge.s32.totalorder %v6160, 0
        %vm6162 = vcmp.lt.s32.totalorder %v6160, 256
        %vm6163 = vmand %vm6161, %vm6162
        %6164 = vst.msk [vmem:[%s490] sm:$0x3] %vm6163, %v6158
        %s6165 = sand.u32 %s359, 1
        %s6166 = scalar_lea.sflag [#allocation4], %s6165
        %s6167 = sand.u32 %s359, 1
        %s6168 = smul.addr %s6167, 2
        %s6169 = scalar_lea.vmem [#allocation3], %s6168
        // Predicated region
        $region81: #{tpu_custom_call.1} parent=79 // pred_check
          %p6170 = pneg %p369
        $region82: #{tpu_custom_call.1} parent=79 // pred_check_branch
          %6172 = sbr.rel (%p6170) target = $region84
        $region83: #{tpu_custom_call.1} parent=79 // pred_region
          %s6173 = smul.u32 2, %s31
          %s6175 = ssub.s32 32, 32
          %6176 = vsyncadd %s6166, %s6175
          %s6177 = smul.addr %s6173, 16
          %s6178 = scalar_lea.hbm %s15, %s6177
          %s6180 = sshll.u32 %s6169, 4
          %s6181 = int_to_ptr.vmem [resolvable:$true] %s6180
          %6183 = dma.vmem_to_hbm [thread:$0]  %s6181, 32, %s6178, %s6166
        $region84: #{tpu_custom_call.1} parent=79 // pred_fallthru
          _
      $region80: #{tpu_custom_call.1} parent=5 // pred_fallthru
        _
      %p6184 = scmp.le.s32.totalorder 2, %s26
      // Predicated region
      $region85: #{tpu_custom_call.1} parent=5 // pred_check
        %p6185 = pneg %p6184
      $region86: #{tpu_custom_call.1} parent=5 // pred_check_branch
        %6187 = sbr.rel (%p6185) target = $region88
      $region87: #{tpu_custom_call.1} parent=5 // pred_region
        %s6188 = ssub.s32 %s26, 2
        // Predicated region
        $region89: #{tpu_custom_call.1} parent=87 // pred_check
          %p6189 = pneg %p375
        $region90: #{tpu_custom_call.1} parent=87 // pred_check_branch
          %6191 = sbr.rel (%p6189) target = $region92
        $region91: #{tpu_custom_call.1} parent=87 // pred_region
          %s6192 = sand.u32 %s360, 1
          %s6193 = scalar_lea.sflag [#allocation4], %s6192
          %s6194 = sand.u32 %s360, 1
          %s6195 = smul.addr %s6194, 2
          %s6196 = scalar_lea.vmem [#allocation3], %s6195
          %6197 = dma.done %s6193, 32
        $region92: #{tpu_custom_call.1} parent=87 // pred_fallthru
          _
      $region88: #{tpu_custom_call.1} parent=5 // pred_fallthru
        _
    $region6: #{tpu_custom_call.1} parent=1 // loop_footer
      %s30 = sadd.s32 1, %s26
    $region7: #{tpu_custom_call.1} parent=1 // loop_footer_branch
      %25 = sbr.rel target = $region3
    $region8: #{tpu_custom_call.1} parent=1 // loop_exit
      _
    %6198 = vsyncpa [#allocation4], 1
    %s6199 = scalar_lea.sflag [#allocation4], 1
    %6200 = vsyncpa %s6199, 1

</llo_original>
